<compile_context>
chip_gen: v7x
topology: tpu7x:2x2x1
jax: 0.10.0
libtpu: 0.0.40
codegen_flags: <defaults>
</compile_context>

<pallas_src>
import functools

import numpy as np
import jax
import jax.numpy as jnp
from jax import lax
from jax.experimental import pallas as pl
from jax.experimental.pallas import tpu as pltpu

NUM_CHANNELS = 8
BN_EPS = 1e-5


# ----------------------------------------------------------------------------
# Pallas kernel: whole DecoderLayer for one batch element.
# ----------------------------------------------------------------------------
def _decoder_layer_kernel(
    x_ref, enc_ref, w3_ref, s3_ref, w4_ref, s4_ref, o_ref,
    cat_ref, p3_ref, y3p_ref, p4_ref,
    *, K, L_low, dpad, pad3, pad4, C_half, C3, L3_in, L3_out, L4_out):
    Cin = 2 * C_half

    # ---- nearest upsample (xK) + F.pad(dpad) + concat, built in VMEM -------
    # up_pad[c, j] = x[c, i] for pad3+dpad+i*K <= j < pad3+dpad+(i+1)*K else 0,
    # expressed as x @ U with a 0/1 selection matrix (MXU, lane-dense output).
    row = lax.broadcasted_iota(jnp.int32, (L_low, L3_in), 0)
    col = lax.broadcasted_iota(jnp.int32, (L_low, L3_in), 1)
    lo = pad3 + dpad + row * K
    U = jnp.where((col >= lo) & (col < lo + K), 1.0, 0.0).astype(jnp.bfloat16)
    up = jnp.dot(x_ref[0], U, preferred_element_type=jnp.float32)
    cat_ref[:C_half, :] = up.astype(cat_ref.dtype)     # upsampled branch
    cat_ref[C_half:, :] = enc_ref[0]                   # skip connection (pre-padded)

    # ---- conv3 + BN3 + ReLU: one (C3, K*Cin) x (K*Cin, L3_out) matmul ------
    cat_v = cat_ref[...]
    for k in range(K):                                  # im2col patch build
        p3_ref[k * Cin:(k + 1) * Cin, :] = cat_v[:, k:k + L3_out]
    acc3 = jnp.dot(w3_ref[...], p3_ref[...], preferred_element_type=jnp.float32)
    y3 = jnp.maximum(acc3 + s3_ref[...], 0.0)           # BN scale folded into w3

    # ---- conv4 + BN4 + ReLU: intermediate stays in VMEM --------------------
    y3p_ref[...] = jnp.zeros_like(y3p_ref)              # conv4 zero padding
    y3p_ref[:, pad4:pad4 + L3_out] = y3.astype(y3p_ref.dtype)
    y3p_v = y3p_ref[...]
    for k in range(K):
        p4_ref[k * C3:(k + 1) * C3, :] = y3p_v[:, k:k + L4_out]
    acc4 = jnp.dot(w4_ref[...], p4_ref[...], preferred_element_type=jnp.float32)
    o_ref[0] = jnp.maximum(acc4 + s4_ref[...], 0.0).astype(o_ref.dtype)


# ----------------------------------------------------------------------------
# Wrapper: BN folding, weight reshape, BlockSpecs / grid.
# ----------------------------------------------------------------------------
def _fold_bn(conv, bn):
    # TODO(synk): BatchNorm1d is folded with running stats (eval mode), not
    # training-mode batch statistics.
    scale = bn["gamma"] / jnp.sqrt(bn["var"] + BN_EPS)
    shift = bn["beta"] + (conv["b"] - bn["mean"]) * scale
    return scale, shift


def decoder_layer_forward(params, x_low, enc, *, kernel_size=10):
    """x_low: (B, C/2, L_low) decoder input; enc: (B, C/2, L_enc) skip tensor."""
    K = kernel_size
    B, C_half, L_low = x_low.shape
    _, C_enc, L_enc = enc.shape
    assert C_enc == C_half
    Cin = 2 * C_half
    C3 = params["conv3"]["w"].shape[0]
    C4 = params["conv4"]["w"].shape[0]

    L_up = L_low * K
    diff = L_enc - L_up
    assert diff >= 0 and diff % 2 == 0, "skip/upsample length mismatch (diff must be even)"
    dpad = diff // 2
    pad3 = (K - 1) // 2
    pad4 = (K + 1) // 2
    L3_in = L_enc + 2 * pad3
    L3_out = L3_in - K + 1
    L4_in = L3_out + 2 * pad4
    L4_out = L4_in - K + 1

    # Fold BN scale into conv weights; kernel epilogue is just +shift, ReLU.
    s3, shift3 = _fold_bn(params["conv3"], params["bn3"])
    s4, shift4 = _fold_bn(params["conv4"], params["bn4"])
    w3 = params["conv3"]["w"] * s3[:, None, None]
    w4 = params["conv4"]["w"] * s4[:, None, None]
    # (Cout, Cin, K) -> (Cout, K*Cin), matching im2col row order k*Cin + c.
    w3r = jnp.transpose(w3, (0, 2, 1)).reshape(C3, K * Cin).astype(jnp.bfloat16)
    w4r = jnp.transpose(w4, (0, 2, 1)).reshape(C4, K * C3).astype(jnp.bfloat16)

    x_b = x_low.astype(jnp.bfloat16)
    enc_p = jnp.pad(enc, ((0, 0), (0, 0), (pad3, pad3))).astype(jnp.bfloat16)

    kernel = functools.partial(
        _decoder_layer_kernel, K=K, L_low=L_low, dpad=dpad, pad3=pad3,
        pad4=pad4, C_half=C_half, C3=C3, L3_in=L3_in, L3_out=L3_out,
        L4_out=L4_out)

    return pl.pallas_call(
        kernel,
        out_shape=jax.ShapeDtypeStruct((B, C4, L4_out), jnp.float32),
        grid=(B,),
        in_specs=[
            pl.BlockSpec((1, C_half, L_low), lambda b: (b, 0, 0)),
            pl.BlockSpec((1, C_half, L3_in), lambda b: (b, 0, 0)),
            pl.BlockSpec((C3, K * Cin), lambda b: (0, 0)),
            pl.BlockSpec((C3, 1), lambda b: (0, 0)),
            pl.BlockSpec((C4, K * C3), lambda b: (0, 0)),
            pl.BlockSpec((C4, 1), lambda b: (0, 0)),
        ],
        out_specs=pl.BlockSpec((1, C4, L4_out), lambda b: (b, 0, 0)),
        scratch_shapes=[
            pltpu.VMEM((Cin, L3_in), jnp.bfloat16),       # concat(up, skip), conv3-padded
            pltpu.VMEM((K * Cin, L3_out), jnp.bfloat16),  # conv3 im2col patch
            pltpu.VMEM((C3, L4_in), jnp.bfloat16),        # relu(bn(conv3)), conv4-padded
            pltpu.VMEM((K * C3, L4_out), jnp.bfloat16),   # conv4 im2col patch
        ],
        compiler_params=pltpu.CompilerParams(
            dimension_semantics=("parallel",)),
    )(x_b, enc_p, w3r, shift3.reshape(C3, 1), w4r, shift4.reshape(C4, 1))
    # TODO(synk): for very long sequences (e.g. L_enc=1920 in the full U-Time
    # net) add a length-tile grid axis with K-1 halo columns; unnecessary at
    # these shapes since every block fits comfortably in VMEM.


# ----------------------------------------------------------------------------
# Deterministic synthetic parameters + pure-JAX f32 reference (spec semantics).
# ----------------------------------------------------------------------------
def _conv_params(key, cin, cout, k):
    kw, kb = jax.random.split(key)
    w = jax.random.normal(kw, (cout, cin, k), jnp.float32) / np.sqrt(cin * k)
    b = 0.01 * jax.random.normal(kb, (cout,), jnp.float32)
    return {"w": w, "b": b}


def _bn_params(key, c):
    kg, kb, km, kv = jax.random.split(key, 4)
    return {
        "gamma": 1.0 + 0.1 * jax.random.normal(kg, (c,), jnp.float32),
        "beta": 0.1 * jax.random.normal(kb, (c,), jnp.float32),
        "mean": 0.1 * jax.random.normal(km, (c,), jnp.float32),
        "var": 1.0 + 0.1 * jax.random.uniform(kv, (c,), jnp.float32),
    }


def init_decoder_params(key, kernel_size=10, cf=16):
    keys = jax.random.split(key, 4)
    cin = NUM_CHANNELS * cf
    c3 = NUM_CHANNELS * (cf // 2)
    c4 = NUM_CHANNELS * (cf // 4)
    return {
        "conv3": _conv_params(keys[0], cin, c3, kernel_size),
        "bn3": _bn_params(keys[1], c3),
        "conv4": _conv_params(keys[2], c3, c4, kernel_size),
        "bn4": _bn_params(keys[3], c4),
    }


def decoder_layer_reference(params, x_low, enc, *, kernel_size=10):
    K = kernel_size
    up = jnp.repeat(x_low, K, axis=2)                       # nn.Upsample (nearest)
    diff = enc.shape[2] - up.shape[2]
    up = jnp.pad(up, ((0, 0), (0, 0), (diff // 2, diff // 2)))
    y = jnp.concatenate([up, enc], axis=1)

    def conv_bn_relu(x, conv, bn, pad):
        z = lax.conv_general_dilated(
            x, conv["w"], window_strides=(1,), padding=[(pad, pad)],
            dimension_numbers=("NCH", "OIH", "NCH"))
        z = z + conv["b"][None, :, None]
        z = (z - bn["mean"][None, :, None]) * (
            bn["gamma"][None, :, None] / jnp.sqrt(bn["var"][None, :, None] + BN_EPS)
        ) + bn["beta"][None, :, None]
        return jnp.maximum(z, 0.0)

    y = conv_bn_relu(y, params["conv3"], params["bn3"], (K - 1) // 2)
    y = conv_bn_relu(y, params["conv4"], params["bn4"], (K + 1) // 2)
    return y


if __name__ == "__main__":
    key = jax.random.PRNGKey(0)
    pkey, xkey, ekey = jax.random.split(key, 3)
    K, cf = 10, 16                              # DecoderLayer defaults
    params = init_decoder_params(pkey, kernel_size=K, cf=cf)

    B = 2
    C_half = NUM_CHANNELS * (cf // 2)           # 64 channels in both inputs
    L_low = 16                                  # low-res decoder-input length
    L_enc = L_low * K                           # skip length (diff = 0, even)
    x_low = jax.random.normal(xkey, (B, C_half, L_low), jnp.float32)
    enc = jax.random.normal(ekey, (B, C_half, L_enc), jnp.float32)

    fwd = jax.jit(functools.partial(decoder_layer_forward, kernel_size=K))
    out = jax.block_until_ready(fwd(params, x_low, enc))

    assert out.shape == (B, NUM_CHANNELS * (cf // 4), L_enc), out.shape
    assert bool(jnp.all(jnp.isfinite(out)))

    # Loose check vs f32 reference (kernel uses bf16 matmul operands).
    ref = decoder_layer_reference(params, x_low, enc, kernel_size=K)
    max_err = float(jnp.max(jnp.abs(out - ref)))
    assert max_err < 0.25, f"max abs error vs f32 reference: {max_err}"
    print("KERNEL_OK")
</pallas_src>

<mosaic_0001>
module attributes {stable_mosaic.version = 11 : i64} {
  func.func @_decoder_layer_kernel(%arg0: i32, %arg1: memref<1x64x16xbf16, #tpu.memory_space<vmem>>, %arg2: memref<1x64x168xbf16, #tpu.memory_space<vmem>>, %arg3: memref<64x1280xbf16, #tpu.memory_space<vmem>>, %arg4: memref<64x1xf32, #tpu.memory_space<vmem>>, %arg5: memref<32x640xbf16, #tpu.memory_space<vmem>>, %arg6: memref<32x1xf32, #tpu.memory_space<vmem>>, %arg7: memref<1x32x160xf32, #tpu.memory_space<vmem>>, %arg8: memref<128x168xbf16, #tpu.memory_space<vmem>>, %arg9: memref<1280x159xbf16, #tpu.memory_space<vmem>>, %arg10: memref<64x169xbf16, #tpu.memory_space<vmem>>, %arg11: memref<640x160xbf16, #tpu.memory_space<vmem>>) attributes {dimension_semantics = [#tpu.dimension_semantics<parallel>], iteration_bounds = array<i64: 2>, scalar_prefetch = 0 : i64, scratch_operands = 4 : i64, tpu.core_type = #tpu.core_type<tc>, window_params = [{transform_indices = @transform_0, window_bounds = array<i64: 1, 64, 16>}, {transform_indices = @transform_1, window_bounds = array<i64: 1, 64, 168>}, {pipeline_mode = #tpu.pipeline_mode<synchronous>, transform_indices = @transform_2, window_bounds = array<i64: 64, 1280>}, {pipeline_mode = #tpu.pipeline_mode<synchronous>, transform_indices = @transform_3, window_bounds = array<i64: 64, 1>}, {pipeline_mode = #tpu.pipeline_mode<synchronous>, transform_indices = @transform_4, window_bounds = array<i64: 32, 640>}, {pipeline_mode = #tpu.pipeline_mode<synchronous>, transform_indices = @transform_5, window_bounds = array<i64: 32, 1>}, {transform_indices = @transform_6, window_bounds = array<i64: 1, 32, 160>}]} {
    %0 = tpu.iota {dimensions = array<i32: 0>} : vector<16x168xi32>
    %1 = tpu.iota {dimensions = array<i32: 1>} : vector<16x168xi32>
    %c10_i32 = arith.constant 10 : i32
    %2 = vector.broadcast %c10_i32 : i32 to vector<16x168xi32>
    %3 = arith.muli %0, %2 : vector<16x168xi32>
    %c4_i32 = arith.constant 4 : i32
    %4 = vector.broadcast %c4_i32 : i32 to vector<16x168xi32>
    %5 = arith.addi %4, %3 : vector<16x168xi32>
    %6 = arith.cmpi sge, %1, %5 : vector<16x168xi32>
    %c10_i32_0 = arith.constant 10 : i32
    %7 = vector.broadcast %c10_i32_0 : i32 to vector<16x168xi32>
    %8 = arith.addi %5, %7 : vector<16x168xi32>
    %9 = arith.cmpi slt, %1, %8 : vector<16x168xi32>
    %10 = arith.andi %6, %9 : vector<16x168xi1>
    %cst = arith.constant 1.000000e+00 : f32
    %cst_1 = arith.constant 0.000000e+00 : f32
    %11 = vector.broadcast %cst : f32 to vector<16x168xf32>
    %12 = vector.broadcast %cst_1 : f32 to vector<16x168xf32>
    %13 = arith.select %10, %11, %12 : vector<16x168xi1>, vector<16x168xf32>
    %14 = arith.truncf %13 : vector<16x168xf32> to vector<16x168xbf16>
    %c0 = arith.constant 0 : index
    %c0_2 = arith.constant 0 : index
    %c0_3 = arith.constant 0 : index
    %15 = vector.load %arg1[%c0, %c0_2, %c0_3] : memref<1x64x16xbf16, #tpu.memory_space<vmem>>, vector<1x64x16xbf16>
    %16 = vector.shape_cast %15 : vector<1x64x16xbf16> to vector<64x16xbf16>
    %cst_4 = arith.constant dense<0.000000e+00> : vector<64x168xf32>
    %17 = tpu.matmul %16, %14, %cst_4 {dimension_numbers = #tpu.dot_dimension_numbers<[1], [0], [0], [1], [0, 0, 1, 1], [], []>} : vector<64x16xbf16>, vector<16x168xbf16>, vector<64x168xf32> -> vector<64x168xf32>
    %18 = arith.truncf %17 : vector<64x168xf32> to vector<64x168xbf16>
    %c0_5 = arith.constant 0 : index
    %c0_6 = arith.constant 0 : index
    %19 = vector.load %arg8[%c0_5, %c0_6] : memref<128x168xbf16, #tpu.memory_space<vmem>>, vector<64x168xbf16>
    tpu.vector_store %arg8[%c0_5, %c0_6], %18 {strides = array<i32>} : memref<128x168xbf16, #tpu.memory_space<vmem>>, vector<64x168xbf16>,
    %c0_7 = arith.constant 0 : index
    %c0_8 = arith.constant 0 : index
    %c0_9 = arith.constant 0 : index
    %20 = vector.load %arg2[%c0_7, %c0_8, %c0_9] : memref<1x64x168xbf16, #tpu.memory_space<vmem>>, vector<1x64x168xbf16>
    %21 = vector.shape_cast %20 : vector<1x64x168xbf16> to vector<64x168xbf16>
    %c64 = arith.constant 64 : index
    %c0_10 = arith.constant 0 : index
    %22 = vector.load %arg8[%c64, %c0_10] : memref<128x168xbf16, #tpu.memory_space<vmem>>, vector<64x168xbf16>
    tpu.vector_store %arg8[%c64, %c0_10], %21 {strides = array<i32>} : memref<128x168xbf16, #tpu.memory_space<vmem>>, vector<64x168xbf16>,
    %c0_11 = arith.constant 0 : index
    %c0_12 = arith.constant 0 : index
    %23 = vector.load %arg8[%c0_11, %c0_12] : memref<128x168xbf16, #tpu.memory_space<vmem>>, vector<128x168xbf16>
    %24 = vector.extract_strided_slice %23 {offsets = [0, 0], sizes = [128, 159], strides = [1, 1]} : vector<128x168xbf16> to vector<128x159xbf16>
    %c0_13 = arith.constant 0 : index
    %c0_14 = arith.constant 0 : index
    %25 = vector.load %arg9[%c0_13, %c0_14] : memref<1280x159xbf16, #tpu.memory_space<vmem>>, vector<128x159xbf16>
    tpu.vector_store %arg9[%c0_13, %c0_14], %24 {strides = array<i32>} : memref<1280x159xbf16, #tpu.memory_space<vmem>>, vector<128x159xbf16>,
    %26 = vector.extract_strided_slice %23 {offsets = [0, 1], sizes = [128, 159], strides = [1, 1]} : vector<128x168xbf16> to vector<128x159xbf16>
    %c128 = arith.constant 128 : index
    %c0_15 = arith.constant 0 : index
    %27 = vector.load %arg9[%c128, %c0_15] : memref<1280x159xbf16, #tpu.memory_space<vmem>>, vector<128x159xbf16>
    tpu.vector_store %arg9[%c128, %c0_15], %26 {strides = array<i32>} : memref<1280x159xbf16, #tpu.memory_space<vmem>>, vector<128x159xbf16>,
    %28 = vector.extract_strided_slice %23 {offsets = [0, 2], sizes = [128, 159], strides = [1, 1]} : vector<128x168xbf16> to vector<128x159xbf16>
    %c256 = arith.constant 256 : index
    %c0_16 = arith.constant 0 : index
    %29 = vector.load %arg9[%c256, %c0_16] : memref<1280x159xbf16, #tpu.memory_space<vmem>>, vector<128x159xbf16>
    tpu.vector_store %arg9[%c256, %c0_16], %28 {strides = array<i32>} : memref<1280x159xbf16, #tpu.memory_space<vmem>>, vector<128x159xbf16>,
    %30 = vector.extract_strided_slice %23 {offsets = [0, 3], sizes = [128, 159], strides = [1, 1]} : vector<128x168xbf16> to vector<128x159xbf16>
    %c384 = arith.constant 384 : index
    %c0_17 = arith.constant 0 : index
    %31 = vector.load %arg9[%c384, %c0_17] : memref<1280x159xbf16, #tpu.memory_space<vmem>>, vector<128x159xbf16>
    tpu.vector_store %arg9[%c384, %c0_17], %30 {strides = array<i32>} : memref<1280x159xbf16, #tpu.memory_space<vmem>>, vector<128x159xbf16>,
    %32 = vector.extract_strided_slice %23 {offsets = [0, 4], sizes = [128, 159], strides = [1, 1]} : vector<128x168xbf16> to vector<128x159xbf16>
    %c512 = arith.constant 512 : index
    %c0_18 = arith.constant 0 : index
    %33 = vector.load %arg9[%c512, %c0_18] : memref<1280x159xbf16, #tpu.memory_space<vmem>>, vector<128x159xbf16>
    tpu.vector_store %arg9[%c512, %c0_18], %32 {strides = array<i32>} : memref<1280x159xbf16, #tpu.memory_space<vmem>>, vector<128x159xbf16>,
    %34 = vector.extract_strided_slice %23 {offsets = [0, 5], sizes = [128, 159], strides = [1, 1]} : vector<128x168xbf16> to vector<128x159xbf16>
    %c640 = arith.constant 640 : index
    %c0_19 = arith.constant 0 : index
    %35 = vector.load %arg9[%c640, %c0_19] : memref<1280x159xbf16, #tpu.memory_space<vmem>>, vector<128x159xbf16>
    tpu.vector_store %arg9[%c640, %c0_19], %34 {strides = array<i32>} : memref<1280x159xbf16, #tpu.memory_space<vmem>>, vector<128x159xbf16>,
    %36 = vector.extract_strided_slice %23 {offsets = [0, 6], sizes = [128, 159], strides = [1, 1]} : vector<128x168xbf16> to vector<128x159xbf16>
    %c768 = arith.constant 768 : index
    %c0_20 = arith.constant 0 : index
    %37 = vector.load %arg9[%c768, %c0_20] : memref<1280x159xbf16, #tpu.memory_space<vmem>>, vector<128x159xbf16>
    tpu.vector_store %arg9[%c768, %c0_20], %36 {strides = array<i32>} : memref<1280x159xbf16, #tpu.memory_space<vmem>>, vector<128x159xbf16>,
    %38 = vector.extract_strided_slice %23 {offsets = [0, 7], sizes = [128, 159], strides = [1, 1]} : vector<128x168xbf16> to vector<128x159xbf16>
    %c896 = arith.constant 896 : index
    %c0_21 = arith.constant 0 : index
    %39 = vector.load %arg9[%c896, %c0_21] : memref<1280x159xbf16, #tpu.memory_space<vmem>>, vector<128x159xbf16>
    tpu.vector_store %arg9[%c896, %c0_21], %38 {strides = array<i32>} : memref<1280x159xbf16, #tpu.memory_space<vmem>>, vector<128x159xbf16>,
    %40 = vector.extract_strided_slice %23 {offsets = [0, 8], sizes = [128, 159], strides = [1, 1]} : vector<128x168xbf16> to vector<128x159xbf16>
    %c1024 = arith.constant 1024 : index
    %c0_22 = arith.constant 0 : index
    %41 = vector.load %arg9[%c1024, %c0_22] : memref<1280x159xbf16, #tpu.memory_space<vmem>>, vector<128x159xbf16>
    tpu.vector_store %arg9[%c1024, %c0_22], %40 {strides = array<i32>} : memref<1280x159xbf16, #tpu.memory_space<vmem>>, vector<128x159xbf16>,
    %42 = vector.extract_strided_slice %23 {offsets = [0, 9], sizes = [128, 159], strides = [1, 1]} : vector<128x168xbf16> to vector<128x159xbf16>
    %c1152 = arith.constant 1152 : index
    %c0_23 = arith.constant 0 : index
    %43 = vector.load %arg9[%c1152, %c0_23] : memref<1280x159xbf16, #tpu.memory_space<vmem>>, vector<128x159xbf16>
    tpu.vector_store %arg9[%c1152, %c0_23], %42 {strides = array<i32>} : memref<1280x159xbf16, #tpu.memory_space<vmem>>, vector<128x159xbf16>,
    %c0_24 = arith.constant 0 : index
    %c0_25 = arith.constant 0 : index
    %44 = vector.load %arg3[%c0_24, %c0_25] : memref<64x1280xbf16, #tpu.memory_space<vmem>>, vector<64x1280xbf16>
    %c0_26 = arith.constant 0 : index
    %c0_27 = arith.constant 0 : index
    %45 = vector.load %arg9[%c0_26, %c0_27] : memref<1280x159xbf16, #tpu.memory_space<vmem>>, vector<1280x159xbf16>
    %cst_28 = arith.constant dense<0.000000e+00> : vector<64x159xf32>
    %46 = tpu.matmul %44, %45, %cst_28 {dimension_numbers = #tpu.dot_dimension_numbers<[1], [0], [0], [1], [0, 0, 1, 1], [], []>} : vector<64x1280xbf16>, vector<1280x159xbf16>, vector<64x159xf32> -> vector<64x159xf32>
    %c0_29 = arith.constant 0 : index
    %c0_30 = arith.constant 0 : index
    %47 = vector.load %arg4[%c0_29, %c0_30] : memref<64x1xf32, #tpu.memory_space<vmem>>, vector<64x1xf32>
    %48 = vector.broadcast %47 : vector<64x1xf32> to vector<64x159xf32>
    %49 = arith.addf %46, %48 : vector<64x159xf32>
    %cst_31 = arith.constant 0.000000e+00 : f32
    %50 = vector.broadcast %cst_31 : f32 to vector<64x159xf32>
    %51 = arith.maximumf %49, %50 : vector<64x159xf32>
    %cst_32 = arith.constant 0.000000e+00 : bf16
    %52 = vector.broadcast %cst_32 : bf16 to vector<64x169xbf16>
    %c0_33 = arith.constant 0 : index
    %c0_34 = arith.constant 0 : index
    %53 = vector.load %arg10[%c0_33, %c0_34] : memref<64x169xbf16, #tpu.memory_space<vmem>>, vector<64x169xbf16>
    tpu.vector_store %arg10[%c0_33, %c0_34], %52 {strides = array<i32>} : memref<64x169xbf16, #tpu.memory_space<vmem>>, vector<64x169xbf16>,
    %54 = arith.truncf %51 : vector<64x159xf32> to vector<64x159xbf16>
    %c0_35 = arith.constant 0 : index
    %c5 = arith.constant 5 : index
    %55 = vector.load %arg10[%c0_35, %c5] : memref<64x169xbf16, #tpu.memory_space<vmem>>, vector<64x159xbf16>
    tpu.vector_store %arg10[%c0_35, %c5], %54 {strides = array<i32>} : memref<64x169xbf16, #tpu.memory_space<vmem>>, vector<64x159xbf16>,
    %c0_36 = arith.constant 0 : index
    %c0_37 = arith.constant 0 : index
    %56 = vector.load %arg10[%c0_36, %c0_37] : memref<64x169xbf16, #tpu.memory_space<vmem>>, vector<64x169xbf16>
    %57 = vector.extract_strided_slice %56 {offsets = [0, 0], sizes = [64, 160], strides = [1, 1]} : vector<64x169xbf16> to vector<64x160xbf16>
    %c0_38 = arith.constant 0 : index
    %c0_39 = arith.constant 0 : index
    %58 = vector.load %arg11[%c0_38, %c0_39] : memref<640x160xbf16, #tpu.memory_space<vmem>>, vector<64x160xbf16>
    tpu.vector_store %arg11[%c0_38, %c0_39], %57 {strides = array<i32>} : memref<640x160xbf16, #tpu.memory_space<vmem>>, vector<64x160xbf16>,
    %59 = vector.extract_strided_slice %56 {offsets = [0, 1], sizes = [64, 160], strides = [1, 1]} : vector<64x169xbf16> to vector<64x160xbf16>
    %c64_40 = arith.constant 64 : index
    %c0_41 = arith.constant 0 : index
    %60 = vector.load %arg11[%c64_40, %c0_41] : memref<640x160xbf16, #tpu.memory_space<vmem>>, vector<64x160xbf16>
    tpu.vector_store %arg11[%c64_40, %c0_41], %59 {strides = array<i32>} : memref<640x160xbf16, #tpu.memory_space<vmem>>, vector<64x160xbf16>,
    %61 = vector.extract_strided_slice %56 {offsets = [0, 2], sizes = [64, 160], strides = [1, 1]} : vector<64x169xbf16> to vector<64x160xbf16>
    %c128_42 = arith.constant 128 : index
    %c0_43 = arith.constant 0 : index
    %62 = vector.load %arg11[%c128_42, %c0_43] : memref<640x160xbf16, #tpu.memory_space<vmem>>, vector<64x160xbf16>
    tpu.vector_store %arg11[%c128_42, %c0_43], %61 {strides = array<i32>} : memref<640x160xbf16, #tpu.memory_space<vmem>>, vector<64x160xbf16>,
    %63 = vector.extract_strided_slice %56 {offsets = [0, 3], sizes = [64, 160], strides = [1, 1]} : vector<64x169xbf16> to vector<64x160xbf16>
    %c192 = arith.constant 192 : index
    %c0_44 = arith.constant 0 : index
    %64 = vector.load %arg11[%c192, %c0_44] : memref<640x160xbf16, #tpu.memory_space<vmem>>, vector<64x160xbf16>
    tpu.vector_store %arg11[%c192, %c0_44], %63 {strides = array<i32>} : memref<640x160xbf16, #tpu.memory_space<vmem>>, vector<64x160xbf16>,
    %65 = vector.extract_strided_slice %56 {offsets = [0, 4], sizes = [64, 160], strides = [1, 1]} : vector<64x169xbf16> to vector<64x160xbf16>
    %c256_45 = arith.constant 256 : index
    %c0_46 = arith.constant 0 : index
    %66 = vector.load %arg11[%c256_45, %c0_46] : memref<640x160xbf16, #tpu.memory_space<vmem>>, vector<64x160xbf16>
    tpu.vector_store %arg11[%c256_45, %c0_46], %65 {strides = array<i32>} : memref<640x160xbf16, #tpu.memory_space<vmem>>, vector<64x160xbf16>,
    %67 = vector.extract_strided_slice %56 {offsets = [0, 5], sizes = [64, 160], strides = [1, 1]} : vector<64x169xbf16> to vector<64x160xbf16>
    %c320 = arith.constant 320 : index
    %c0_47 = arith.constant 0 : index
    %68 = vector.load %arg11[%c320, %c0_47] : memref<640x160xbf16, #tpu.memory_space<vmem>>, vector<64x160xbf16>
    tpu.vector_store %arg11[%c320, %c0_47], %67 {strides = array<i32>} : memref<640x160xbf16, #tpu.memory_space<vmem>>, vector<64x160xbf16>,
    %69 = vector.extract_strided_slice %56 {offsets = [0, 6], sizes = [64, 160], strides = [1, 1]} : vector<64x169xbf16> to vector<64x160xbf16>
    %c384_48 = arith.constant 384 : index
    %c0_49 = arith.constant 0 : index
    %70 = vector.load %arg11[%c384_48, %c0_49] : memref<640x160xbf16, #tpu.memory_space<vmem>>, vector<64x160xbf16>
    tpu.vector_store %arg11[%c384_48, %c0_49], %69 {strides = array<i32>} : memref<640x160xbf16, #tpu.memory_space<vmem>>, vector<64x160xbf16>,
    %71 = vector.extract_strided_slice %56 {offsets = [0, 7], sizes = [64, 160], strides = [1, 1]} : vector<64x169xbf16> to vector<64x160xbf16>
    %c448 = arith.constant 448 : index
    %c0_50 = arith.constant 0 : index
    %72 = vector.load %arg11[%c448, %c0_50] : memref<640x160xbf16, #tpu.memory_space<vmem>>, vector<64x160xbf16>
    tpu.vector_store %arg11[%c448, %c0_50], %71 {strides = array<i32>} : memref<640x160xbf16, #tpu.memory_space<vmem>>, vector<64x160xbf16>,
    %73 = vector.extract_strided_slice %56 {offsets = [0, 8], sizes = [64, 160], strides = [1, 1]} : vector<64x169xbf16> to vector<64x160xbf16>
    %c512_51 = arith.constant 512 : index
    %c0_52 = arith.constant 0 : index
    %74 = vector.load %arg11[%c512_51, %c0_52] : memref<640x160xbf16, #tpu.memory_space<vmem>>, vector<64x160xbf16>
    tpu.vector_store %arg11[%c512_51, %c0_52], %73 {strides = array<i32>} : memref<640x160xbf16, #tpu.memory_space<vmem>>, vector<64x160xbf16>,
    %75 = vector.extract_strided_slice %56 {offsets = [0, 9], sizes = [64, 160], strides = [1, 1]} : vector<64x169xbf16> to vector<64x160xbf16>
    %c576 = arith.constant 576 : index
    %c0_53 = arith.constant 0 : index
    %76 = vector.load %arg11[%c576, %c0_53] : memref<640x160xbf16, #tpu.memory_space<vmem>>, vector<64x160xbf16>
    tpu.vector_store %arg11[%c576, %c0_53], %75 {strides = array<i32>} : memref<640x160xbf16, #tpu.memory_space<vmem>>, vector<64x160xbf16>,
    %c0_54 = arith.constant 0 : index
    %c0_55 = arith.constant 0 : index
    %77 = vector.load %arg5[%c0_54, %c0_55] : memref<32x640xbf16, #tpu.memory_space<vmem>>, vector<32x640xbf16>
    %c0_56 = arith.constant 0 : index
    %c0_57 = arith.constant 0 : index
    %78 = vector.load %arg11[%c0_56, %c0_57] : memref<640x160xbf16, #tpu.memory_space<vmem>>, vector<640x160xbf16>
    %cst_58 = arith.constant dense<0.000000e+00> : vector<32x160xf32>
    %79 = tpu.matmul %77, %78, %cst_58 {dimension_numbers = #tpu.dot_dimension_numbers<[1], [0], [0], [1], [0, 0, 1, 1], [], []>} : vector<32x640xbf16>, vector<640x160xbf16>, vector<32x160xf32> -> vector<32x160xf32>
    %c0_59 = arith.constant 0 : index
    %c0_60 = arith.constant 0 : index
    %80 = vector.load %arg6[%c0_59, %c0_60] : memref<32x1xf32, #tpu.memory_space<vmem>>, vector<32x1xf32>
    %81 = vector.broadcast %80 : vector<32x1xf32> to vector<32x160xf32>
    %82 = arith.addf %79, %81 : vector<32x160xf32>
    %cst_61 = arith.constant 0.000000e+00 : f32
    %83 = vector.broadcast %cst_61 : f32 to vector<32x160xf32>
    %84 = arith.maximumf %82, %83 : vector<32x160xf32>
    %c0_62 = arith.constant 0 : index
    %c0_63 = arith.constant 0 : index
    %c0_64 = arith.constant 0 : index
    %85 = vector.load %arg7[%c0_62, %c0_63, %c0_64] : memref<1x32x160xf32, #tpu.memory_space<vmem>>, vector<1x32x160xf32>
    %86 = vector.shape_cast %85 : vector<1x32x160xf32> to vector<32x160xf32>
    %87 = vector.shape_cast %84 : vector<32x160xf32> to vector<1x32x160xf32>
    tpu.vector_store %arg7[%c0_62, %c0_63, %c0_64], %87 {strides = array<i32>} : memref<1x32x160xf32, #tpu.memory_space<vmem>>, vector<1x32x160xf32>,
    return
  }
  func.func @transform_0(%arg0: i32) -> (i32, i32, i32) {
    %c0_i32 = arith.constant 0 : i32
    %c0_i32_0 = arith.constant 0 : i32
    %c0_i32_1 = arith.constant 0 : i32
    return %arg0, %c0_i32, %c0_i32_0 : i32, i32, i32
  }
  func.func @transform_1(%arg0: i32) -> (i32, i32, i32) {
    %c0_i32 = arith.constant 0 : i32
    %c0_i32_0 = arith.constant 0 : i32
    %c0_i32_1 = arith.constant 0 : i32
    return %arg0, %c0_i32, %c0_i32_0 : i32, i32, i32
  }
  func.func @transform_2(%arg0: i32) -> (i32, i32) {
    %c0_i32 = arith.constant 0 : i32
    %c0_i32_0 = arith.constant 0 : i32
    %c0_i32_1 = arith.constant 0 : i32
    return %c0_i32, %c0_i32_0 : i32, i32
  }
  func.func @transform_3(%arg0: i32) -> (i32, i32) {
    %c0_i32 = arith.constant 0 : i32
    %c0_i32_0 = arith.constant 0 : i32
    %c0_i32_1 = arith.constant 0 : i32
    return %c0_i32, %c0_i32_0 : i32, i32
  }
  func.func @transform_4(%arg0: i32) -> (i32, i32) {
    %c0_i32 = arith.constant 0 : i32
    %c0_i32_0 = arith.constant 0 : i32
    %c0_i32_1 = arith.constant 0 : i32
    return %c0_i32, %c0_i32_0 : i32, i32
  }
  func.func @transform_5(%arg0: i32) -> (i32, i32) {
    %c0_i32 = arith.constant 0 : i32
    %c0_i32_0 = arith.constant 0 : i32
    %c0_i32_1 = arith.constant 0 : i32
    return %c0_i32, %c0_i32_0 : i32, i32
  }
  func.func @transform_6(%arg0: i32) -> (i32, i32, i32) {
    %c0_i32 = arith.constant 0 : i32
    %c0_i32_0 = arith.constant 0 : i32
    %c0_i32_1 = arith.constant 0 : i32
    return %arg0, %c0_i32, %c0_i32_0 : i32, i32, i32
  }
}

</mosaic_0001>

<llo_original>
// kernel: decoder_layer_forward.1
$region0: #{decoder_layer_forward.1}
  #allocation0 [shape = 'u32[]', space=smem, size = 0x4, offset = 0x4, fixed_abs, tag = 'smem constant byte address 0x4 - core index']
  #allocation1 [shape = 'u32[144,128]{1,0:T(1,128)}', space=vmem, size = 0x12000, scoped, tag = 'internal scratch']
  #allocation2 [shape = 'bf16[128,168]{1,0:T(16,128)(2,1)}', space=vmem, size = 0x10000, scoped, tag = 'scratch operand']
  #allocation3 [shape = 'bf16[1280,159]{1,0:T(16,128)(2,1)}', space=vmem, size = 0xa0000, scoped, tag = 'scratch operand']
  #allocation4 [shape = 'bf16[64,169]{1,0:T(16,128)(2,1)}', space=vmem, size = 0x8000, scoped, tag = 'scratch operand']
  #allocation5 [shape = 'bf16[640,160]{1,0:T(16,128)(2,1)}', space=vmem, size = 0x50000, scoped, tag = 'scratch operand']
  %s0 = inlined_call_operand.vmem [shape: bf16[2,64,16], index: 0, kind: input, shape index: {}]
  %s1 = inlined_call_operand.vmem [shape: bf16[2,64,168], index: 1, kind: input, shape index: {}]
  %s2 = inlined_call_operand.vmem [shape: bf16[64,1280], index: 2, kind: input, shape index: {}]
  %s3 = inlined_call_operand.vmem [shape: f32[64,1], index: 3, kind: input, shape index: {}]
  %s4 = inlined_call_operand.vmem [shape: bf16[32,640], index: 4, kind: input, shape index: {}]
  %s5 = inlined_call_operand.vmem [shape: f32[32,1], index: 5, kind: input, shape index: {}]
  %s6 = inlined_call_operand.hbm [shape: f32[2,32,160], index: 6, kind: output, shape index: {}]
  %s7 = sld [smem:[#allocation0]]
  $region57: #{decoder_layer_forward.1} parent=0
    _
  %s9 = ssub.s32 1, %s7
  %s10 = scalar_select 0, %s9, %s7
  $region1: #{decoder_layer_forward.1} parent=0
    #allocation6 [shape = 'u8[65536]{0}', space=vmem, size = 0x10000, scoped, tag = 'output window, operand 0']
    #allocation7 [shape = 's32[2]{0}', space=sflag, size = 0x8, scoped, tag = 'scoped memory for decoder_layer_forward.1']
    %11 = vsyncpa [#allocation7], 0
    %s12 = scalar_lea.sflag [#allocation7], 1
    %13 = vsyncpa %s12, 0
    loop: start=0, step=1, limit=4
    $region2: #{decoder_layer_forward.1} parent=1 // loop_pre_header
      _
    $region3: #{decoder_layer_forward.1} parent=1 // loop_header
      %s15 = sphi 0, %s19
      %p16 = scmp.ge.s32.totalorder %s15, 4
      %s25 = sphi 0, %s27
      %s28 = sphi 0, %s25
      %s29 = sphi 0, %s28
      %s45 = sphi 0, %s29
      %s51 = sphi 0, %s53
      %s54 = sphi 0, %s51
      %s55 = sphi 0, %s54
      %s71 = sphi 0, %s55
      %s75 = sphi 0, %s75
      %s77 = sphi 0, %s75
      %s78 = sphi 0, %s77
      %s92 = sphi 0, %s78
      %s96 = sphi 0, %s96
      %s98 = sphi 0, %s96
      %s99 = sphi 0, %s98
      %s113 = sphi 0, %s99
      %s117 = sphi 0, %s117
      %s119 = sphi 0, %s117
      %s120 = sphi 0, %s119
      %s134 = sphi 0, %s120
      %s138 = sphi 0, %s138
      %s140 = sphi 0, %s138
      %s141 = sphi 0, %s140
      %s155 = sphi 0, %s141
      %s161 = sphi 0, %s163
      %s164 = sphi 0, %s161
      %s165 = sphi 0, %s164
      %s181 = sphi 0, %s165
    $region4: #{decoder_layer_forward.1} parent=1 // loop_header_branch
      %18 = sbr.rel (%p16) target = $region8
    $region5: #{decoder_layer_forward.1} parent=1 // loop_body
      %s20 = ssub.s32 %s15, 1
      %s21 = ssub.s32 %s15, 2
      %s22 = sadd.s32 %s15, 1
      %s23 = ssub.s32 %s15, %s22
      %p24 = scmp.eq.s32.totalorder %s23, 0
      %s26 = sadd.s32 %s25, 1
      %s27 = scalar_select %p24, %s25, %s26
      %p30 = pneg %p24
      %p31 = scmp.eq.s32.totalorder %s15, 1
      %p32 = por %p30, %p31
      %p33 = scmp.ne.s32.totalorder %s25, %s28
      %p34 = scmp.eq.s32.totalorder %s15, 0
      %p35 = por %p33, %p34
      %p36 = scmp.ne.s32.totalorder %s25, %s28
      %p37 = scmp.eq.s32.totalorder %s20, 1
      %p38 = por %p36, %p37
      %p39 = scmp.ne.s32.totalorder %s28, %s29
      %p40 = scmp.eq.s32.totalorder %s20, 0
      %p41 = por %p39, %p40
      %p42 = scmp.ne.s32.totalorder %s28, %s29
      %p43 = scmp.eq.s32.totalorder %s21, 1
      %p44 = por %p42, %p43
      %p46 = scmp.ne.s32.totalorder %s29, %s45
      %p47 = scmp.eq.s32.totalorder %s21, 0
      %p48 = por %p46, %p47
      %s49 = ssub.s32 %s15, %s22
      %p50 = scmp.eq.s32.totalorder %s49, 0
      %s52 = sadd.s32 %s51, 1
      %s53 = scalar_select %p50, %s51, %s52
      %p56 = pneg %p50
      %p57 = scmp.eq.s32.totalorder %s15, 1
      %p58 = por %p56, %p57
      %p59 = scmp.ne.s32.totalorder %s51, %s54
      %p60 = scmp.eq.s32.totalorder %s15, 0
      %p61 = por %p59, %p60
      %p62 = scmp.ne.s32.totalorder %s51, %s54
      %p63 = scmp.eq.s32.totalorder %s20, 1
      %p64 = por %p62, %p63
      %p65 = scmp.ne.s32.totalorder %s54, %s55
      %p66 = scmp.eq.s32.totalorder %s20, 0
      %p67 = por %p65, %p66
      %p68 = scmp.ne.s32.totalorder %s54, %s55
      %p69 = scmp.eq.s32.totalorder %s21, 1
      %p70 = por %p68, %p69
      %p72 = scmp.ne.s32.totalorder %s55, %s71
      %p73 = scmp.eq.s32.totalorder %s21, 0
      %p74 = por %p72, %p73
      %s76 = sadd.s32 %s75, 1
      %p79 = scmp.eq.s32.totalorder %s15, 1
      %p80 = scmp.ne.s32.totalorder %s75, %s77
      %p81 = scmp.eq.s32.totalorder %s15, 0
      %p82 = por %p80, %p81
      %p83 = scmp.ne.s32.totalorder %s75, %s77
      %p84 = scmp.eq.s32.totalorder %s20, 1
      %p85 = por %p83, %p84
      %p86 = scmp.ne.s32.totalorder %s77, %s78
      %p87 = scmp.eq.s32.totalorder %s20, 0
      %p88 = por %p86, %p87
      %p89 = scmp.ne.s32.totalorder %s77, %s78
      %p90 = scmp.eq.s32.totalorder %s21, 1
      %p91 = por %p89, %p90
      %p93 = scmp.ne.s32.totalorder %s78, %s92
      %p94 = scmp.eq.s32.totalorder %s21, 0
      %p95 = por %p93, %p94
      %s97 = sadd.s32 %s96, 1
      %p100 = scmp.eq.s32.totalorder %s15, 1
      %p101 = scmp.ne.s32.totalorder %s96, %s98
      %p102 = scmp.eq.s32.totalorder %s15, 0
      %p103 = por %p101, %p102
      %p104 = scmp.ne.s32.totalorder %s96, %s98
      %p105 = scmp.eq.s32.totalorder %s20, 1
      %p106 = por %p104, %p105
      %p107 = scmp.ne.s32.totalorder %s98, %s99
      %p108 = scmp.eq.s32.totalorder %s20, 0
      %p109 = por %p107, %p108
      %p110 = scmp.ne.s32.totalorder %s98, %s99
      %p111 = scmp.eq.s32.totalorder %s21, 1
      %p112 = por %p110, %p111
      %p114 = scmp.ne.s32.totalorder %s99, %s113
      %p115 = scmp.eq.s32.totalorder %s21, 0
      %p116 = por %p114, %p115
      %s118 = sadd.s32 %s117, 1
      %p121 = scmp.eq.s32.totalorder %s15, 1
      %p122 = scmp.ne.s32.totalorder %s117, %s119
      %p123 = scmp.eq.s32.totalorder %s15, 0
      %p124 = por %p122, %p123
      %p125 = scmp.ne.s32.totalorder %s117, %s119
      %p126 = scmp.eq.s32.totalorder %s20, 1
      %p127 = por %p125, %p126
      %p128 = scmp.ne.s32.totalorder %s119, %s120
      %p129 = scmp.eq.s32.totalorder %s20, 0
      %p130 = por %p128, %p129
      %p131 = scmp.ne.s32.totalorder %s119, %s120
      %p132 = scmp.eq.s32.totalorder %s21, 1
      %p133 = por %p131, %p132
      %p135 = scmp.ne.s32.totalorder %s120, %s134
      %p136 = scmp.eq.s32.totalorder %s21, 0
      %p137 = por %p135, %p136
      %s139 = sadd.s32 %s138, 1
      %p142 = scmp.eq.s32.totalorder %s15, 1
      %p143 = scmp.ne.s32.totalorder %s138, %s140
      %p144 = scmp.eq.s32.totalorder %s15, 0
      %p145 = por %p143, %p144
      %p146 = scmp.ne.s32.totalorder %s138, %s140
      %p147 = scmp.eq.s32.totalorder %s20, 1
      %p148 = por %p146, %p147
      %p149 = scmp.ne.s32.totalorder %s140, %s141
      %p150 = scmp.eq.s32.totalorder %s20, 0
      %p151 = por %p149, %p150
      %p152 = scmp.ne.s32.totalorder %s140, %s141
      %p153 = scmp.eq.s32.totalorder %s21, 1
      %p154 = por %p152, %p153
      %p156 = scmp.ne.s32.totalorder %s141, %s155
      %p157 = scmp.eq.s32.totalorder %s21, 0
      %p158 = por %p156, %p157
      %s159 = ssub.s32 %s15, %s22
      %p160 = scmp.eq.s32.totalorder %s159, 0
      %s162 = sadd.s32 %s161, 1
      %s163 = scalar_select %p160, %s161, %s162
      %p166 = pneg %p160
      %p167 = scmp.eq.s32.totalorder %s15, 1
      %p168 = por %p166, %p167
      %p169 = scmp.ne.s32.totalorder %s161, %s164
      %p170 = scmp.eq.s32.totalorder %s15, 0
      %p171 = por %p169, %p170
      %p172 = scmp.ne.s32.totalorder %s161, %s164
      %p173 = scmp.eq.s32.totalorder %s20, 1
      %p174 = por %p172, %p173
      %p175 = scmp.ne.s32.totalorder %s164, %s165
      %p176 = scmp.eq.s32.totalorder %s20, 0
      %p177 = por %p175, %p176
      %p178 = scmp.ne.s32.totalorder %s164, %s165
      %p179 = scmp.eq.s32.totalorder %s21, 1
      %p180 = por %p178, %p179
      %p182 = scmp.ne.s32.totalorder %s165, %s181
      %p183 = scmp.eq.s32.totalorder %s21, 0
      %p184 = por %p182, %p183
      %p185 = scmp.le.s32.totalorder 1, %s15
      %p186 = scmp.lt.s32.totalorder %s15, 3
      %p187 = pnand %p185, %p186
      %p188 = pneg %p187
      // Predicated region
      $region9: #{decoder_layer_forward.1} parent=5 // pred_check
        _
      $region10: #{decoder_layer_forward.1} parent=5 // pred_check_branch
        %190 = sbr.rel (%p187) target = $region12
      $region11: #{decoder_layer_forward.1} parent=5 // pred_region
        %s191 = ssub.s32 %s15, 1
        // Predicated region
        $region13: #{decoder_layer_forward.1} parent=11 // pred_check
          %p192 = pneg %p88
        $region14: #{decoder_layer_forward.1} parent=11 // pred_check_branch
          %194 = sbr.rel (%p192) target = $region16
        $region15: #{decoder_layer_forward.1} parent=11 // pred_region
          _
        $region16: #{decoder_layer_forward.1} parent=11 // pred_fallthru
          _
        // Predicated region
        $region17: #{decoder_layer_forward.1} parent=11 // pred_check
          %p195 = pneg %p109
        $region18: #{decoder_layer_forward.1} parent=11 // pred_check_branch
          %197 = sbr.rel (%p195) target = $region20
        $region19: #{decoder_layer_forward.1} parent=11 // pred_region
          _
        $region20: #{decoder_layer_forward.1} parent=11 // pred_fallthru
          _
        // Predicated region
        $region21: #{decoder_layer_forward.1} parent=11 // pred_check
          %p198 = pneg %p130
        $region22: #{decoder_layer_forward.1} parent=11 // pred_check_branch
          %200 = sbr.rel (%p198) target = $region24
        $region23: #{decoder_layer_forward.1} parent=11 // pred_region
          _
        $region24: #{decoder_layer_forward.1} parent=11 // pred_fallthru
          _
        // Predicated region
        $region25: #{decoder_layer_forward.1} parent=11 // pred_check
          %p201 = pneg %p151
        $region26: #{decoder_layer_forward.1} parent=11 // pred_check_branch
          %203 = sbr.rel (%p201) target = $region28
        $region27: #{decoder_layer_forward.1} parent=11 // pred_region
          _
        $region28: #{decoder_layer_forward.1} parent=11 // pred_fallthru
          _
      $region12: #{decoder_layer_forward.1} parent=5 // pred_fallthru
        _
      %p204 = scmp.lt.s32.totalorder %s15, 2
      // Predicated region
      $region29: #{decoder_layer_forward.1} parent=5 // pred_check
        %p205 = pneg %p204
      $region30: #{decoder_layer_forward.1} parent=5 // pred_check_branch
        %207 = sbr.rel (%p205) target = $region32
      $region31: #{decoder_layer_forward.1} parent=5 // pred_region
        // Predicated region
        $region33: #{decoder_layer_forward.1} parent=31 // pred_check
          %p208 = pneg %p35
        $region34: #{decoder_layer_forward.1} parent=31 // pred_check_branch
          %210 = sbr.rel (%p208) target = $region36
        $region35: #{decoder_layer_forward.1} parent=31 // pred_region
          %p211 = scmp.lt.s32.totalorder %s15, 1
          %s212 = scalar_select %p211, %s15, 1
          %s213 = smul.addr %s212, 8
          %s214 = smul.addr %s213, 4
          %s215 = scalar_lea.vmem %s0, %s214
        $region36: #{decoder_layer_forward.1} parent=31 // pred_fallthru
          _
        // Predicated region
        $region37: #{decoder_layer_forward.1} parent=31 // pred_check
          %p216 = pneg %p61
        $region38: #{decoder_layer_forward.1} parent=31 // pred_check_branch
          %218 = sbr.rel (%p216) target = $region40
        $region39: #{decoder_layer_forward.1} parent=31 // pred_region
          %p219 = scmp.lt.s32.totalorder %s15, 1
          %s220 = scalar_select %p219, %s15, 1
          %s221 = smul.addr %s220, 16
          %s222 = smul.addr %s221, 4
          %s223 = scalar_lea.vmem %s1, %s222
        $region40: #{decoder_layer_forward.1} parent=31 // pred_fallthru
          _
      $region32: #{decoder_layer_forward.1} parent=5 // pred_fallthru
        _
      %p224 = scmp.le.s32.totalorder 1, %s15
      %p225 = scmp.lt.s32.totalorder %s15, 3
      %p226 = pnand %p224, %p225
      %p227 = pneg %p226
      // Predicated region
      $region41: #{decoder_layer_forward.1} parent=5 // pred_check
        _
      $region42: #{decoder_layer_forward.1} parent=5 // pred_check_branch
        %229 = sbr.rel (%p226) target = $region44
      $region43: #{decoder_layer_forward.1} parent=5 // pred_region
        %s230 = ssub.s32 %s15, 1
        %p231 = scmp.lt.s32.totalorder %s20, 1
        %s232 = scalar_select %p231, %s20, 1
        %s233 = smul.addr %s232, 8
        %s234 = smul.addr %s233, 4
        %s235 = scalar_lea.vmem %s0, %s234
        %p236 = pneg %p41
        %p237 = pneg %p38
        %p238 = scmp.lt.s32.totalorder %s20, 1
        %s239 = scalar_select %p238, %s20, 1
        %s240 = smul.addr %s239, 16
        %s241 = smul.addr %s240, 4
        %s242 = scalar_lea.vmem %s1, %s241
        %p243 = pneg %p67
        %p244 = pneg %p64
        %p245 = pneg %p88
        %p246 = pneg %p85
        %p247 = pneg %p109
        %p248 = pneg %p106
        %p249 = pneg %p130
        %p250 = pneg %p127
        %p251 = pneg %p151
        %p252 = pneg %p148
        %p253 = pneg %p177
        %p254 = pneg %p174
        %s255 = sand.u32 %s164, 1
        %s256 = scalar_lea.sflag [#allocation7], %s255
        %s257 = sand.u32 %s164, 1
        %s258 = smul.addr %s257, 64
        %s259 = scalar_lea.vmem [#allocation6], %s258
        %p260 = scmp.lt.s32.totalorder %s20, 1
        %s261 = scalar_select %p260, %s20, 1
        %s262 = smul.addr %s261, 8
        %s263 = smul.addr %s262, 4
        %s264 = scalar_lea.vmem %s0, %s263
        %p265 = scmp.lt.s32.totalorder %s20, 1
        %s266 = scalar_select %p265, %s20, 1
        %s267 = smul.addr %s266, 16
        %s268 = smul.addr %s267, 4
        %s269 = scalar_lea.vmem %s1, %s268
        %v271 = vlaneseq
        %v272 = vshrl.u32 %v271, 7
        %v273 = vadd.s32 %v272, 8
        %v274 = vlaneseq
        %v275 = vand.u32 %v274, 127
        %v276 = vadd.s32 %v275, 128
        %v277 = vmul.u32 %v272, 10
        %v278 = vmul.u32 %v273, 10
        %v279 = vadd.s32 %v277, 4
        %v280 = vadd.s32 %v278, 4
        %vm281 = vcmp.ge.s32.totalorder %v275, %v279
        %vm282 = vcmp.ge.s32.totalorder %v276, %v279
        %vm283 = vcmp.ge.s32.totalorder %v275, %v280
        %vm284 = vcmp.ge.s32.totalorder %v276, %v280
        %v285 = vadd.s32 %v279, 10
        %v286 = vadd.s32 %v280, 10
        %vm287 = vcmp.lt.s32.totalorder %v275, %v285
        %vm288 = vcmp.lt.s32.totalorder %v276, %v285
        %vm289 = vcmp.lt.s32.totalorder %v275, %v286
        %vm290 = vcmp.lt.s32.totalorder %v276, %v286
        %vm291 = vmand %vm281, %vm287
        %vm292 = vmand %vm282, %vm288
        %vm293 = vmand %vm283, %vm289
        %vm294 = vmand %vm284, %vm290
        %v295 = vsel %vm291, 1.0, 0.0
        %v296 = vsel %vm292, 1.0, 0.0
        %v297 = vsel %vm293, 1.0, 0.0
        %v298 = vsel %vm294, 1.0, 0.0
        %v299 = vpack.c.bf16 %v297, %v295
        %v300 = vpack.c.bf16 %v298, %v296
        %v301 = vld [vmem:[%s264] sm:$0xf]
        %v302 = vld [vmem:[%s264 + $0x4] sm:$0xf]
        %v303 = vld [vmem:[%s264 + $0x8] sm:$0xf]
        %v304 = vld [vmem:[%s264 + $0xc] sm:$0xf]
        %v305 = vld [vmem:[%s264 + $0x10] sm:$0xf]
        %v306 = vld [vmem:[%s264 + $0x14] sm:$0xf]
        %v307 = vld [vmem:[%s264 + $0x18] sm:$0xf]
        %v308 = vld [vmem:[%s264 + $0x1c] sm:$0xf]
        %v317 = vunpack.c.l.b16 %v301
        %v318 = vunpack.c.l.b16 %v302
        %v319 = vunpack.c.l.b16 %v303
        %v320 = vunpack.c.l.b16 %v304
        %v321 = vunpack.c.l.b16 %v305
        %v322 = vunpack.c.l.b16 %v306
        %v323 = vunpack.c.l.b16 %v307
        %v324 = vunpack.c.l.b16 %v308
        %v325 = vpack.c.b16 %v318, %v317
        %v326 = vpack.c.b16 %v320, %v319
        %v327 = vpack.c.b16 %v322, %v321
        %v328 = vpack.c.b16 %v324, %v323
        %vm329 = vcmask 130048
        %v331 = vsel %vm329, %v325, 0
        %v334 = vsel %vm329, %v326, 0
        %v337 = vsel %vm329, %v327, 0
        %v340 = vsel %vm329, %v328, 0
        %342 = vmatprep.subr.bf16.mxu0 %v300
        %343 = vmatpush1.bf16.msra.mxu0 %v299
        %344 = vmatprep.subr.bf16.mxu0 0
        %345 = vmatpush1.bf16.msra.mxu0 0
        %346 = vmatprep.subr.bf16.mxu0 0
        %347 = vmatpush1.bf16.msra.mxu0 0
        %348 = vmatprep.subr.bf16.mxu0 0
        %349 = vmatpush1.bf16.msra.mxu0 0
        %350 = vmatprep.subr.bf16.mxu0 0
        %351 = vmatpush1.bf16.msra.mxu0 0
        %352 = vmatprep.subr.bf16.mxu0 0
        %353 = vmatpush1.bf16.msra.mxu0 0
        %354 = vmatprep.subr.bf16.mxu0 0
        %355 = vmatpush1.bf16.msra.mxu0 0
        %356 = vmatprep.subr.bf16.mxu0 0
        %357 = vmatpush1.bf16.msra.mxu0 0
        %358 = vmatprep.subr.bf16.mxu0 0
        %359 = vmatpush1.bf16.msra.mxu0 0
        %360 = vmatprep.subr.bf16.mxu0 0
        %361 = vmatpush1.bf16.msra.mxu0 0
        %362 = vmatprep.subr.bf16.mxu0 0
        %363 = vmatpush1.bf16.msra.mxu0 0
        %364 = vmatprep.subr.bf16.mxu0 0
        %365 = vmatpush1.bf16.msra.mxu0 0
        %366 = vmatprep.subr.bf16.mxu0 0
        %367 = vmatpush1.bf16.msra.mxu0 0
        %368 = vmatprep.subr.bf16.mxu0 0
        %369 = vmatpush1.bf16.msra.mxu0 0
        %370 = vmatprep.subr.bf16.mxu0 0
        %371 = vmatpush1.bf16.msra.mxu0 0
        %372 = vmatprep.subr.bf16.mxu0 0
        %373 = vmatpush1.bf16.msra.mxu0 0
        %374 = vmatprep.mubr.bf16.mxu0 0
        %375 = vmatmul.mubr.bf16.gmra.mrb[0].mxu0 %v331
        %v376 = vpop.f32.mrb[0].mxu0
        %v377 = vadd.f32 0.0, %v376
        %v378 = vpop.f32.mrb[0].mxu0
        %v379 = vadd.f32 0.0, %v378
        %v380 = vpop.f32.mrb[0].mxu0
        %v381 = vadd.f32 0.0, %v380
        %v382 = vpop.f32.mrb[0].mxu0
        %v383 = vadd.f32 0.0, %v382
        %384 = vmatprep.mubr.bf16.mxu0 0
        %385 = vmatmul.mubr.bf16.gmra.mrb[0].mxu0 %v334
        %v386 = vpop.f32.mrb[0].mxu0
        %v387 = vadd.f32 0.0, %v386
        %v388 = vpop.f32.mrb[0].mxu0
        %v389 = vadd.f32 0.0, %v388
        %v390 = vpop.f32.mrb[0].mxu0
        %v391 = vadd.f32 0.0, %v390
        %v392 = vpop.f32.mrb[0].mxu0
        %v393 = vadd.f32 0.0, %v392
        %394 = vmatprep.mubr.bf16.mxu0 0
        %395 = vmatmul.mubr.bf16.gmra.mrb[0].mxu0 %v337
        %v396 = vpop.f32.mrb[0].mxu0
        %v397 = vadd.f32 0.0, %v396
        %v398 = vpop.f32.mrb[0].mxu0
        %v399 = vadd.f32 0.0, %v398
        %v400 = vpop.f32.mrb[0].mxu0
        %v401 = vadd.f32 0.0, %v400
        %v402 = vpop.f32.mrb[0].mxu0
        %v403 = vadd.f32 0.0, %v402
        %404 = vmatprep.mubr.bf16.mxu0 0
        %405 = vmatmul.mubr.bf16.gmra.mrb[0].mxu0 %v340
        %v406 = vpop.f32.mrb[0].mxu0
        %v407 = vadd.f32 0.0, %v406
        %v408 = vpop.f32.mrb[0].mxu0
        %v409 = vadd.f32 0.0, %v408
        %v410 = vpop.f32.mrb[0].mxu0
        %v411 = vadd.f32 0.0, %v410
        %v412 = vpop.f32.mrb[0].mxu0
        %v413 = vadd.f32 0.0, %v412
        %414 = vdwg.mxu0
        %v415 = vpack.c.bf16 %v381, %v377
        %v416 = vpack.c.bf16 %v383, %v379
        %v417 = vpack.c.bf16 %v391, %v387
        %v418 = vpack.c.bf16 %v393, %v389
        %v419 = vpack.c.bf16 %v401, %v397
        %v420 = vpack.c.bf16 %v403, %v399
        %v421 = vpack.c.bf16 %v411, %v407
        %v422 = vpack.c.bf16 %v413, %v409
        %423 = vst [vmem:[#allocation2] sm:$0xff] %v415
        %vm424 = vcmask 326656
        %425 = vst.msk [vmem:[#allocation2 + $0x8] sm:$0xff] %vm424, %v416
        %426 = vst [vmem:[#allocation2 + $0x10] sm:$0xff] %v417
        %427 = vst.msk [vmem:[#allocation2 + $0x18] sm:$0xff] %vm424, %v418
        %428 = vst [vmem:[#allocation2 + $0x20] sm:$0xff] %v419
        %429 = vst.msk [vmem:[#allocation2 + $0x28] sm:$0xff] %vm424, %v420
        %430 = vst [vmem:[#allocation2 + $0x30] sm:$0xff] %v421
        %431 = vst.msk [vmem:[#allocation2 + $0x38] sm:$0xff] %vm424, %v422
        %v432 = vld [vmem:[%s269] sm:$0xff]
        %v433 = vld [vmem:[%s269 + $0x8] sm:$0xff]
        %v434 = vld [vmem:[%s269 + $0x10] sm:$0xff]
        %v435 = vld [vmem:[%s269 + $0x18] sm:$0xff]
        %v436 = vld [vmem:[%s269 + $0x20] sm:$0xff]
        %v437 = vld [vmem:[%s269 + $0x28] sm:$0xff]
        %v438 = vld [vmem:[%s269 + $0x30] sm:$0xff]
        %v439 = vld [vmem:[%s269 + $0x38] sm:$0xff]
        %v448 = vunpack.c.l.b16 %v432
        %v449 = vunpack.c.h.b16 %v432
        %v450 = vunpack.c.l.b16 %v433
        %v451 = vunpack.c.h.b16 %v433
        %v452 = vunpack.c.l.b16 %v434
        %v453 = vunpack.c.h.b16 %v434
        %v454 = vunpack.c.l.b16 %v435
        %v455 = vunpack.c.h.b16 %v435
        %v456 = vunpack.c.l.b16 %v436
        %v457 = vunpack.c.h.b16 %v436
        %v458 = vunpack.c.l.b16 %v437
        %v459 = vunpack.c.h.b16 %v437
        %v460 = vunpack.c.l.b16 %v438
        %v461 = vunpack.c.h.b16 %v438
        %v462 = vunpack.c.l.b16 %v439
        %v463 = vunpack.c.h.b16 %v439
        %v464 = vpack.c.b16 %v450, %v448
        %v465 = vpack.c.b16 %v451, %v449
        %v466 = vpack.c.b16 %v454, %v452
        %v467 = vpack.c.b16 %v455, %v453
        %v468 = vpack.c.b16 %v458, %v456
        %v469 = vpack.c.b16 %v459, %v457
        %v470 = vpack.c.b16 %v462, %v460
        %v471 = vpack.c.b16 %v463, %v461
        %480 = vst [vmem:[#allocation2 + $0x40] sm:$0xff] %v464
        %481 = vst.msk [vmem:[#allocation2 + $0x48] sm:$0xff] %vm424, %v465
        %482 = vst [vmem:[#allocation2 + $0x50] sm:$0xff] %v466
        %483 = vst.msk [vmem:[#allocation2 + $0x58] sm:$0xff] %vm424, %v467
        %484 = vst [vmem:[#allocation2 + $0x60] sm:$0xff] %v468
        %485 = vst.msk [vmem:[#allocation2 + $0x68] sm:$0xff] %vm424, %v469
        %486 = vst [vmem:[#allocation2 + $0x70] sm:$0xff] %v470
        %487 = vst.msk [vmem:[#allocation2 + $0x78] sm:$0xff] %vm424, %v471
        %v488 = vld [vmem:[#allocation2] sm:$0xff]
        %v489 = vld [vmem:[#allocation2 + $0x8] sm:$0xff]
        %v490 = vld [vmem:[#allocation2 + $0x10] sm:$0xff]
        %v491 = vld [vmem:[#allocation2 + $0x18] sm:$0xff]
        %v492 = vld [vmem:[#allocation2 + $0x20] sm:$0xff]
        %v493 = vld [vmem:[#allocation2 + $0x28] sm:$0xff]
        %v494 = vld [vmem:[#allocation2 + $0x30] sm:$0xff]
        %v495 = vld [vmem:[#allocation2 + $0x38] sm:$0xff]
        %v496 = vld [vmem:[#allocation2 + $0x40] sm:$0xff]
        %v497 = vld [vmem:[#allocation2 + $0x48] sm:$0xff]
        %v498 = vld [vmem:[#allocation2 + $0x50] sm:$0xff]
        %v499 = vld [vmem:[#allocation2 + $0x58] sm:$0xff]
        %v500 = vld [vmem:[#allocation2 + $0x60] sm:$0xff]
        %v501 = vld [vmem:[#allocation2 + $0x68] sm:$0xff]
        %v502 = vld [vmem:[#allocation2 + $0x70] sm:$0xff]
        %v503 = vld [vmem:[#allocation2 + $0x78] sm:$0xff]
        %504 = vst [vmem:[#allocation3] sm:$0xff] %v488
        %vm505 = vcmask 252928
        %506 = vst.msk [vmem:[#allocation3 + $0x8] sm:$0xff] %vm505, %v489
        %507 = vst [vmem:[#allocation3 + $0x10] sm:$0xff] %v490
        %508 = vst.msk [vmem:[#allocation3 + $0x18] sm:$0xff] %vm505, %v491
        %509 = vst [vmem:[#allocation3 + $0x20] sm:$0xff] %v492
        %510 = vst.msk [vmem:[#allocation3 + $0x28] sm:$0xff] %vm505, %v493
        %511 = vst [vmem:[#allocation3 + $0x30] sm:$0xff] %v494
        %512 = vst.msk [vmem:[#allocation3 + $0x38] sm:$0xff] %vm505, %v495
        %513 = vst [vmem:[#allocation3 + $0x40] sm:$0xff] %v496
        %514 = vst.msk [vmem:[#allocation3 + $0x48] sm:$0xff] %vm505, %v497
        %515 = vst [vmem:[#allocation3 + $0x50] sm:$0xff] %v498
        %516 = vst.msk [vmem:[#allocation3 + $0x58] sm:$0xff] %vm505, %v499
        %517 = vst [vmem:[#allocation3 + $0x60] sm:$0xff] %v500
        %518 = vst.msk [vmem:[#allocation3 + $0x68] sm:$0xff] %vm505, %v501
        %519 = vst [vmem:[#allocation3 + $0x70] sm:$0xff] %v502
        %520 = vst.msk [vmem:[#allocation3 + $0x78] sm:$0xff] %vm505, %v503
        %537 = vrot.lane.b32.xlu0 %v488, 127
        %v538 = vpop.permute.xlu0 %537
        %539 = vrot.lane.b32.xlu0 %v489, 127
        %v540 = vpop.permute.xlu0 %539
        %541 = vrot.lane.b32.xlu0 %v490, 127
        %v542 = vpop.permute.xlu0 %541
        %543 = vrot.lane.b32.xlu0 %v491, 127
        %v544 = vpop.permute.xlu0 %543
        %545 = vrot.lane.b32.xlu0 %v492, 127
        %v546 = vpop.permute.xlu0 %545
        %547 = vrot.lane.b32.xlu0 %v493, 127
        %v548 = vpop.permute.xlu0 %547
        %549 = vrot.lane.b32.xlu0 %v494, 127
        %v550 = vpop.permute.xlu0 %549
        %551 = vrot.lane.b32.xlu0 %v495, 127
        %v552 = vpop.permute.xlu0 %551
        %553 = vrot.lane.b32.xlu0 %v496, 127
        %v554 = vpop.permute.xlu0 %553
        %555 = vrot.lane.b32.xlu0 %v497, 127
        %v556 = vpop.permute.xlu0 %555
        %557 = vrot.lane.b32.xlu0 %v498, 127
        %v558 = vpop.permute.xlu0 %557
        %559 = vrot.lane.b32.xlu0 %v499, 127
        %v560 = vpop.permute.xlu0 %559
        %561 = vrot.lane.b32.xlu0 %v500, 127
        %v562 = vpop.permute.xlu0 %561
        %563 = vrot.lane.b32.xlu0 %v501, 127
        %v564 = vpop.permute.xlu0 %563
        %565 = vrot.lane.b32.xlu0 %v502, 127
        %v566 = vpop.permute.xlu0 %565
        %567 = vrot.lane.b32.xlu0 %v503, 127
        %v568 = vpop.permute.xlu0 %567
        %vm569 = vcmask 1039360
        %v570 = vsel %vm569, %v538, %v540
        %v571 = vsel %vm569, %v542, %v544
        %v572 = vsel %vm569, %v546, %v548
        %v573 = vsel %vm569, %v550, %v552
        %v574 = vsel %vm569, %v554, %v556
        %v575 = vsel %vm569, %v558, %v560
        %v576 = vsel %vm569, %v562, %v564
        %v577 = vsel %vm569, %v566, %v568
        %594 = vst [vmem:[#allocation3 + $0x80] sm:$0xff] %v570
        %595 = vst.msk [vmem:[#allocation3 + $0x88] sm:$0xff] %vm505, %v540
        %596 = vst [vmem:[#allocation3 + $0x90] sm:$0xff] %v571
        %597 = vst.msk [vmem:[#allocation3 + $0x98] sm:$0xff] %vm505, %v544
        %598 = vst [vmem:[#allocation3 + $0xa0] sm:$0xff] %v572
        %599 = vst.msk [vmem:[#allocation3 + $0xa8] sm:$0xff] %vm505, %v548
        %600 = vst [vmem:[#allocation3 + $0xb0] sm:$0xff] %v573
        %601 = vst.msk [vmem:[#allocation3 + $0xb8] sm:$0xff] %vm505, %v552
        %602 = vst [vmem:[#allocation3 + $0xc0] sm:$0xff] %v574
        %603 = vst.msk [vmem:[#allocation3 + $0xc8] sm:$0xff] %vm505, %v556
        %604 = vst [vmem:[#allocation3 + $0xd0] sm:$0xff] %v575
        %605 = vst.msk [vmem:[#allocation3 + $0xd8] sm:$0xff] %vm505, %v560
        %606 = vst [vmem:[#allocation3 + $0xe0] sm:$0xff] %v576
        %607 = vst.msk [vmem:[#allocation3 + $0xe8] sm:$0xff] %vm505, %v564
        %608 = vst [vmem:[#allocation3 + $0xf0] sm:$0xff] %v577
        %609 = vst.msk [vmem:[#allocation3 + $0xf8] sm:$0xff] %vm505, %v568
        %610 = vrot.lane.b32.xlu0 %v488, 126
        %v611 = vpop.permute.xlu0 %610
        %612 = vrot.lane.b32.xlu0 %v489, 126
        %v613 = vpop.permute.xlu0 %612
        %614 = vrot.lane.b32.xlu0 %v490, 126
        %v615 = vpop.permute.xlu0 %614
        %616 = vrot.lane.b32.xlu0 %v491, 126
        %v617 = vpop.permute.xlu0 %616
        %618 = vrot.lane.b32.xlu0 %v492, 126
        %v619 = vpop.permute.xlu0 %618
        %620 = vrot.lane.b32.xlu0 %v493, 126
        %v621 = vpop.permute.xlu0 %620
        %622 = vrot.lane.b32.xlu0 %v494, 126
        %v623 = vpop.permute.xlu0 %622
        %624 = vrot.lane.b32.xlu0 %v495, 126
        %v625 = vpop.permute.xlu0 %624
        %626 = vrot.lane.b32.xlu0 %v496, 126
        %v627 = vpop.permute.xlu0 %626
        %628 = vrot.lane.b32.xlu0 %v497, 126
        %v629 = vpop.permute.xlu0 %628
        %630 = vrot.lane.b32.xlu0 %v498, 126
        %v631 = vpop.permute.xlu0 %630
        %632 = vrot.lane.b32.xlu0 %v499, 126
        %v633 = vpop.permute.xlu0 %632
        %634 = vrot.lane.b32.xlu0 %v500, 126
        %v635 = vpop.permute.xlu0 %634
        %636 = vrot.lane.b32.xlu0 %v501, 126
        %v637 = vpop.permute.xlu0 %636
        %638 = vrot.lane.b32.xlu0 %v502, 126
        %v639 = vpop.permute.xlu0 %638
        %640 = vrot.lane.b32.xlu0 %v503, 126
        %v641 = vpop.permute.xlu0 %640
        %vm642 = vcmask 1031168
        %v643 = vsel %vm642, %v611, %v613
        %v644 = vsel %vm642, %v615, %v617
        %v645 = vsel %vm642, %v619, %v621
        %v646 = vsel %vm642, %v623, %v625
        %v647 = vsel %vm642, %v627, %v629
        %v648 = vsel %vm642, %v631, %v633
        %v649 = vsel %vm642, %v635, %v637
        %v650 = vsel %vm642, %v639, %v641
        %667 = vst [vmem:[#allocation3 + $0x100] sm:$0xff] %v643
        %668 = vst.msk [vmem:[#allocation3 + $0x108] sm:$0xff] %vm505, %v613
        %669 = vst [vmem:[#allocation3 + $0x110] sm:$0xff] %v644
        %670 = vst.msk [vmem:[#allocation3 + $0x118] sm:$0xff] %vm505, %v617
        %671 = vst [vmem:[#allocation3 + $0x120] sm:$0xff] %v645
        %672 = vst.msk [vmem:[#allocation3 + $0x128] sm:$0xff] %vm505, %v621
        %673 = vst [vmem:[#allocation3 + $0x130] sm:$0xff] %v646
        %674 = vst.msk [vmem:[#allocation3 + $0x138] sm:$0xff] %vm505, %v625
        %675 = vst [vmem:[#allocation3 + $0x140] sm:$0xff] %v647
        %676 = vst.msk [vmem:[#allocation3 + $0x148] sm:$0xff] %vm505, %v629
        %677 = vst [vmem:[#allocation3 + $0x150] sm:$0xff] %v648
        %678 = vst.msk [vmem:[#allocation3 + $0x158] sm:$0xff] %vm505, %v633
        %679 = vst [vmem:[#allocation3 + $0x160] sm:$0xff] %v649
        %680 = vst.msk [vmem:[#allocation3 + $0x168] sm:$0xff] %vm505, %v637
        %681 = vst [vmem:[#allocation3 + $0x170] sm:$0xff] %v650
        %682 = vst.msk [vmem:[#allocation3 + $0x178] sm:$0xff] %vm505, %v641
        %683 = vrot.lane.b32.xlu0 %v488, 125
        %v684 = vpop.permute.xlu0 %683
        %685 = vrot.lane.b32.xlu0 %v489, 125
        %v686 = vpop.permute.xlu0 %685
        %687 = vrot.lane.b32.xlu0 %v490, 125
        %v688 = vpop.permute.xlu0 %687
        %689 = vrot.lane.b32.xlu0 %v491, 125
        %v690 = vpop.permute.xlu0 %689
        %691 = vrot.lane.b32.xlu0 %v492, 125
        %v692 = vpop.permute.xlu0 %691
        %693 = vrot.lane.b32.xlu0 %v493, 125
        %v694 = vpop.permute.xlu0 %693
        %695 = vrot.lane.b32.xlu0 %v494, 125
        %v696 = vpop.permute.xlu0 %695
        %697 = vrot.lane.b32.xlu0 %v495, 125
        %v698 = vpop.permute.xlu0 %697
        %699 = vrot.lane.b32.xlu0 %v496, 125
        %v700 = vpop.permute.xlu0 %699
        %701 = vrot.lane.b32.xlu0 %v497, 125
        %v702 = vpop.permute.xlu0 %701
        %703 = vrot.lane.b32.xlu0 %v498, 125
        %v704 = vpop.permute.xlu0 %703
        %705 = vrot.lane.b32.xlu0 %v499, 125
        %v706 = vpop.permute.xlu0 %705
        %707 = vrot.lane.b32.xlu0 %v500, 125
        %v708 = vpop.permute.xlu0 %707
        %709 = vrot.lane.b32.xlu0 %v501, 125
        %v710 = vpop.permute.xlu0 %709
        %711 = vrot.lane.b32.xlu0 %v502, 125
        %v712 = vpop.permute.xlu0 %711
        %713 = vrot.lane.b32.xlu0 %v503, 125
        %v714 = vpop.permute.xlu0 %713
        %vm715 = vcmask 1022976
        %v716 = vsel %vm715, %v684, %v686
        %v717 = vsel %vm715, %v688, %v690
        %v718 = vsel %vm715, %v692, %v694
        %v719 = vsel %vm715, %v696, %v698
        %v720 = vsel %vm715, %v700, %v702
        %v721 = vsel %vm715, %v704, %v706
        %v722 = vsel %vm715, %v708, %v710
        %v723 = vsel %vm715, %v712, %v714
        %740 = vst [vmem:[#allocation3 + $0x180] sm:$0xff] %v716
        %741 = vst.msk [vmem:[#allocation3 + $0x188] sm:$0xff] %vm505, %v686
        %742 = vst [vmem:[#allocation3 + $0x190] sm:$0xff] %v717
        %743 = vst.msk [vmem:[#allocation3 + $0x198] sm:$0xff] %vm505, %v690
        %744 = vst [vmem:[#allocation3 + $0x1a0] sm:$0xff] %v718
        %745 = vst.msk [vmem:[#allocation3 + $0x1a8] sm:$0xff] %vm505, %v694
        %746 = vst [vmem:[#allocation3 + $0x1b0] sm:$0xff] %v719
        %747 = vst.msk [vmem:[#allocation3 + $0x1b8] sm:$0xff] %vm505, %v698
        %748 = vst [vmem:[#allocation3 + $0x1c0] sm:$0xff] %v720
        %749 = vst.msk [vmem:[#allocation3 + $0x1c8] sm:$0xff] %vm505, %v702
        %750 = vst [vmem:[#allocation3 + $0x1d0] sm:$0xff] %v721
        %751 = vst.msk [vmem:[#allocation3 + $0x1d8] sm:$0xff] %vm505, %v706
        %752 = vst [vmem:[#allocation3 + $0x1e0] sm:$0xff] %v722
        %753 = vst.msk [vmem:[#allocation3 + $0x1e8] sm:$0xff] %vm505, %v710
        %754 = vst [vmem:[#allocation3 + $0x1f0] sm:$0xff] %v723
        %755 = vst.msk [vmem:[#allocation3 + $0x1f8] sm:$0xff] %vm505, %v714
        %756 = vrot.lane.b32.xlu0 %v488, 124
        %v757 = vpop.permute.xlu0 %756
        %758 = vrot.lane.b32.xlu0 %v489, 124
        %v759 = vpop.permute.xlu0 %758
        %760 = vrot.lane.b32.xlu0 %v490, 124
        %v761 = vpop.permute.xlu0 %760
        %762 = vrot.lane.b32.xlu0 %v491, 124
        %v763 = vpop.permute.xlu0 %762
        %764 = vrot.lane.b32.xlu0 %v492, 124
        %v765 = vpop.permute.xlu0 %764
        %766 = vrot.lane.b32.xlu0 %v493, 124
        %v767 = vpop.permute.xlu0 %766
        %768 = vrot.lane.b32.xlu0 %v494, 124
        %v769 = vpop.permute.xlu0 %768
        %770 = vrot.lane.b32.xlu0 %v495, 124
        %v771 = vpop.permute.xlu0 %770
        %772 = vrot.lane.b32.xlu0 %v496, 124
        %v773 = vpop.permute.xlu0 %772
        %774 = vrot.lane.b32.xlu0 %v497, 124
        %v775 = vpop.permute.xlu0 %774
        %776 = vrot.lane.b32.xlu0 %v498, 124
        %v777 = vpop.permute.xlu0 %776
        %778 = vrot.lane.b32.xlu0 %v499, 124
        %v779 = vpop.permute.xlu0 %778
        %780 = vrot.lane.b32.xlu0 %v500, 124
        %v781 = vpop.permute.xlu0 %780
        %782 = vrot.lane.b32.xlu0 %v501, 124
        %v783 = vpop.permute.xlu0 %782
        %784 = vrot.lane.b32.xlu0 %v502, 124
        %v785 = vpop.permute.xlu0 %784
        %786 = vrot.lane.b32.xlu0 %v503, 124
        %v787 = vpop.permute.xlu0 %786
        %vm788 = vcmask 1014784
        %v789 = vsel %vm788, %v757, %v759
        %v790 = vsel %vm788, %v761, %v763
        %v791 = vsel %vm788, %v765, %v767
        %v792 = vsel %vm788, %v769, %v771
        %v793 = vsel %vm788, %v773, %v775
        %v794 = vsel %vm788, %v777, %v779
        %v795 = vsel %vm788, %v781, %v783
        %v796 = vsel %vm788, %v785, %v787
        %813 = vst [vmem:[#allocation3 + $0x200] sm:$0xff] %v789
        %814 = vst.msk [vmem:[#allocation3 + $0x208] sm:$0xff] %vm505, %v759
        %815 = vst [vmem:[#allocation3 + $0x210] sm:$0xff] %v790
        %816 = vst.msk [vmem:[#allocation3 + $0x218] sm:$0xff] %vm505, %v763
        %817 = vst [vmem:[#allocation3 + $0x220] sm:$0xff] %v791
        %818 = vst.msk [vmem:[#allocation3 + $0x228] sm:$0xff] %vm505, %v767
        %819 = vst [vmem:[#allocation3 + $0x230] sm:$0xff] %v792
        %820 = vst.msk [vmem:[#allocation3 + $0x238] sm:$0xff] %vm505, %v771
        %821 = vst [vmem:[#allocation3 + $0x240] sm:$0xff] %v793
        %822 = vst.msk [vmem:[#allocation3 + $0x248] sm:$0xff] %vm505, %v775
        %823 = vst [vmem:[#allocation3 + $0x250] sm:$0xff] %v794
        %824 = vst.msk [vmem:[#allocation3 + $0x258] sm:$0xff] %vm505, %v779
        %825 = vst [vmem:[#allocation3 + $0x260] sm:$0xff] %v795
        %826 = vst.msk [vmem:[#allocation3 + $0x268] sm:$0xff] %vm505, %v783
        %827 = vst [vmem:[#allocation3 + $0x270] sm:$0xff] %v796
        %828 = vst.msk [vmem:[#allocation3 + $0x278] sm:$0xff] %vm505, %v787
        %829 = vrot.lane.b32.xlu0 %v488, 123
        %v830 = vpop.permute.xlu0 %829
        %831 = vrot.lane.b32.xlu0 %v489, 123
        %v832 = vpop.permute.xlu0 %831
        %833 = vrot.lane.b32.xlu0 %v490, 123
        %v834 = vpop.permute.xlu0 %833
        %835 = vrot.lane.b32.xlu0 %v491, 123
        %v836 = vpop.permute.xlu0 %835
        %837 = vrot.lane.b32.xlu0 %v492, 123
        %v838 = vpop.permute.xlu0 %837
        %839 = vrot.lane.b32.xlu0 %v493, 123
        %v840 = vpop.permute.xlu0 %839
        %841 = vrot.lane.b32.xlu0 %v494, 123
        %v842 = vpop.permute.xlu0 %841
        %843 = vrot.lane.b32.xlu0 %v495, 123
        %v844 = vpop.permute.xlu0 %843
        %845 = vrot.lane.b32.xlu0 %v496, 123
        %v846 = vpop.permute.xlu0 %845
        %847 = vrot.lane.b32.xlu0 %v497, 123
        %v848 = vpop.permute.xlu0 %847
        %849 = vrot.lane.b32.xlu0 %v498, 123
        %v850 = vpop.permute.xlu0 %849
        %851 = vrot.lane.b32.xlu0 %v499, 123
        %v852 = vpop.permute.xlu0 %851
        %853 = vrot.lane.b32.xlu0 %v500, 123
        %v854 = vpop.permute.xlu0 %853
        %855 = vrot.lane.b32.xlu0 %v501, 123
        %v856 = vpop.permute.xlu0 %855
        %857 = vrot.lane.b32.xlu0 %v502, 123
        %v858 = vpop.permute.xlu0 %857
        %859 = vrot.lane.b32.xlu0 %v503, 123
        %v860 = vpop.permute.xlu0 %859
        %vm861 = vcmask 1006592
        %v862 = vsel %vm861, %v830, %v832
        %v863 = vsel %vm861, %v834, %v836
        %v864 = vsel %vm861, %v838, %v840
        %v865 = vsel %vm861, %v842, %v844
        %v866 = vsel %vm861, %v846, %v848
        %v867 = vsel %vm861, %v850, %v852
        %v868 = vsel %vm861, %v854, %v856
        %v869 = vsel %vm861, %v858, %v860
        %886 = vst [vmem:[#allocation3 + $0x280] sm:$0xff] %v862
        %887 = vst.msk [vmem:[#allocation3 + $0x288] sm:$0xff] %vm505, %v832
        %888 = vst [vmem:[#allocation3 + $0x290] sm:$0xff] %v863
        %889 = vst.msk [vmem:[#allocation3 + $0x298] sm:$0xff] %vm505, %v836
        %890 = vst [vmem:[#allocation3 + $0x2a0] sm:$0xff] %v864
        %891 = vst.msk [vmem:[#allocation3 + $0x2a8] sm:$0xff] %vm505, %v840
        %892 = vst [vmem:[#allocation3 + $0x2b0] sm:$0xff] %v865
        %893 = vst.msk [vmem:[#allocation3 + $0x2b8] sm:$0xff] %vm505, %v844
        %894 = vst [vmem:[#allocation3 + $0x2c0] sm:$0xff] %v866
        %895 = vst.msk [vmem:[#allocation3 + $0x2c8] sm:$0xff] %vm505, %v848
        %896 = vst [vmem:[#allocation3 + $0x2d0] sm:$0xff] %v867
        %897 = vst.msk [vmem:[#allocation3 + $0x2d8] sm:$0xff] %vm505, %v852
        %898 = vst [vmem:[#allocation3 + $0x2e0] sm:$0xff] %v868
        %899 = vst.msk [vmem:[#allocation3 + $0x2e8] sm:$0xff] %vm505, %v856
        %900 = vst [vmem:[#allocation3 + $0x2f0] sm:$0xff] %v869
        %901 = vst.msk [vmem:[#allocation3 + $0x2f8] sm:$0xff] %vm505, %v860
        %902 = vrot.lane.b32.xlu0 %v488, 122
        %v903 = vpop.permute.xlu0 %902
        %904 = vrot.lane.b32.xlu0 %v489, 122
        %v905 = vpop.permute.xlu0 %904
        %906 = vrot.lane.b32.xlu0 %v490, 122
        %v907 = vpop.permute.xlu0 %906
        %908 = vrot.lane.b32.xlu0 %v491, 122
        %v909 = vpop.permute.xlu0 %908
        %910 = vrot.lane.b32.xlu0 %v492, 122
        %v911 = vpop.permute.xlu0 %910
        %912 = vrot.lane.b32.xlu0 %v493, 122
        %v913 = vpop.permute.xlu0 %912
        %914 = vrot.lane.b32.xlu0 %v494, 122
        %v915 = vpop.permute.xlu0 %914
        %916 = vrot.lane.b32.xlu0 %v495, 122
        %v917 = vpop.permute.xlu0 %916
        %918 = vrot.lane.b32.xlu0 %v496, 122
        %v919 = vpop.permute.xlu0 %918
        %920 = vrot.lane.b32.xlu0 %v497, 122
        %v921 = vpop.permute.xlu0 %920
        %922 = vrot.lane.b32.xlu0 %v498, 122
        %v923 = vpop.permute.xlu0 %922
        %924 = vrot.lane.b32.xlu0 %v499, 122
        %v925 = vpop.permute.xlu0 %924
        %926 = vrot.lane.b32.xlu0 %v500, 122
        %v927 = vpop.permute.xlu0 %926
        %928 = vrot.lane.b32.xlu0 %v501, 122
        %v929 = vpop.permute.xlu0 %928
        %930 = vrot.lane.b32.xlu0 %v502, 122
        %v931 = vpop.permute.xlu0 %930
        %932 = vrot.lane.b32.xlu0 %v503, 122
        %v933 = vpop.permute.xlu0 %932
        %vm934 = vcmask 998400
        %v935 = vsel %vm934, %v903, %v905
        %v936 = vsel %vm934, %v907, %v909
        %v937 = vsel %vm934, %v911, %v913
        %v938 = vsel %vm934, %v915, %v917
        %v939 = vsel %vm934, %v919, %v921
        %v940 = vsel %vm934, %v923, %v925
        %v941 = vsel %vm934, %v927, %v929
        %v942 = vsel %vm934, %v931, %v933
        %959 = vst [vmem:[#allocation3 + $0x300] sm:$0xff] %v935
        %960 = vst.msk [vmem:[#allocation3 + $0x308] sm:$0xff] %vm505, %v905
        %961 = vst [vmem:[#allocation3 + $0x310] sm:$0xff] %v936
        %962 = vst.msk [vmem:[#allocation3 + $0x318] sm:$0xff] %vm505, %v909
        %963 = vst [vmem:[#allocation3 + $0x320] sm:$0xff] %v937
        %964 = vst.msk [vmem:[#allocation3 + $0x328] sm:$0xff] %vm505, %v913
        %965 = vst [vmem:[#allocation3 + $0x330] sm:$0xff] %v938
        %966 = vst.msk [vmem:[#allocation3 + $0x338] sm:$0xff] %vm505, %v917
        %967 = vst [vmem:[#allocation3 + $0x340] sm:$0xff] %v939
        %968 = vst.msk [vmem:[#allocation3 + $0x348] sm:$0xff] %vm505, %v921
        %969 = vst [vmem:[#allocation3 + $0x350] sm:$0xff] %v940
        %970 = vst.msk [vmem:[#allocation3 + $0x358] sm:$0xff] %vm505, %v925
        %971 = vst [vmem:[#allocation3 + $0x360] sm:$0xff] %v941
        %972 = vst.msk [vmem:[#allocation3 + $0x368] sm:$0xff] %vm505, %v929
        %973 = vst [vmem:[#allocation3 + $0x370] sm:$0xff] %v942
        %974 = vst.msk [vmem:[#allocation3 + $0x378] sm:$0xff] %vm505, %v933
        %975 = vrot.lane.b32.xlu0 %v488, 121
        %v976 = vpop.permute.xlu0 %975
        %977 = vrot.lane.b32.xlu0 %v489, 121
        %v978 = vpop.permute.xlu0 %977
        %979 = vrot.lane.b32.xlu0 %v490, 121
        %v980 = vpop.permute.xlu0 %979
        %981 = vrot.lane.b32.xlu0 %v491, 121
        %v982 = vpop.permute.xlu0 %981
        %983 = vrot.lane.b32.xlu0 %v492, 121
        %v984 = vpop.permute.xlu0 %983
        %985 = vrot.lane.b32.xlu0 %v493, 121
        %v986 = vpop.permute.xlu0 %985
        %987 = vrot.lane.b32.xlu0 %v494, 121
        %v988 = vpop.permute.xlu0 %987
        %989 = vrot.lane.b32.xlu0 %v495, 121
        %v990 = vpop.permute.xlu0 %989
        %991 = vrot.lane.b32.xlu0 %v496, 121
        %v992 = vpop.permute.xlu0 %991
        %993 = vrot.lane.b32.xlu0 %v497, 121
        %v994 = vpop.permute.xlu0 %993
        %995 = vrot.lane.b32.xlu0 %v498, 121
        %v996 = vpop.permute.xlu0 %995
        %997 = vrot.lane.b32.xlu0 %v499, 121
        %v998 = vpop.permute.xlu0 %997
        %999 = vrot.lane.b32.xlu0 %v500, 121
        %v1000 = vpop.permute.xlu0 %999
        %1001 = vrot.lane.b32.xlu0 %v501, 121
        %v1002 = vpop.permute.xlu0 %1001
        %1003 = vrot.lane.b32.xlu0 %v502, 121
        %v1004 = vpop.permute.xlu0 %1003
        %1005 = vrot.lane.b32.xlu0 %v503, 121
        %v1006 = vpop.permute.xlu0 %1005
        %vm1007 = vcmask 990208
        %v1008 = vsel %vm1007, %v976, %v978
        %v1009 = vsel %vm1007, %v980, %v982
        %v1010 = vsel %vm1007, %v984, %v986
        %v1011 = vsel %vm1007, %v988, %v990
        %v1012 = vsel %vm1007, %v992, %v994
        %v1013 = vsel %vm1007, %v996, %v998
        %v1014 = vsel %vm1007, %v1000, %v1002
        %v1015 = vsel %vm1007, %v1004, %v1006
        %1032 = vst [vmem:[#allocation3 + $0x380] sm:$0xff] %v1008
        %1033 = vst.msk [vmem:[#allocation3 + $0x388] sm:$0xff] %vm505, %v978
        %1034 = vst [vmem:[#allocation3 + $0x390] sm:$0xff] %v1009
        %1035 = vst.msk [vmem:[#allocation3 + $0x398] sm:$0xff] %vm505, %v982
        %1036 = vst [vmem:[#allocation3 + $0x3a0] sm:$0xff] %v1010
        %1037 = vst.msk [vmem:[#allocation3 + $0x3a8] sm:$0xff] %vm505, %v986
        %1038 = vst [vmem:[#allocation3 + $0x3b0] sm:$0xff] %v1011
        %1039 = vst.msk [vmem:[#allocation3 + $0x3b8] sm:$0xff] %vm505, %v990
        %1040 = vst [vmem:[#allocation3 + $0x3c0] sm:$0xff] %v1012
        %1041 = vst.msk [vmem:[#allocation3 + $0x3c8] sm:$0xff] %vm505, %v994
        %1042 = vst [vmem:[#allocation3 + $0x3d0] sm:$0xff] %v1013
        %1043 = vst.msk [vmem:[#allocation3 + $0x3d8] sm:$0xff] %vm505, %v998
        %1044 = vst [vmem:[#allocation3 + $0x3e0] sm:$0xff] %v1014
        %1045 = vst.msk [vmem:[#allocation3 + $0x3e8] sm:$0xff] %vm505, %v1002
        %1046 = vst [vmem:[#allocation3 + $0x3f0] sm:$0xff] %v1015
        %1047 = vst.msk [vmem:[#allocation3 + $0x3f8] sm:$0xff] %vm505, %v1006
        %1048 = vrot.lane.b32.xlu0 %v488, 120
        %v1049 = vpop.permute.xlu0 %1048
        %1050 = vrot.lane.b32.xlu0 %v489, 120
        %v1051 = vpop.permute.xlu0 %1050
        %1052 = vrot.lane.b32.xlu0 %v490, 120
        %v1053 = vpop.permute.xlu0 %1052
        %1054 = vrot.lane.b32.xlu0 %v491, 120
        %v1055 = vpop.permute.xlu0 %1054
        %1056 = vrot.lane.b32.xlu0 %v492, 120
        %v1057 = vpop.permute.xlu0 %1056
        %1058 = vrot.lane.b32.xlu0 %v493, 120
        %v1059 = vpop.permute.xlu0 %1058
        %1060 = vrot.lane.b32.xlu0 %v494, 120
        %v1061 = vpop.permute.xlu0 %1060
        %1062 = vrot.lane.b32.xlu0 %v495, 120
        %v1063 = vpop.permute.xlu0 %1062
        %1064 = vrot.lane.b32.xlu0 %v496, 120
        %v1065 = vpop.permute.xlu0 %1064
        %1066 = vrot.lane.b32.xlu0 %v497, 120
        %v1067 = vpop.permute.xlu0 %1066
        %1068 = vrot.lane.b32.xlu0 %v498, 120
        %v1069 = vpop.permute.xlu0 %1068
        %1070 = vrot.lane.b32.xlu0 %v499, 120
        %v1071 = vpop.permute.xlu0 %1070
        %1072 = vrot.lane.b32.xlu0 %v500, 120
        %v1073 = vpop.permute.xlu0 %1072
        %1074 = vrot.lane.b32.xlu0 %v501, 120
        %v1075 = vpop.permute.xlu0 %1074
        %1076 = vrot.lane.b32.xlu0 %v502, 120
        %v1077 = vpop.permute.xlu0 %1076
        %1078 = vrot.lane.b32.xlu0 %v503, 120
        %v1079 = vpop.permute.xlu0 %1078
        %vm1080 = vcmask 982016
        %v1081 = vsel %vm1080, %v1049, %v1051
        %v1082 = vsel %vm1080, %v1053, %v1055
        %v1083 = vsel %vm1080, %v1057, %v1059
        %v1084 = vsel %vm1080, %v1061, %v1063
        %v1085 = vsel %vm1080, %v1065, %v1067
        %v1086 = vsel %vm1080, %v1069, %v1071
        %v1087 = vsel %vm1080, %v1073, %v1075
        %v1088 = vsel %vm1080, %v1077, %v1079
        %1105 = vst [vmem:[#allocation3 + $0x400] sm:$0xff] %v1081
        %1106 = vst.msk [vmem:[#allocation3 + $0x408] sm:$0xff] %vm505, %v1051
        %1107 = vst [vmem:[#allocation3 + $0x410] sm:$0xff] %v1082
        %1108 = vst.msk [vmem:[#allocation3 + $0x418] sm:$0xff] %vm505, %v1055
        %1109 = vst [vmem:[#allocation3 + $0x420] sm:$0xff] %v1083
        %1110 = vst.msk [vmem:[#allocation3 + $0x428] sm:$0xff] %vm505, %v1059
        %1111 = vst [vmem:[#allocation3 + $0x430] sm:$0xff] %v1084
        %1112 = vst.msk [vmem:[#allocation3 + $0x438] sm:$0xff] %vm505, %v1063
        %1113 = vst [vmem:[#allocation3 + $0x440] sm:$0xff] %v1085
        %1114 = vst.msk [vmem:[#allocation3 + $0x448] sm:$0xff] %vm505, %v1067
        %1115 = vst [vmem:[#allocation3 + $0x450] sm:$0xff] %v1086
        %1116 = vst.msk [vmem:[#allocation3 + $0x458] sm:$0xff] %vm505, %v1071
        %1117 = vst [vmem:[#allocation3 + $0x460] sm:$0xff] %v1087
        %1118 = vst.msk [vmem:[#allocation3 + $0x468] sm:$0xff] %vm505, %v1075
        %1119 = vst [vmem:[#allocation3 + $0x470] sm:$0xff] %v1088
        %1120 = vst.msk [vmem:[#allocation3 + $0x478] sm:$0xff] %vm505, %v1079
        %1121 = vrot.lane.b32.xlu0 %v488, 119
        %v1122 = vpop.permute.xlu0 %1121
        %1123 = vrot.lane.b32.xlu0 %v489, 119
        %v1124 = vpop.permute.xlu0 %1123
        %1125 = vrot.lane.b32.xlu0 %v490, 119
        %v1126 = vpop.permute.xlu0 %1125
        %1127 = vrot.lane.b32.xlu0 %v491, 119
        %v1128 = vpop.permute.xlu0 %1127
        %1129 = vrot.lane.b32.xlu0 %v492, 119
        %v1130 = vpop.permute.xlu0 %1129
        %1131 = vrot.lane.b32.xlu0 %v493, 119
        %v1132 = vpop.permute.xlu0 %1131
        %1133 = vrot.lane.b32.xlu0 %v494, 119
        %v1134 = vpop.permute.xlu0 %1133
        %1135 = vrot.lane.b32.xlu0 %v495, 119
        %v1136 = vpop.permute.xlu0 %1135
        %1137 = vrot.lane.b32.xlu0 %v496, 119
        %v1138 = vpop.permute.xlu0 %1137
        %1139 = vrot.lane.b32.xlu0 %v497, 119
        %v1140 = vpop.permute.xlu0 %1139
        %1141 = vrot.lane.b32.xlu0 %v498, 119
        %v1142 = vpop.permute.xlu0 %1141
        %1143 = vrot.lane.b32.xlu0 %v499, 119
        %v1144 = vpop.permute.xlu0 %1143
        %1145 = vrot.lane.b32.xlu0 %v500, 119
        %v1146 = vpop.permute.xlu0 %1145
        %1147 = vrot.lane.b32.xlu0 %v501, 119
        %v1148 = vpop.permute.xlu0 %1147
        %1149 = vrot.lane.b32.xlu0 %v502, 119
        %v1150 = vpop.permute.xlu0 %1149
        %1151 = vrot.lane.b32.xlu0 %v503, 119
        %v1152 = vpop.permute.xlu0 %1151
        %vm1153 = vcmask 973824
        %v1154 = vsel %vm1153, %v1122, %v1124
        %v1155 = vsel %vm1153, %v1126, %v1128
        %v1156 = vsel %vm1153, %v1130, %v1132
        %v1157 = vsel %vm1153, %v1134, %v1136
        %v1158 = vsel %vm1153, %v1138, %v1140
        %v1159 = vsel %vm1153, %v1142, %v1144
        %v1160 = vsel %vm1153, %v1146, %v1148
        %v1161 = vsel %vm1153, %v1150, %v1152
        %1178 = vst [vmem:[#allocation3 + $0x480] sm:$0xff] %v1154
        %1179 = vst.msk [vmem:[#allocation3 + $0x488] sm:$0xff] %vm505, %v1124
        %1180 = vst [vmem:[#allocation3 + $0x490] sm:$0xff] %v1155
        %1181 = vst.msk [vmem:[#allocation3 + $0x498] sm:$0xff] %vm505, %v1128
        %1182 = vst [vmem:[#allocation3 + $0x4a0] sm:$0xff] %v1156
        %1183 = vst.msk [vmem:[#allocation3 + $0x4a8] sm:$0xff] %vm505, %v1132
        %1184 = vst [vmem:[#allocation3 + $0x4b0] sm:$0xff] %v1157
        %1185 = vst.msk [vmem:[#allocation3 + $0x4b8] sm:$0xff] %vm505, %v1136
        %1186 = vst [vmem:[#allocation3 + $0x4c0] sm:$0xff] %v1158
        %1187 = vst.msk [vmem:[#allocation3 + $0x4c8] sm:$0xff] %vm505, %v1140
        %1188 = vst [vmem:[#allocation3 + $0x4d0] sm:$0xff] %v1159
        %1189 = vst.msk [vmem:[#allocation3 + $0x4d8] sm:$0xff] %vm505, %v1144
        %1190 = vst [vmem:[#allocation3 + $0x4e0] sm:$0xff] %v1160
        %1191 = vst.msk [vmem:[#allocation3 + $0x4e8] sm:$0xff] %vm505, %v1148
        %1192 = vst [vmem:[#allocation3 + $0x4f0] sm:$0xff] %v1161
        %1193 = vst.msk [vmem:[#allocation3 + $0x4f8] sm:$0xff] %vm505, %v1152
        %v1194 = vld [vmem:[%s2] sm:$0xff]
        %v1195 = vld [vmem:[%s2 + $0x8] sm:$0xff]
        %v1196 = vld [vmem:[%s2 + $0x10] sm:$0xff]
        %v1197 = vld [vmem:[%s2 + $0x18] sm:$0xff]
        %v1198 = vld [vmem:[%s2 + $0x20] sm:$0xff]
        %v1199 = vld [vmem:[%s2 + $0x28] sm:$0xff]
        %v1200 = vld [vmem:[%s2 + $0x30] sm:$0xff]
        %v1201 = vld [vmem:[%s2 + $0x38] sm:$0xff]
        %v1202 = vld [vmem:[%s2 + $0x40] sm:$0xff]
        %v1203 = vld [vmem:[%s2 + $0x48] sm:$0xff]
        %v1204 = vld [vmem:[%s2 + $0x50] sm:$0xff]
        %v1205 = vld [vmem:[%s2 + $0x58] sm:$0xff]
        %v1206 = vld [vmem:[%s2 + $0x60] sm:$0xff]
        %v1207 = vld [vmem:[%s2 + $0x68] sm:$0xff]
        %v1208 = vld [vmem:[%s2 + $0x70] sm:$0xff]
        %v1209 = vld [vmem:[%s2 + $0x78] sm:$0xff]
        %v1210 = vld [vmem:[%s2 + $0x80] sm:$0xff]
        %v1211 = vld [vmem:[%s2 + $0x88] sm:$0xff]
        %v1212 = vld [vmem:[%s2 + $0x90] sm:$0xff]
        %v1213 = vld [vmem:[%s2 + $0x98] sm:$0xff]
        %v1214 = vld [vmem:[%s2 + $0xa0] sm:$0xff]
        %v1215 = vld [vmem:[%s2 + $0xa8] sm:$0xff]
        %v1216 = vld [vmem:[%s2 + $0xb0] sm:$0xff]
        %v1217 = vld [vmem:[%s2 + $0xb8] sm:$0xff]
        %v1218 = vld [vmem:[%s2 + $0xc0] sm:$0xff]
        %v1219 = vld [vmem:[%s2 + $0xc8] sm:$0xff]
        %v1220 = vld [vmem:[%s2 + $0xd0] sm:$0xff]
        %v1221 = vld [vmem:[%s2 + $0xd8] sm:$0xff]
        %v1222 = vld [vmem:[%s2 + $0xe0] sm:$0xff]
        %v1223 = vld [vmem:[%s2 + $0xe8] sm:$0xff]
        %v1224 = vld [vmem:[%s2 + $0xf0] sm:$0xff]
        %v1225 = vld [vmem:[%s2 + $0xf8] sm:$0xff]
        %v1226 = vld [vmem:[%s2 + $0x100] sm:$0xff]
        %v1227 = vld [vmem:[%s2 + $0x108] sm:$0xff]
        %v1228 = vld [vmem:[%s2 + $0x110] sm:$0xff]
        %v1229 = vld [vmem:[%s2 + $0x118] sm:$0xff]
        %v1230 = vld [vmem:[%s2 + $0x120] sm:$0xff]
        %v1231 = vld [vmem:[%s2 + $0x128] sm:$0xff]
        %v1232 = vld [vmem:[%s2 + $0x130] sm:$0xff]
        %v1233 = vld [vmem:[%s2 + $0x138] sm:$0xff]
        %v1234 = vld [vmem:[#allocation3] sm:$0xff]
        %v1235 = vld [vmem:[#allocation3 + $0x8] sm:$0xff]
        %v1236 = vld [vmem:[#allocation3 + $0x10] sm:$0xff]
        %v1237 = vld [vmem:[#allocation3 + $0x18] sm:$0xff]
        %v1238 = vld [vmem:[#allocation3 + $0x20] sm:$0xff]
        %v1239 = vld [vmem:[#allocation3 + $0x28] sm:$0xff]
        %v1240 = vld [vmem:[#allocation3 + $0x30] sm:$0xff]
        %v1241 = vld [vmem:[#allocation3 + $0x38] sm:$0xff]
        %v1242 = vld [vmem:[#allocation3 + $0x40] sm:$0xff]
        %v1243 = vld [vmem:[#allocation3 + $0x48] sm:$0xff]
        %v1244 = vld [vmem:[#allocation3 + $0x50] sm:$0xff]
        %v1245 = vld [vmem:[#allocation3 + $0x58] sm:$0xff]
        %v1246 = vld [vmem:[#allocation3 + $0x60] sm:$0xff]
        %v1247 = vld [vmem:[#allocation3 + $0x68] sm:$0xff]
        %v1248 = vld [vmem:[#allocation3 + $0x70] sm:$0xff]
        %v1249 = vld [vmem:[#allocation3 + $0x78] sm:$0xff]
        %v1250 = vld [vmem:[#allocation3 + $0x80] sm:$0xff]
        %v1251 = vld [vmem:[#allocation3 + $0x88] sm:$0xff]
        %v1252 = vld [vmem:[#allocation3 + $0x90] sm:$0xff]
        %v1253 = vld [vmem:[#allocation3 + $0x98] sm:$0xff]
        %v1254 = vld [vmem:[#allocation3 + $0xa0] sm:$0xff]
        %v1255 = vld [vmem:[#allocation3 + $0xa8] sm:$0xff]
        %v1256 = vld [vmem:[#allocation3 + $0xb0] sm:$0xff]
        %v1257 = vld [vmem:[#allocation3 + $0xb8] sm:$0xff]
        %v1258 = vld [vmem:[#allocation3 + $0xc0] sm:$0xff]
        %v1259 = vld [vmem:[#allocation3 + $0xc8] sm:$0xff]
        %v1260 = vld [vmem:[#allocation3 + $0xd0] sm:$0xff]
        %v1261 = vld [vmem:[#allocation3 + $0xd8] sm:$0xff]
        %v1262 = vld [vmem:[#allocation3 + $0xe0] sm:$0xff]
        %v1263 = vld [vmem:[#allocation3 + $0xe8] sm:$0xff]
        %v1264 = vld [vmem:[#allocation3 + $0xf0] sm:$0xff]
        %v1265 = vld [vmem:[#allocation3 + $0xf8] sm:$0xff]
        %v1266 = vld [vmem:[#allocation3 + $0x100] sm:$0xff]
        %v1267 = vld [vmem:[#allocation3 + $0x108] sm:$0xff]
        %v1268 = vld [vmem:[#allocation3 + $0x110] sm:$0xff]
        %v1269 = vld [vmem:[#allocation3 + $0x118] sm:$0xff]
        %v1270 = vld [vmem:[#allocation3 + $0x120] sm:$0xff]
        %v1271 = vld [vmem:[#allocation3 + $0x128] sm:$0xff]
        %v1272 = vld [vmem:[#allocation3 + $0x130] sm:$0xff]
        %v1273 = vld [vmem:[#allocation3 + $0x138] sm:$0xff]
        %v1274 = vld [vmem:[#allocation3 + $0x140] sm:$0xff]
        %v1275 = vld [vmem:[#allocation3 + $0x148] sm:$0xff]
        %v1276 = vld [vmem:[#allocation3 + $0x150] sm:$0xff]
        %v1277 = vld [vmem:[#allocation3 + $0x158] sm:$0xff]
        %v1278 = vld [vmem:[#allocation3 + $0x160] sm:$0xff]
        %v1279 = vld [vmem:[#allocation3 + $0x168] sm:$0xff]
        %v1280 = vld [vmem:[#allocation3 + $0x170] sm:$0xff]
        %v1281 = vld [vmem:[#allocation3 + $0x178] sm:$0xff]
        %v1282 = vld [vmem:[#allocation3 + $0x180] sm:$0xff]
        %v1283 = vld [vmem:[#allocation3 + $0x188] sm:$0xff]
        %v1284 = vld [vmem:[#allocation3 + $0x190] sm:$0xff]
        %v1285 = vld [vmem:[#allocation3 + $0x198] sm:$0xff]
        %v1286 = vld [vmem:[#allocation3 + $0x1a0] sm:$0xff]
        %v1287 = vld [vmem:[#allocation3 + $0x1a8] sm:$0xff]
        %v1288 = vld [vmem:[#allocation3 + $0x1b0] sm:$0xff]
        %v1289 = vld [vmem:[#allocation3 + $0x1b8] sm:$0xff]
        %v1290 = vld [vmem:[#allocation3 + $0x1c0] sm:$0xff]
        %v1291 = vld [vmem:[#allocation3 + $0x1c8] sm:$0xff]
        %v1292 = vld [vmem:[#allocation3 + $0x1d0] sm:$0xff]
        %v1293 = vld [vmem:[#allocation3 + $0x1d8] sm:$0xff]
        %v1294 = vld [vmem:[#allocation3 + $0x1e0] sm:$0xff]
        %v1295 = vld [vmem:[#allocation3 + $0x1e8] sm:$0xff]
        %v1296 = vld [vmem:[#allocation3 + $0x1f0] sm:$0xff]
        %v1297 = vld [vmem:[#allocation3 + $0x1f8] sm:$0xff]
        %v1298 = vld [vmem:[#allocation3 + $0x200] sm:$0xff]
        %v1299 = vld [vmem:[#allocation3 + $0x208] sm:$0xff]
        %v1300 = vld [vmem:[#allocation3 + $0x210] sm:$0xff]
        %v1301 = vld [vmem:[#allocation3 + $0x218] sm:$0xff]
        %v1302 = vld [vmem:[#allocation3 + $0x220] sm:$0xff]
        %v1303 = vld [vmem:[#allocation3 + $0x228] sm:$0xff]
        %v1304 = vld [vmem:[#allocation3 + $0x230] sm:$0xff]
        %v1305 = vld [vmem:[#allocation3 + $0x238] sm:$0xff]
        %v1306 = vld [vmem:[#allocation3 + $0x240] sm:$0xff]
        %v1307 = vld [vmem:[#allocation3 + $0x248] sm:$0xff]
        %v1308 = vld [vmem:[#allocation3 + $0x250] sm:$0xff]
        %v1309 = vld [vmem:[#allocation3 + $0x258] sm:$0xff]
        %v1310 = vld [vmem:[#allocation3 + $0x260] sm:$0xff]
        %v1311 = vld [vmem:[#allocation3 + $0x268] sm:$0xff]
        %v1312 = vld [vmem:[#allocation3 + $0x270] sm:$0xff]
        %v1313 = vld [vmem:[#allocation3 + $0x278] sm:$0xff]
        %v1314 = vld [vmem:[#allocation3 + $0x280] sm:$0xff]
        %v1315 = vld [vmem:[#allocation3 + $0x288] sm:$0xff]
        %v1316 = vld [vmem:[#allocation3 + $0x290] sm:$0xff]
        %v1317 = vld [vmem:[#allocation3 + $0x298] sm:$0xff]
        %v1318 = vld [vmem:[#allocation3 + $0x2a0] sm:$0xff]
        %v1319 = vld [vmem:[#allocation3 + $0x2a8] sm:$0xff]
        %v1320 = vld [vmem:[#allocation3 + $0x2b0] sm:$0xff]
        %v1321 = vld [vmem:[#allocation3 + $0x2b8] sm:$0xff]
        %v1322 = vld [vmem:[#allocation3 + $0x2c0] sm:$0xff]
        %v1323 = vld [vmem:[#allocation3 + $0x2c8] sm:$0xff]
        %v1324 = vld [vmem:[#allocation3 + $0x2d0] sm:$0xff]
        %v1325 = vld [vmem:[#allocation3 + $0x2d8] sm:$0xff]
        %v1326 = vld [vmem:[#allocation3 + $0x2e0] sm:$0xff]
        %v1327 = vld [vmem:[#allocation3 + $0x2e8] sm:$0xff]
        %v1328 = vld [vmem:[#allocation3 + $0x2f0] sm:$0xff]
        %v1329 = vld [vmem:[#allocation3 + $0x2f8] sm:$0xff]
        %v1330 = vld [vmem:[#allocation3 + $0x300] sm:$0xff]
        %v1331 = vld [vmem:[#allocation3 + $0x308] sm:$0xff]
        %v1332 = vld [vmem:[#allocation3 + $0x310] sm:$0xff]
        %v1333 = vld [vmem:[#allocation3 + $0x318] sm:$0xff]
        %v1334 = vld [vmem:[#allocation3 + $0x320] sm:$0xff]
        %v1335 = vld [vmem:[#allocation3 + $0x328] sm:$0xff]
        %v1336 = vld [vmem:[#allocation3 + $0x330] sm:$0xff]
        %v1337 = vld [vmem:[#allocation3 + $0x338] sm:$0xff]
        %v1338 = vld [vmem:[#allocation3 + $0x340] sm:$0xff]
        %v1339 = vld [vmem:[#allocation3 + $0x348] sm:$0xff]
        %v1340 = vld [vmem:[#allocation3 + $0x350] sm:$0xff]
        %v1341 = vld [vmem:[#allocation3 + $0x358] sm:$0xff]
        %v1342 = vld [vmem:[#allocation3 + $0x360] sm:$0xff]
        %v1343 = vld [vmem:[#allocation3 + $0x368] sm:$0xff]
        %v1344 = vld [vmem:[#allocation3 + $0x370] sm:$0xff]
        %v1345 = vld [vmem:[#allocation3 + $0x378] sm:$0xff]
        %v1346 = vld [vmem:[#allocation3 + $0x380] sm:$0xff]
        %v1347 = vld [vmem:[#allocation3 + $0x388] sm:$0xff]
        %v1348 = vld [vmem:[#allocation3 + $0x390] sm:$0xff]
        %v1349 = vld [vmem:[#allocation3 + $0x398] sm:$0xff]
        %v1350 = vld [vmem:[#allocation3 + $0x3a0] sm:$0xff]
        %v1351 = vld [vmem:[#allocation3 + $0x3a8] sm:$0xff]
        %v1352 = vld [vmem:[#allocation3 + $0x3b0] sm:$0xff]
        %v1353 = vld [vmem:[#allocation3 + $0x3b8] sm:$0xff]
        %v1354 = vld [vmem:[#allocation3 + $0x3c0] sm:$0xff]
        %v1355 = vld [vmem:[#allocation3 + $0x3c8] sm:$0xff]
        %v1356 = vld [vmem:[#allocation3 + $0x3d0] sm:$0xff]
        %v1357 = vld [vmem:[#allocation3 + $0x3d8] sm:$0xff]
        %v1358 = vld [vmem:[#allocation3 + $0x3e0] sm:$0xff]
        %v1359 = vld [vmem:[#allocation3 + $0x3e8] sm:$0xff]
        %v1360 = vld [vmem:[#allocation3 + $0x3f0] sm:$0xff]
        %v1361 = vld [vmem:[#allocation3 + $0x3f8] sm:$0xff]
        %v1362 = vld [vmem:[#allocation3 + $0x400] sm:$0xff]
        %v1363 = vld [vmem:[#allocation3 + $0x408] sm:$0xff]
        %v1364 = vld [vmem:[#allocation3 + $0x410] sm:$0xff]
        %v1365 = vld [vmem:[#allocation3 + $0x418] sm:$0xff]
        %v1366 = vld [vmem:[#allocation3 + $0x420] sm:$0xff]
        %v1367 = vld [vmem:[#allocation3 + $0x428] sm:$0xff]
        %v1368 = vld [vmem:[#allocation3 + $0x430] sm:$0xff]
        %v1369 = vld [vmem:[#allocation3 + $0x438] sm:$0xff]
        %v1370 = vld [vmem:[#allocation3 + $0x440] sm:$0xff]
        %v1371 = vld [vmem:[#allocation3 + $0x448] sm:$0xff]
        %v1372 = vld [vmem:[#allocation3 + $0x450] sm:$0xff]
        %v1373 = vld [vmem:[#allocation3 + $0x458] sm:$0xff]
        %v1374 = vld [vmem:[#allocation3 + $0x460] sm:$0xff]
        %v1375 = vld [vmem:[#allocation3 + $0x468] sm:$0xff]
        %v1376 = vld [vmem:[#allocation3 + $0x470] sm:$0xff]
        %v1377 = vld [vmem:[#allocation3 + $0x478] sm:$0xff]
        %v1378 = vld [vmem:[#allocation3 + $0x480] sm:$0xff]
        %v1379 = vld [vmem:[#allocation3 + $0x488] sm:$0xff]
        %v1380 = vld [vmem:[#allocation3 + $0x490] sm:$0xff]
        %v1381 = vld [vmem:[#allocation3 + $0x498] sm:$0xff]
        %v1382 = vld [vmem:[#allocation3 + $0x4a0] sm:$0xff]
        %v1383 = vld [vmem:[#allocation3 + $0x4a8] sm:$0xff]
        %v1384 = vld [vmem:[#allocation3 + $0x4b0] sm:$0xff]
        %v1385 = vld [vmem:[#allocation3 + $0x4b8] sm:$0xff]
        %v1386 = vld [vmem:[#allocation3 + $0x4c0] sm:$0xff]
        %v1387 = vld [vmem:[#allocation3 + $0x4c8] sm:$0xff]
        %v1388 = vld [vmem:[#allocation3 + $0x4d0] sm:$0xff]
        %v1389 = vld [vmem:[#allocation3 + $0x4d8] sm:$0xff]
        %v1390 = vld [vmem:[#allocation3 + $0x4e0] sm:$0xff]
        %v1391 = vld [vmem:[#allocation3 + $0x4e8] sm:$0xff]
        %v1392 = vld [vmem:[#allocation3 + $0x4f0] sm:$0xff]
        %v1393 = vld [vmem:[#allocation3 + $0x4f8] sm:$0xff]
        %v1394 = vld [vmem:[%s3] sm:$0xff]
        %v1395 = vld [vmem:[%s3 + $0x8] sm:$0xff]
        %v1396 = vld [vmem:[%s3 + $0x10] sm:$0xff]
        %v1397 = vld [vmem:[%s3 + $0x18] sm:$0xff]
        %v1398 = vld [vmem:[%s3 + $0x20] sm:$0xff]
        %v1399 = vld [vmem:[%s3 + $0x28] sm:$0xff]
        %v1400 = vld [vmem:[%s3 + $0x30] sm:$0xff]
        %v1401 = vld [vmem:[%s3 + $0x38] sm:$0xff]
        %1403 = vset.pattern.permute.xlu0 0
        %1404 = vperm.xlu0 %1403, %v1394
        %v1405 = vpop.permute.xlu0 %1404
        %1408 = vset.pattern.permute.xlu0 0
        %1409 = vperm.xlu0 %1408, %v1395
        %v1410 = vpop.permute.xlu0 %1409
        %1413 = vset.pattern.permute.xlu0 0
        %1414 = vperm.xlu0 %1413, %v1396
        %v1415 = vpop.permute.xlu0 %1414
        %1418 = vset.pattern.permute.xlu0 0
        %1419 = vperm.xlu0 %1418, %v1397
        %v1420 = vpop.permute.xlu0 %1419
        %1423 = vset.pattern.permute.xlu0 0
        %1424 = vperm.xlu0 %1423, %v1398
        %v1425 = vpop.permute.xlu0 %1424
        %1428 = vset.pattern.permute.xlu0 0
        %1429 = vperm.xlu0 %1428, %v1399
        %v1430 = vpop.permute.xlu0 %1429
        %1433 = vset.pattern.permute.xlu0 0
        %1434 = vperm.xlu0 %1433, %v1400
        %v1435 = vpop.permute.xlu0 %1434
        %1438 = vset.pattern.permute.xlu0 0
        %1439 = vperm.xlu0 %1438, %v1401
        %v1440 = vpop.permute.xlu0 %1439
        %v1482 = vunpack.c.l.b16 %v1194
        %v1483 = vunpack.c.h.b16 %v1194
        %v1484 = vunpack.c.l.b16 %v1195
        %v1485 = vunpack.c.h.b16 %v1195
        %v1486 = vunpack.c.l.b16 %v1196
        %v1487 = vunpack.c.h.b16 %v1196
        %v1488 = vunpack.c.l.b16 %v1197
        %v1489 = vunpack.c.h.b16 %v1197
        %v1490 = vunpack.c.l.b16 %v1198
        %v1491 = vunpack.c.h.b16 %v1198
        %v1492 = vunpack.c.l.b16 %v1199
        %v1493 = vunpack.c.h.b16 %v1199
        %v1494 = vunpack.c.l.b16 %v1200
        %v1495 = vunpack.c.h.b16 %v1200
        %v1496 = vunpack.c.l.b16 %v1201
        %v1497 = vunpack.c.h.b16 %v1201
        %v1498 = vunpack.c.l.b16 %v1202
        %v1499 = vunpack.c.h.b16 %v1202
        %v1500 = vunpack.c.l.b16 %v1203
        %v1501 = vunpack.c.h.b16 %v1203
        %v1502 = vunpack.c.l.b16 %v1204
        %v1503 = vunpack.c.h.b16 %v1204
        %v1504 = vunpack.c.l.b16 %v1205
        %v1505 = vunpack.c.h.b16 %v1205
        %v1506 = vunpack.c.l.b16 %v1206
        %v1507 = vunpack.c.h.b16 %v1206
        %v1508 = vunpack.c.l.b16 %v1207
        %v1509 = vunpack.c.h.b16 %v1207
        %v1510 = vunpack.c.l.b16 %v1208
        %v1511 = vunpack.c.h.b16 %v1208
        %v1512 = vunpack.c.l.b16 %v1209
        %v1513 = vunpack.c.h.b16 %v1209
        %v1514 = vunpack.c.l.b16 %v1210
        %v1515 = vunpack.c.h.b16 %v1210
        %v1516 = vunpack.c.l.b16 %v1211
        %v1517 = vunpack.c.h.b16 %v1211
        %v1518 = vunpack.c.l.b16 %v1212
        %v1519 = vunpack.c.h.b16 %v1212
        %v1520 = vunpack.c.l.b16 %v1213
        %v1521 = vunpack.c.h.b16 %v1213
        %v1522 = vunpack.c.l.b16 %v1214
        %v1523 = vunpack.c.h.b16 %v1214
        %v1524 = vunpack.c.l.b16 %v1215
        %v1525 = vunpack.c.h.b16 %v1215
        %v1526 = vunpack.c.l.b16 %v1216
        %v1527 = vunpack.c.h.b16 %v1216
        %v1528 = vunpack.c.l.b16 %v1217
        %v1529 = vunpack.c.h.b16 %v1217
        %v1530 = vunpack.c.l.b16 %v1218
        %v1531 = vunpack.c.h.b16 %v1218
        %v1532 = vunpack.c.l.b16 %v1219
        %v1533 = vunpack.c.h.b16 %v1219
        %v1534 = vunpack.c.l.b16 %v1220
        %v1535 = vunpack.c.h.b16 %v1220
        %v1536 = vunpack.c.l.b16 %v1221
        %v1537 = vunpack.c.h.b16 %v1221
        %v1538 = vunpack.c.l.b16 %v1222
        %v1539 = vunpack.c.h.b16 %v1222
        %v1540 = vunpack.c.l.b16 %v1223
        %v1541 = vunpack.c.h.b16 %v1223
        %v1542 = vunpack.c.l.b16 %v1224
        %v1543 = vunpack.c.h.b16 %v1224
        %v1544 = vunpack.c.l.b16 %v1225
        %v1545 = vunpack.c.h.b16 %v1225
        %v1546 = vunpack.c.l.b16 %v1226
        %v1547 = vunpack.c.h.b16 %v1226
        %v1548 = vunpack.c.l.b16 %v1227
        %v1549 = vunpack.c.h.b16 %v1227
        %v1550 = vunpack.c.l.b16 %v1228
        %v1551 = vunpack.c.h.b16 %v1228
        %v1552 = vunpack.c.l.b16 %v1229
        %v1553 = vunpack.c.h.b16 %v1229
        %v1554 = vunpack.c.l.b16 %v1230
        %v1555 = vunpack.c.h.b16 %v1230
        %v1556 = vunpack.c.l.b16 %v1231
        %v1557 = vunpack.c.h.b16 %v1231
        %v1558 = vunpack.c.l.b16 %v1232
        %v1559 = vunpack.c.h.b16 %v1232
        %v1560 = vunpack.c.l.b16 %v1233
        %v1561 = vunpack.c.h.b16 %v1233
        %v1562 = vpack.c.b16 %v1492, %v1482
        %v1563 = vpack.c.b16 %v1493, %v1483
        %v1564 = vpack.c.b16 %v1494, %v1484
        %v1565 = vpack.c.b16 %v1495, %v1485
        %v1566 = vpack.c.b16 %v1496, %v1486
        %v1567 = vpack.c.b16 %v1497, %v1487
        %v1568 = vpack.c.b16 %v1498, %v1488
        %v1569 = vpack.c.b16 %v1499, %v1489
        %v1570 = vpack.c.b16 %v1500, %v1490
        %v1571 = vpack.c.b16 %v1501, %v1491
        %v1572 = vpack.c.b16 %v1512, %v1502
        %v1573 = vpack.c.b16 %v1513, %v1503
        %v1574 = vpack.c.b16 %v1514, %v1504
        %v1575 = vpack.c.b16 %v1515, %v1505
        %v1576 = vpack.c.b16 %v1516, %v1506
        %v1577 = vpack.c.b16 %v1517, %v1507
        %v1578 = vpack.c.b16 %v1518, %v1508
        %v1579 = vpack.c.b16 %v1519, %v1509
        %v1580 = vpack.c.b16 %v1520, %v1510
        %v1581 = vpack.c.b16 %v1521, %v1511
        %v1582 = vpack.c.b16 %v1532, %v1522
        %v1583 = vpack.c.b16 %v1533, %v1523
        %v1584 = vpack.c.b16 %v1534, %v1524
        %v1585 = vpack.c.b16 %v1535, %v1525
        %v1586 = vpack.c.b16 %v1536, %v1526
        %v1587 = vpack.c.b16 %v1537, %v1527
        %v1588 = vpack.c.b16 %v1538, %v1528
        %v1589 = vpack.c.b16 %v1539, %v1529
        %v1590 = vpack.c.b16 %v1540, %v1530
        %v1591 = vpack.c.b16 %v1541, %v1531
        %v1592 = vpack.c.b16 %v1552, %v1542
        %v1593 = vpack.c.b16 %v1553, %v1543
        %v1594 = vpack.c.b16 %v1554, %v1544
        %v1595 = vpack.c.b16 %v1555, %v1545
        %v1596 = vpack.c.b16 %v1556, %v1546
        %v1597 = vpack.c.b16 %v1557, %v1547
        %v1598 = vpack.c.b16 %v1558, %v1548
        %v1599 = vpack.c.b16 %v1559, %v1549
        %v1600 = vpack.c.b16 %v1560, %v1550
        %v1601 = vpack.c.b16 %v1561, %v1551
        %1642 = vmatprep.subr.bf16.mxu0 %v1235
        %1643 = vmatpush1.bf16.msra.mxu0 %v1234
        %1644 = vmatprep.subr.bf16.mxu0 %v1237
        %1645 = vmatpush1.bf16.msra.mxu0 %v1236
        %1646 = vmatprep.subr.bf16.mxu0 %v1239
        %1647 = vmatpush1.bf16.msra.mxu0 %v1238
        %1648 = vmatprep.subr.bf16.mxu0 %v1241
        %1649 = vmatpush1.bf16.msra.mxu0 %v1240
        %1650 = vmatprep.subr.bf16.mxu0 %v1243
        %1651 = vmatpush1.bf16.msra.mxu0 %v1242
        %1652 = vmatprep.subr.bf16.mxu0 %v1245
        %1653 = vmatpush1.bf16.msra.mxu0 %v1244
        %1654 = vmatprep.subr.bf16.mxu0 %v1247
        %1655 = vmatpush1.bf16.msra.mxu0 %v1246
        %1656 = vmatprep.subr.bf16.mxu0 %v1249
        %1657 = vmatpush1.bf16.msra.mxu0 %v1248
        %1658 = vmatprep.subr.bf16.mxu0 %v1251
        %1659 = vmatpush1.bf16.msra.mxu0 %v1250
        %1660 = vmatprep.subr.bf16.mxu0 %v1253
        %1661 = vmatpush1.bf16.msra.mxu0 %v1252
        %1662 = vmatprep.subr.bf16.mxu0 %v1255
        %1663 = vmatpush1.bf16.msra.mxu0 %v1254
        %1664 = vmatprep.subr.bf16.mxu0 %v1257
        %1665 = vmatpush1.bf16.msra.mxu0 %v1256
        %1666 = vmatprep.subr.bf16.mxu0 %v1259
        %1667 = vmatpush1.bf16.msra.mxu0 %v1258
        %1668 = vmatprep.subr.bf16.mxu0 %v1261
        %1669 = vmatpush1.bf16.msra.mxu0 %v1260
        %1670 = vmatprep.subr.bf16.mxu0 %v1263
        %1671 = vmatpush1.bf16.msra.mxu0 %v1262
        %1672 = vmatprep.subr.bf16.mxu0 %v1265
        %1673 = vmatpush1.bf16.msra.mxu0 %v1264
        %1674 = vmatprep.mubr.bf16.mxu0 %v1563
        %1675 = vmatmul.mubr.bf16.gmra.mrb[0].mxu0 %v1562
        %v1676 = vpop.f32.mrb[0].mxu0
        %v1677 = vadd.f32 %v1405, %v1676
        %v1678 = vpop.f32.mrb[0].mxu0
        %v1679 = vadd.f32 %v1405, %v1678
        %v1680 = vpop.f32.mrb[0].mxu0
        %v1681 = vadd.f32 %v1410, %v1680
        %v1682 = vpop.f32.mrb[0].mxu0
        %v1683 = vadd.f32 %v1410, %v1682
        %1684 = vmatprep.mubr.bf16.mxu0 %v1573
        %1685 = vmatmul.mubr.bf16.gmra.mrb[0].mxu0 %v1572
        %v1686 = vpop.f32.mrb[0].mxu0
        %v1687 = vadd.f32 %v1415, %v1686
        %v1688 = vpop.f32.mrb[0].mxu0
        %v1689 = vadd.f32 %v1415, %v1688
        %v1690 = vpop.f32.mrb[0].mxu0
        %v1691 = vadd.f32 %v1420, %v1690
        %v1692 = vpop.f32.mrb[0].mxu0
        %v1693 = vadd.f32 %v1420, %v1692
        %1694 = vmatprep.mubr.bf16.mxu0 %v1583
        %1695 = vmatmul.mubr.bf16.gmra.mrb[0].mxu0 %v1582
        %v1696 = vpop.f32.mrb[0].mxu0
        %v1697 = vadd.f32 %v1425, %v1696
        %v1698 = vpop.f32.mrb[0].mxu0
        %v1699 = vadd.f32 %v1425, %v1698
        %v1700 = vpop.f32.mrb[0].mxu0
        %v1701 = vadd.f32 %v1430, %v1700
        %v1702 = vpop.f32.mrb[0].mxu0
        %v1703 = vadd.f32 %v1430, %v1702
        %1704 = vmatprep.mubr.bf16.mxu0 %v1593
        %1705 = vmatmul.mubr.bf16.gmra.mrb[0].mxu0 %v1592
        %v1706 = vpop.f32.mrb[0].mxu0
        %v1707 = vadd.f32 %v1435, %v1706
        %v1708 = vpop.f32.mrb[0].mxu0
        %v1709 = vadd.f32 %v1435, %v1708
        %v1710 = vpop.f32.mrb[0].mxu0
        %v1711 = vadd.f32 %v1440, %v1710
        %v1712 = vpop.f32.mrb[0].mxu0
        %v1713 = vadd.f32 %v1440, %v1712
        %1714 = vdwg.mxu0
        %1715 = vmatprep.subr.bf16.mxu0 %v1267
        %1716 = vmatpush1.bf16.msra.mxu0 %v1266
        %1717 = vmatprep.subr.bf16.mxu0 %v1269
        %1718 = vmatpush1.bf16.msra.mxu0 %v1268
        %1719 = vmatprep.subr.bf16.mxu0 %v1271
        %1720 = vmatpush1.bf16.msra.mxu0 %v1270
        %1721 = vmatprep.subr.bf16.mxu0 %v1273
        %1722 = vmatpush1.bf16.msra.mxu0 %v1272
        %1723 = vmatprep.subr.bf16.mxu0 %v1275
        %1724 = vmatpush1.bf16.msra.mxu0 %v1274
        %1725 = vmatprep.subr.bf16.mxu0 %v1277
        %1726 = vmatpush1.bf16.msra.mxu0 %v1276
        %1727 = vmatprep.subr.bf16.mxu0 %v1279
        %1728 = vmatpush1.bf16.msra.mxu0 %v1278
        %1729 = vmatprep.subr.bf16.mxu0 %v1281
        %1730 = vmatpush1.bf16.msra.mxu0 %v1280
        %1731 = vmatprep.subr.bf16.mxu0 %v1283
        %1732 = vmatpush1.bf16.msra.mxu0 %v1282
        %1733 = vmatprep.subr.bf16.mxu0 %v1285
        %1734 = vmatpush1.bf16.msra.mxu0 %v1284
        %1735 = vmatprep.subr.bf16.mxu0 %v1287
        %1736 = vmatpush1.bf16.msra.mxu0 %v1286
        %1737 = vmatprep.subr.bf16.mxu0 %v1289
        %1738 = vmatpush1.bf16.msra.mxu0 %v1288
        %1739 = vmatprep.subr.bf16.mxu0 %v1291
        %1740 = vmatpush1.bf16.msra.mxu0 %v1290
        %1741 = vmatprep.subr.bf16.mxu0 %v1293
        %1742 = vmatpush1.bf16.msra.mxu0 %v1292
        %1743 = vmatprep.subr.bf16.mxu0 %v1295
        %1744 = vmatpush1.bf16.msra.mxu0 %v1294
        %1745 = vmatprep.subr.bf16.mxu0 %v1297
        %1746 = vmatpush1.bf16.msra.mxu0 %v1296
        %1747 = vmatprep.mubr.bf16.mxu0 %v1565
        %1748 = vmatmul.mubr.bf16.gmra.mrb[0].mxu0 %v1564
        %v1749 = vpop.f32.mrb[0].mxu0
        %v1750 = vadd.f32 %v1677, %v1749
        %v1751 = vpop.f32.mrb[0].mxu0
        %v1752 = vadd.f32 %v1679, %v1751
        %v1753 = vpop.f32.mrb[0].mxu0
        %v1754 = vadd.f32 %v1681, %v1753
        %v1755 = vpop.f32.mrb[0].mxu0
        %v1756 = vadd.f32 %v1683, %v1755
        %1757 = vmatprep.mubr.bf16.mxu0 %v1575
        %1758 = vmatmul.mubr.bf16.gmra.mrb[0].mxu0 %v1574
        %v1759 = vpop.f32.mrb[0].mxu0
        %v1760 = vadd.f32 %v1687, %v1759
        %v1761 = vpop.f32.mrb[0].mxu0
        %v1762 = vadd.f32 %v1689, %v1761
        %v1763 = vpop.f32.mrb[0].mxu0
        %v1764 = vadd.f32 %v1691, %v1763
        %v1765 = vpop.f32.mrb[0].mxu0
        %v1766 = vadd.f32 %v1693, %v1765
        %1767 = vmatprep.mubr.bf16.mxu0 %v1585
        %1768 = vmatmul.mubr.bf16.gmra.mrb[0].mxu0 %v1584
        %v1769 = vpop.f32.mrb[0].mxu0
        %v1770 = vadd.f32 %v1697, %v1769
        %v1771 = vpop.f32.mrb[0].mxu0
        %v1772 = vadd.f32 %v1699, %v1771
        %v1773 = vpop.f32.mrb[0].mxu0
        %v1774 = vadd.f32 %v1701, %v1773
        %v1775 = vpop.f32.mrb[0].mxu0
        %v1776 = vadd.f32 %v1703, %v1775
        %1777 = vmatprep.mubr.bf16.mxu0 %v1595
        %1778 = vmatmul.mubr.bf16.gmra.mrb[0].mxu0 %v1594
        %v1779 = vpop.f32.mrb[0].mxu0
        %v1780 = vadd.f32 %v1707, %v1779
        %v1781 = vpop.f32.mrb[0].mxu0
        %v1782 = vadd.f32 %v1709, %v1781
        %v1783 = vpop.f32.mrb[0].mxu0
        %v1784 = vadd.f32 %v1711, %v1783
        %v1785 = vpop.f32.mrb[0].mxu0
        %v1786 = vadd.f32 %v1713, %v1785
        %1787 = vdwg.mxu0
        %1788 = vmatprep.subr.bf16.mxu0 %v1299
        %1789 = vmatpush1.bf16.msra.mxu0 %v1298
        %1790 = vmatprep.subr.bf16.mxu0 %v1301
        %1791 = vmatpush1.bf16.msra.mxu0 %v1300
        %1792 = vmatprep.subr.bf16.mxu0 %v1303
        %1793 = vmatpush1.bf16.msra.mxu0 %v1302
        %1794 = vmatprep.subr.bf16.mxu0 %v1305
        %1795 = vmatpush1.bf16.msra.mxu0 %v1304
        %1796 = vmatprep.subr.bf16.mxu0 %v1307
        %1797 = vmatpush1.bf16.msra.mxu0 %v1306
        %1798 = vmatprep.subr.bf16.mxu0 %v1309
        %1799 = vmatpush1.bf16.msra.mxu0 %v1308
        %1800 = vmatprep.subr.bf16.mxu0 %v1311
        %1801 = vmatpush1.bf16.msra.mxu0 %v1310
        %1802 = vmatprep.subr.bf16.mxu0 %v1313
        %1803 = vmatpush1.bf16.msra.mxu0 %v1312
        %1804 = vmatprep.subr.bf16.mxu0 %v1315
        %1805 = vmatpush1.bf16.msra.mxu0 %v1314
        %1806 = vmatprep.subr.bf16.mxu0 %v1317
        %1807 = vmatpush1.bf16.msra.mxu0 %v1316
        %1808 = vmatprep.subr.bf16.mxu0 %v1319
        %1809 = vmatpush1.bf16.msra.mxu0 %v1318
        %1810 = vmatprep.subr.bf16.mxu0 %v1321
        %1811 = vmatpush1.bf16.msra.mxu0 %v1320
        %1812 = vmatprep.subr.bf16.mxu0 %v1323
        %1813 = vmatpush1.bf16.msra.mxu0 %v1322
        %1814 = vmatprep.subr.bf16.mxu0 %v1325
        %1815 = vmatpush1.bf16.msra.mxu0 %v1324
        %1816 = vmatprep.subr.bf16.mxu0 %v1327
        %1817 = vmatpush1.bf16.msra.mxu0 %v1326
        %1818 = vmatprep.subr.bf16.mxu0 %v1329
        %1819 = vmatpush1.bf16.msra.mxu0 %v1328
        %1820 = vmatprep.mubr.bf16.mxu0 %v1567
        %1821 = vmatmul.mubr.bf16.gmra.mrb[0].mxu0 %v1566
        %v1822 = vpop.f32.mrb[0].mxu0
        %v1823 = vadd.f32 %v1750, %v1822
        %v1824 = vpop.f32.mrb[0].mxu0
        %v1825 = vadd.f32 %v1752, %v1824
        %v1826 = vpop.f32.mrb[0].mxu0
        %v1827 = vadd.f32 %v1754, %v1826
        %v1828 = vpop.f32.mrb[0].mxu0
        %v1829 = vadd.f32 %v1756, %v1828
        %1830 = vmatprep.mubr.bf16.mxu0 %v1577
        %1831 = vmatmul.mubr.bf16.gmra.mrb[0].mxu0 %v1576
        %v1832 = vpop.f32.mrb[0].mxu0
        %v1833 = vadd.f32 %v1760, %v1832
        %v1834 = vpop.f32.mrb[0].mxu0
        %v1835 = vadd.f32 %v1762, %v1834
        %v1836 = vpop.f32.mrb[0].mxu0
        %v1837 = vadd.f32 %v1764, %v1836
        %v1838 = vpop.f32.mrb[0].mxu0
        %v1839 = vadd.f32 %v1766, %v1838
        %1840 = vmatprep.mubr.bf16.mxu0 %v1587
        %1841 = vmatmul.mubr.bf16.gmra.mrb[0].mxu0 %v1586
        %v1842 = vpop.f32.mrb[0].mxu0
        %v1843 = vadd.f32 %v1770, %v1842
        %v1844 = vpop.f32.mrb[0].mxu0
        %v1845 = vadd.f32 %v1772, %v1844
        %v1846 = vpop.f32.mrb[0].mxu0
        %v1847 = vadd.f32 %v1774, %v1846
        %v1848 = vpop.f32.mrb[0].mxu0
        %v1849 = vadd.f32 %v1776, %v1848
        %1850 = vmatprep.mubr.bf16.mxu0 %v1597
        %1851 = vmatmul.mubr.bf16.gmra.mrb[0].mxu0 %v1596
        %v1852 = vpop.f32.mrb[0].mxu0
        %v1853 = vadd.f32 %v1780, %v1852
        %v1854 = vpop.f32.mrb[0].mxu0
        %v1855 = vadd.f32 %v1782, %v1854
        %v1856 = vpop.f32.mrb[0].mxu0
        %v1857 = vadd.f32 %v1784, %v1856
        %v1858 = vpop.f32.mrb[0].mxu0
        %v1859 = vadd.f32 %v1786, %v1858
        %1860 = vdwg.mxu0
        %1861 = vmatprep.subr.bf16.mxu0 %v1331
        %1862 = vmatpush1.bf16.msra.mxu0 %v1330
        %1863 = vmatprep.subr.bf16.mxu0 %v1333
        %1864 = vmatpush1.bf16.msra.mxu0 %v1332
        %1865 = vmatprep.subr.bf16.mxu0 %v1335
        %1866 = vmatpush1.bf16.msra.mxu0 %v1334
        %1867 = vmatprep.subr.bf16.mxu0 %v1337
        %1868 = vmatpush1.bf16.msra.mxu0 %v1336
        %1869 = vmatprep.subr.bf16.mxu0 %v1339
        %1870 = vmatpush1.bf16.msra.mxu0 %v1338
        %1871 = vmatprep.subr.bf16.mxu0 %v1341
        %1872 = vmatpush1.bf16.msra.mxu0 %v1340
        %1873 = vmatprep.subr.bf16.mxu0 %v1343
        %1874 = vmatpush1.bf16.msra.mxu0 %v1342
        %1875 = vmatprep.subr.bf16.mxu0 %v1345
        %1876 = vmatpush1.bf16.msra.mxu0 %v1344
        %1877 = vmatprep.subr.bf16.mxu0 %v1347
        %1878 = vmatpush1.bf16.msra.mxu0 %v1346
        %1879 = vmatprep.subr.bf16.mxu0 %v1349
        %1880 = vmatpush1.bf16.msra.mxu0 %v1348
        %1881 = vmatprep.subr.bf16.mxu0 %v1351
        %1882 = vmatpush1.bf16.msra.mxu0 %v1350
        %1883 = vmatprep.subr.bf16.mxu0 %v1353
        %1884 = vmatpush1.bf16.msra.mxu0 %v1352
        %1885 = vmatprep.subr.bf16.mxu0 %v1355
        %1886 = vmatpush1.bf16.msra.mxu0 %v1354
        %1887 = vmatprep.subr.bf16.mxu0 %v1357
        %1888 = vmatpush1.bf16.msra.mxu0 %v1356
        %1889 = vmatprep.subr.bf16.mxu0 %v1359
        %1890 = vmatpush1.bf16.msra.mxu0 %v1358
        %1891 = vmatprep.subr.bf16.mxu0 %v1361
        %1892 = vmatpush1.bf16.msra.mxu0 %v1360
        %1893 = vmatprep.mubr.bf16.mxu0 %v1569
        %1894 = vmatmul.mubr.bf16.gmra.mrb[0].mxu0 %v1568
        %v1895 = vpop.f32.mrb[0].mxu0
        %v1896 = vadd.f32 %v1823, %v1895
        %v1897 = vpop.f32.mrb[0].mxu0
        %v1898 = vadd.f32 %v1825, %v1897
        %v1899 = vpop.f32.mrb[0].mxu0
        %v1900 = vadd.f32 %v1827, %v1899
        %v1901 = vpop.f32.mrb[0].mxu0
        %v1902 = vadd.f32 %v1829, %v1901
        %1903 = vmatprep.mubr.bf16.mxu0 %v1579
        %1904 = vmatmul.mubr.bf16.gmra.mrb[0].mxu0 %v1578
        %v1905 = vpop.f32.mrb[0].mxu0
        %v1906 = vadd.f32 %v1833, %v1905
        %v1907 = vpop.f32.mrb[0].mxu0
        %v1908 = vadd.f32 %v1835, %v1907
        %v1909 = vpop.f32.mrb[0].mxu0
        %v1910 = vadd.f32 %v1837, %v1909
        %v1911 = vpop.f32.mrb[0].mxu0
        %v1912 = vadd.f32 %v1839, %v1911
        %1913 = vmatprep.mubr.bf16.mxu0 %v1589
        %1914 = vmatmul.mubr.bf16.gmra.mrb[0].mxu0 %v1588
        %v1915 = vpop.f32.mrb[0].mxu0
        %v1916 = vadd.f32 %v1843, %v1915
        %v1917 = vpop.f32.mrb[0].mxu0
        %v1918 = vadd.f32 %v1845, %v1917
        %v1919 = vpop.f32.mrb[0].mxu0
        %v1920 = vadd.f32 %v1847, %v1919
        %v1921 = vpop.f32.mrb[0].mxu0
        %v1922 = vadd.f32 %v1849, %v1921
        %1923 = vmatprep.mubr.bf16.mxu0 %v1599
        %1924 = vmatmul.mubr.bf16.gmra.mrb[0].mxu0 %v1598
        %v1925 = vpop.f32.mrb[0].mxu0
        %v1926 = vadd.f32 %v1853, %v1925
        %v1927 = vpop.f32.mrb[0].mxu0
        %v1928 = vadd.f32 %v1855, %v1927
        %v1929 = vpop.f32.mrb[0].mxu0
        %v1930 = vadd.f32 %v1857, %v1929
        %v1931 = vpop.f32.mrb[0].mxu0
        %v1932 = vadd.f32 %v1859, %v1931
        %1933 = vdwg.mxu0
        %1934 = vmatprep.subr.bf16.mxu0 %v1363
        %1935 = vmatpush1.bf16.msra.mxu0 %v1362
        %1936 = vmatprep.subr.bf16.mxu0 %v1365
        %1937 = vmatpush1.bf16.msra.mxu0 %v1364
        %1938 = vmatprep.subr.bf16.mxu0 %v1367
        %1939 = vmatpush1.bf16.msra.mxu0 %v1366
        %1940 = vmatprep.subr.bf16.mxu0 %v1369
        %1941 = vmatpush1.bf16.msra.mxu0 %v1368
        %1942 = vmatprep.subr.bf16.mxu0 %v1371
        %1943 = vmatpush1.bf16.msra.mxu0 %v1370
        %1944 = vmatprep.subr.bf16.mxu0 %v1373
        %1945 = vmatpush1.bf16.msra.mxu0 %v1372
        %1946 = vmatprep.subr.bf16.mxu0 %v1375
        %1947 = vmatpush1.bf16.msra.mxu0 %v1374
        %1948 = vmatprep.subr.bf16.mxu0 %v1377
        %1949 = vmatpush1.bf16.msra.mxu0 %v1376
        %1950 = vmatprep.subr.bf16.mxu0 %v1379
        %1951 = vmatpush1.bf16.msra.mxu0 %v1378
        %1952 = vmatprep.subr.bf16.mxu0 %v1381
        %1953 = vmatpush1.bf16.msra.mxu0 %v1380
        %1954 = vmatprep.subr.bf16.mxu0 %v1383
        %1955 = vmatpush1.bf16.msra.mxu0 %v1382
        %1956 = vmatprep.subr.bf16.mxu0 %v1385
        %1957 = vmatpush1.bf16.msra.mxu0 %v1384
        %1958 = vmatprep.subr.bf16.mxu0 %v1387
        %1959 = vmatpush1.bf16.msra.mxu0 %v1386
        %1960 = vmatprep.subr.bf16.mxu0 %v1389
        %1961 = vmatpush1.bf16.msra.mxu0 %v1388
        %1962 = vmatprep.subr.bf16.mxu0 %v1391
        %1963 = vmatpush1.bf16.msra.mxu0 %v1390
        %1964 = vmatprep.subr.bf16.mxu0 %v1393
        %1965 = vmatpush1.bf16.msra.mxu0 %v1392
        %1966 = vmatprep.mubr.bf16.mxu0 %v1571
        %1967 = vmatmul.mubr.bf16.gmra.mrb[0].mxu0 %v1570
        %v1968 = vpop.f32.mrb[0].mxu0
        %v1969 = vadd.f32 %v1896, %v1968
        %v1970 = vpop.f32.mrb[0].mxu0
        %v1971 = vadd.f32 %v1898, %v1970
        %v1972 = vpop.f32.mrb[0].mxu0
        %v1973 = vadd.f32 %v1900, %v1972
        %v1974 = vpop.f32.mrb[0].mxu0
        %v1975 = vadd.f32 %v1902, %v1974
        %1976 = vmatprep.mubr.bf16.mxu0 %v1581
        %1977 = vmatmul.mubr.bf16.gmra.mrb[0].mxu0 %v1580
        %v1978 = vpop.f32.mrb[0].mxu0
        %v1979 = vadd.f32 %v1906, %v1978
        %v1980 = vpop.f32.mrb[0].mxu0
        %v1981 = vadd.f32 %v1908, %v1980
        %v1982 = vpop.f32.mrb[0].mxu0
        %v1983 = vadd.f32 %v1910, %v1982
        %v1984 = vpop.f32.mrb[0].mxu0
        %v1985 = vadd.f32 %v1912, %v1984
        %1986 = vmatprep.mubr.bf16.mxu0 %v1591
        %1987 = vmatmul.mubr.bf16.gmra.mrb[0].mxu0 %v1590
        %v1988 = vpop.f32.mrb[0].mxu0
        %v1989 = vadd.f32 %v1916, %v1988
        %v1990 = vpop.f32.mrb[0].mxu0
        %v1991 = vadd.f32 %v1918, %v1990
        %v1992 = vpop.f32.mrb[0].mxu0
        %v1993 = vadd.f32 %v1920, %v1992
        %v1994 = vpop.f32.mrb[0].mxu0
        %v1995 = vadd.f32 %v1922, %v1994
        %1996 = vmatprep.mubr.bf16.mxu0 %v1601
        %1997 = vmatmul.mubr.bf16.gmra.mrb[0].mxu0 %v1600
        %v1998 = vpop.f32.mrb[0].mxu0
        %v1999 = vadd.f32 %v1926, %v1998
        %v2000 = vpop.f32.mrb[0].mxu0
        %v2001 = vadd.f32 %v1928, %v2000
        %v2002 = vpop.f32.mrb[0].mxu0
        %v2003 = vadd.f32 %v1930, %v2002
        %v2004 = vpop.f32.mrb[0].mxu0
        %v2005 = vadd.f32 %v1932, %v2004
        %2006 = vdwg.mxu0
        %v2007 = vmax.f32 %v1969, 0.0
        %v2008 = vmax.f32 %v1971, 0.0
        %v2009 = vmax.f32 %v1973, 0.0
        %v2010 = vmax.f32 %v1975, 0.0
        %v2011 = vmax.f32 %v1979, 0.0
        %v2012 = vmax.f32 %v1981, 0.0
        %v2013 = vmax.f32 %v1983, 0.0
        %v2014 = vmax.f32 %v1985, 0.0
        %v2015 = vmax.f32 %v1989, 0.0
        %v2016 = vmax.f32 %v1991, 0.0
        %v2017 = vmax.f32 %v1993, 0.0
        %v2018 = vmax.f32 %v1995, 0.0
        %v2019 = vmax.f32 %v1999, 0.0
        %v2020 = vmax.f32 %v2001, 0.0
        %v2021 = vmax.f32 %v2003, 0.0
        %v2022 = vmax.f32 %v2005, 0.0
        %2023 = vst [vmem:[#allocation4] sm:$0xff] 0
        %vm2024 = vcmask 334848
        %2025 = vst.msk [vmem:[#allocation4 + $0x8] sm:$0xff] %vm2024, 0
        %2026 = vst [vmem:[#allocation4 + $0x10] sm:$0xff] 0
        %2027 = vst.msk [vmem:[#allocation4 + $0x18] sm:$0xff] %vm2024, 0
        %2028 = vst [vmem:[#allocation4 + $0x20] sm:$0xff] 0
        %2029 = vst.msk [vmem:[#allocation4 + $0x28] sm:$0xff] %vm2024, 0
        %2030 = vst [vmem:[#allocation4 + $0x30] sm:$0xff] 0
        %2031 = vst.msk [vmem:[#allocation4 + $0x38] sm:$0xff] %vm2024, 0
        %v2032 = vpack.c.bf16 %v2009, %v2007
        %v2033 = vpack.c.bf16 %v2010, %v2008
        %v2034 = vpack.c.bf16 %v2013, %v2011
        %v2035 = vpack.c.bf16 %v2014, %v2012
        %v2036 = vpack.c.bf16 %v2017, %v2015
        %v2037 = vpack.c.bf16 %v2018, %v2016
        %v2038 = vpack.c.bf16 %v2021, %v2019
        %v2039 = vpack.c.bf16 %v2022, %v2020
        %2048 = vrot.lane.b32.xlu0 %v2032, 5
        %v2049 = vpop.permute.xlu0 %2048
        %2050 = vrot.lane.b32.xlu0 %v2033, 5
        %v2051 = vpop.permute.xlu0 %2050
        %2052 = vrot.lane.b32.xlu0 %v2034, 5
        %v2053 = vpop.permute.xlu0 %2052
        %2054 = vrot.lane.b32.xlu0 %v2035, 5
        %v2055 = vpop.permute.xlu0 %2054
        %2056 = vrot.lane.b32.xlu0 %v2036, 5
        %v2057 = vpop.permute.xlu0 %2056
        %2058 = vrot.lane.b32.xlu0 %v2037, 5
        %v2059 = vpop.permute.xlu0 %2058
        %2060 = vrot.lane.b32.xlu0 %v2038, 5
        %v2061 = vpop.permute.xlu0 %2060
        %2062 = vrot.lane.b32.xlu0 %v2039, 5
        %v2063 = vpop.permute.xlu0 %2062
        %vm2064 = vcmask 39936
        %v2065 = vsel %vm2064, %v2049, %v2051
        %v2066 = vsel %vm2064, %v2053, %v2055
        %v2067 = vsel %vm2064, %v2057, %v2059
        %v2068 = vsel %vm2064, %v2061, %v2063
        %vm2077 = vcmask 1047592
        %2078 = vst.msk [vmem:[#allocation4] sm:$0xff] %vm2077, %v2049
        %vm2079 = vcmask 293888
        %2080 = vst.msk [vmem:[#allocation4 + $0x8] sm:$0xff] %vm2079, %v2065
        %2081 = vst.msk [vmem:[#allocation4 + $0x10] sm:$0xff] %vm2077, %v2053
        %2082 = vst.msk [vmem:[#allocation4 + $0x18] sm:$0xff] %vm2079, %v2066
        %2083 = vst.msk [vmem:[#allocation4 + $0x20] sm:$0xff] %vm2077, %v2057
        %2084 = vst.msk [vmem:[#allocation4 + $0x28] sm:$0xff] %vm2079, %v2067
        %2085 = vst.msk [vmem:[#allocation4 + $0x30] sm:$0xff] %vm2077, %v2061
        %2086 = vst.msk [vmem:[#allocation4 + $0x38] sm:$0xff] %vm2079, %v2068
        %v2087 = vld [vmem:[#allocation4] sm:$0xff]
        %v2088 = vld [vmem:[#allocation4 + $0x8] sm:$0xff]
        %v2089 = vld [vmem:[#allocation4 + $0x10] sm:$0xff]
        %v2090 = vld [vmem:[#allocation4 + $0x18] sm:$0xff]
        %v2091 = vld [vmem:[#allocation4 + $0x20] sm:$0xff]
        %v2092 = vld [vmem:[#allocation4 + $0x28] sm:$0xff]
        %v2093 = vld [vmem:[#allocation4 + $0x30] sm:$0xff]
        %v2094 = vld [vmem:[#allocation4 + $0x38] sm:$0xff]
        %2095 = vst [vmem:[#allocation5] sm:$0xff] %v2087
        %vm2096 = vcmask 261120
        %2097 = vst.msk [vmem:[#allocation5 + $0x8] sm:$0xff] %vm2096, %v2088
        %2098 = vst [vmem:[#allocation5 + $0x10] sm:$0xff] %v2089
        %2099 = vst.msk [vmem:[#allocation5 + $0x18] sm:$0xff] %vm2096, %v2090
        %2100 = vst [vmem:[#allocation5 + $0x20] sm:$0xff] %v2091
        %2101 = vst.msk [vmem:[#allocation5 + $0x28] sm:$0xff] %vm2096, %v2092
        %2102 = vst [vmem:[#allocation5 + $0x30] sm:$0xff] %v2093
        %2103 = vst.msk [vmem:[#allocation5 + $0x38] sm:$0xff] %vm2096, %v2094
        %2112 = vrot.lane.b32.xlu0 %v2087, 127
        %v2113 = vpop.permute.xlu0 %2112
        %2114 = vrot.lane.b32.xlu0 %v2088, 127
        %v2115 = vpop.permute.xlu0 %2114
        %2116 = vrot.lane.b32.xlu0 %v2089, 127
        %v2117 = vpop.permute.xlu0 %2116
        %2118 = vrot.lane.b32.xlu0 %v2090, 127
        %v2119 = vpop.permute.xlu0 %2118
        %2120 = vrot.lane.b32.xlu0 %v2091, 127
        %v2121 = vpop.permute.xlu0 %2120
        %2122 = vrot.lane.b32.xlu0 %v2092, 127
        %v2123 = vpop.permute.xlu0 %2122
        %2124 = vrot.lane.b32.xlu0 %v2093, 127
        %v2125 = vpop.permute.xlu0 %2124
        %2126 = vrot.lane.b32.xlu0 %v2094, 127
        %v2127 = vpop.permute.xlu0 %2126
        %v2128 = vsel %vm569, %v2113, %v2115
        %v2129 = vsel %vm569, %v2117, %v2119
        %v2130 = vsel %vm569, %v2121, %v2123
        %v2131 = vsel %vm569, %v2125, %v2127
        %2140 = vst [vmem:[#allocation5 + $0x40] sm:$0xff] %v2128
        %2141 = vst.msk [vmem:[#allocation5 + $0x48] sm:$0xff] %vm2096, %v2115
        %2142 = vst [vmem:[#allocation5 + $0x50] sm:$0xff] %v2129
        %2143 = vst.msk [vmem:[#allocation5 + $0x58] sm:$0xff] %vm2096, %v2119
        %2144 = vst [vmem:[#allocation5 + $0x60] sm:$0xff] %v2130
        %2145 = vst.msk [vmem:[#allocation5 + $0x68] sm:$0xff] %vm2096, %v2123
        %2146 = vst [vmem:[#allocation5 + $0x70] sm:$0xff] %v2131
        %2147 = vst.msk [vmem:[#allocation5 + $0x78] sm:$0xff] %vm2096, %v2127
        %2148 = vrot.lane.b32.xlu0 %v2087, 126
        %v2149 = vpop.permute.xlu0 %2148
        %2150 = vrot.lane.b32.xlu0 %v2088, 126
        %v2151 = vpop.permute.xlu0 %2150
        %2152 = vrot.lane.b32.xlu0 %v2089, 126
        %v2153 = vpop.permute.xlu0 %2152
        %2154 = vrot.lane.b32.xlu0 %v2090, 126
        %v2155 = vpop.permute.xlu0 %2154
        %2156 = vrot.lane.b32.xlu0 %v2091, 126
        %v2157 = vpop.permute.xlu0 %2156
        %2158 = vrot.lane.b32.xlu0 %v2092, 126
        %v2159 = vpop.permute.xlu0 %2158
        %2160 = vrot.lane.b32.xlu0 %v2093, 126
        %v2161 = vpop.permute.xlu0 %2160
        %2162 = vrot.lane.b32.xlu0 %v2094, 126
        %v2163 = vpop.permute.xlu0 %2162
        %v2164 = vsel %vm642, %v2149, %v2151
        %v2165 = vsel %vm642, %v2153, %v2155
        %v2166 = vsel %vm642, %v2157, %v2159
        %v2167 = vsel %vm642, %v2161, %v2163
        %2176 = vst [vmem:[#allocation5 + $0x80] sm:$0xff] %v2164
        %2177 = vst.msk [vmem:[#allocation5 + $0x88] sm:$0xff] %vm2096, %v2151
        %2178 = vst [vmem:[#allocation5 + $0x90] sm:$0xff] %v2165
        %2179 = vst.msk [vmem:[#allocation5 + $0x98] sm:$0xff] %vm2096, %v2155
        %2180 = vst [vmem:[#allocation5 + $0xa0] sm:$0xff] %v2166
        %2181 = vst.msk [vmem:[#allocation5 + $0xa8] sm:$0xff] %vm2096, %v2159
        %2182 = vst [vmem:[#allocation5 + $0xb0] sm:$0xff] %v2167
        %2183 = vst.msk [vmem:[#allocation5 + $0xb8] sm:$0xff] %vm2096, %v2163
        %2184 = vrot.lane.b32.xlu0 %v2087, 125
        %v2185 = vpop.permute.xlu0 %2184
        %2186 = vrot.lane.b32.xlu0 %v2088, 125
        %v2187 = vpop.permute.xlu0 %2186
        %2188 = vrot.lane.b32.xlu0 %v2089, 125
        %v2189 = vpop.permute.xlu0 %2188
        %2190 = vrot.lane.b32.xlu0 %v2090, 125
        %v2191 = vpop.permute.xlu0 %2190
        %2192 = vrot.lane.b32.xlu0 %v2091, 125
        %v2193 = vpop.permute.xlu0 %2192
        %2194 = vrot.lane.b32.xlu0 %v2092, 125
        %v2195 = vpop.permute.xlu0 %2194
        %2196 = vrot.lane.b32.xlu0 %v2093, 125
        %v2197 = vpop.permute.xlu0 %2196
        %2198 = vrot.lane.b32.xlu0 %v2094, 125
        %v2199 = vpop.permute.xlu0 %2198
        %v2200 = vsel %vm715, %v2185, %v2187
        %v2201 = vsel %vm715, %v2189, %v2191
        %v2202 = vsel %vm715, %v2193, %v2195
        %v2203 = vsel %vm715, %v2197, %v2199
        %2212 = vst [vmem:[#allocation5 + $0xc0] sm:$0xff] %v2200
        %2213 = vst.msk [vmem:[#allocation5 + $0xc8] sm:$0xff] %vm2096, %v2187
        %2214 = vst [vmem:[#allocation5 + $0xd0] sm:$0xff] %v2201
        %2215 = vst.msk [vmem:[#allocation5 + $0xd8] sm:$0xff] %vm2096, %v2191
        %2216 = vst [vmem:[#allocation5 + $0xe0] sm:$0xff] %v2202
        %2217 = vst.msk [vmem:[#allocation5 + $0xe8] sm:$0xff] %vm2096, %v2195
        %2218 = vst [vmem:[#allocation5 + $0xf0] sm:$0xff] %v2203
        %2219 = vst.msk [vmem:[#allocation5 + $0xf8] sm:$0xff] %vm2096, %v2199
        %2220 = vrot.lane.b32.xlu0 %v2087, 124
        %v2221 = vpop.permute.xlu0 %2220
        %2222 = vrot.lane.b32.xlu0 %v2088, 124
        %v2223 = vpop.permute.xlu0 %2222
        %2224 = vrot.lane.b32.xlu0 %v2089, 124
        %v2225 = vpop.permute.xlu0 %2224
        %2226 = vrot.lane.b32.xlu0 %v2090, 124
        %v2227 = vpop.permute.xlu0 %2226
        %2228 = vrot.lane.b32.xlu0 %v2091, 124
        %v2229 = vpop.permute.xlu0 %2228
        %2230 = vrot.lane.b32.xlu0 %v2092, 124
        %v2231 = vpop.permute.xlu0 %2230
        %2232 = vrot.lane.b32.xlu0 %v2093, 124
        %v2233 = vpop.permute.xlu0 %2232
        %2234 = vrot.lane.b32.xlu0 %v2094, 124
        %v2235 = vpop.permute.xlu0 %2234
        %v2236 = vsel %vm788, %v2221, %v2223
        %v2237 = vsel %vm788, %v2225, %v2227
        %v2238 = vsel %vm788, %v2229, %v2231
        %v2239 = vsel %vm788, %v2233, %v2235
        %2248 = vst [vmem:[#allocation5 + $0x100] sm:$0xff] %v2236
        %2249 = vst.msk [vmem:[#allocation5 + $0x108] sm:$0xff] %vm2096, %v2223
        %2250 = vst [vmem:[#allocation5 + $0x110] sm:$0xff] %v2237
        %2251 = vst.msk [vmem:[#allocation5 + $0x118] sm:$0xff] %vm2096, %v2227
        %2252 = vst [vmem:[#allocation5 + $0x120] sm:$0xff] %v2238
        %2253 = vst.msk [vmem:[#allocation5 + $0x128] sm:$0xff] %vm2096, %v2231
        %2254 = vst [vmem:[#allocation5 + $0x130] sm:$0xff] %v2239
        %2255 = vst.msk [vmem:[#allocation5 + $0x138] sm:$0xff] %vm2096, %v2235
        %2256 = vrot.lane.b32.xlu0 %v2087, 123
        %v2257 = vpop.permute.xlu0 %2256
        %2258 = vrot.lane.b32.xlu0 %v2088, 123
        %v2259 = vpop.permute.xlu0 %2258
        %2260 = vrot.lane.b32.xlu0 %v2089, 123
        %v2261 = vpop.permute.xlu0 %2260
        %2262 = vrot.lane.b32.xlu0 %v2090, 123
        %v2263 = vpop.permute.xlu0 %2262
        %2264 = vrot.lane.b32.xlu0 %v2091, 123
        %v2265 = vpop.permute.xlu0 %2264
        %2266 = vrot.lane.b32.xlu0 %v2092, 123
        %v2267 = vpop.permute.xlu0 %2266
        %2268 = vrot.lane.b32.xlu0 %v2093, 123
        %v2269 = vpop.permute.xlu0 %2268
        %2270 = vrot.lane.b32.xlu0 %v2094, 123
        %v2271 = vpop.permute.xlu0 %2270
        %v2272 = vsel %vm861, %v2257, %v2259
        %v2273 = vsel %vm861, %v2261, %v2263
        %v2274 = vsel %vm861, %v2265, %v2267
        %v2275 = vsel %vm861, %v2269, %v2271
        %2284 = vst [vmem:[#allocation5 + $0x140] sm:$0xff] %v2272
        %2285 = vst.msk [vmem:[#allocation5 + $0x148] sm:$0xff] %vm2096, %v2259
        %2286 = vst [vmem:[#allocation5 + $0x150] sm:$0xff] %v2273
        %2287 = vst.msk [vmem:[#allocation5 + $0x158] sm:$0xff] %vm2096, %v2263
        %2288 = vst [vmem:[#allocation5 + $0x160] sm:$0xff] %v2274
        %2289 = vst.msk [vmem:[#allocation5 + $0x168] sm:$0xff] %vm2096, %v2267
        %2290 = vst [vmem:[#allocation5 + $0x170] sm:$0xff] %v2275
        %2291 = vst.msk [vmem:[#allocation5 + $0x178] sm:$0xff] %vm2096, %v2271
        %2292 = vrot.lane.b32.xlu0 %v2087, 122
        %v2293 = vpop.permute.xlu0 %2292
        %2294 = vrot.lane.b32.xlu0 %v2088, 122
        %v2295 = vpop.permute.xlu0 %2294
        %2296 = vrot.lane.b32.xlu0 %v2089, 122
        %v2297 = vpop.permute.xlu0 %2296
        %2298 = vrot.lane.b32.xlu0 %v2090, 122
        %v2299 = vpop.permute.xlu0 %2298
        %2300 = vrot.lane.b32.xlu0 %v2091, 122
        %v2301 = vpop.permute.xlu0 %2300
        %2302 = vrot.lane.b32.xlu0 %v2092, 122
        %v2303 = vpop.permute.xlu0 %2302
        %2304 = vrot.lane.b32.xlu0 %v2093, 122
        %v2305 = vpop.permute.xlu0 %2304
        %2306 = vrot.lane.b32.xlu0 %v2094, 122
        %v2307 = vpop.permute.xlu0 %2306
        %v2308 = vsel %vm934, %v2293, %v2295
        %v2309 = vsel %vm934, %v2297, %v2299
        %v2310 = vsel %vm934, %v2301, %v2303
        %v2311 = vsel %vm934, %v2305, %v2307
        %2320 = vst [vmem:[#allocation5 + $0x180] sm:$0xff] %v2308
        %2321 = vst.msk [vmem:[#allocation5 + $0x188] sm:$0xff] %vm2096, %v2295
        %2322 = vst [vmem:[#allocation5 + $0x190] sm:$0xff] %v2309
        %2323 = vst.msk [vmem:[#allocation5 + $0x198] sm:$0xff] %vm2096, %v2299
        %2324 = vst [vmem:[#allocation5 + $0x1a0] sm:$0xff] %v2310
        %2325 = vst.msk [vmem:[#allocation5 + $0x1a8] sm:$0xff] %vm2096, %v2303
        %2326 = vst [vmem:[#allocation5 + $0x1b0] sm:$0xff] %v2311
        %2327 = vst.msk [vmem:[#allocation5 + $0x1b8] sm:$0xff] %vm2096, %v2307
        %2328 = vrot.lane.b32.xlu0 %v2087, 121
        %v2329 = vpop.permute.xlu0 %2328
        %2330 = vrot.lane.b32.xlu0 %v2088, 121
        %v2331 = vpop.permute.xlu0 %2330
        %2332 = vrot.lane.b32.xlu0 %v2089, 121
        %v2333 = vpop.permute.xlu0 %2332
        %2334 = vrot.lane.b32.xlu0 %v2090, 121
        %v2335 = vpop.permute.xlu0 %2334
        %2336 = vrot.lane.b32.xlu0 %v2091, 121
        %v2337 = vpop.permute.xlu0 %2336
        %2338 = vrot.lane.b32.xlu0 %v2092, 121
        %v2339 = vpop.permute.xlu0 %2338
        %2340 = vrot.lane.b32.xlu0 %v2093, 121
        %v2341 = vpop.permute.xlu0 %2340
        %2342 = vrot.lane.b32.xlu0 %v2094, 121
        %v2343 = vpop.permute.xlu0 %2342
        %v2344 = vsel %vm1007, %v2329, %v2331
        %v2345 = vsel %vm1007, %v2333, %v2335
        %v2346 = vsel %vm1007, %v2337, %v2339
        %v2347 = vsel %vm1007, %v2341, %v2343
        %2356 = vst [vmem:[#allocation5 + $0x1c0] sm:$0xff] %v2344
        %2357 = vst.msk [vmem:[#allocation5 + $0x1c8] sm:$0xff] %vm2096, %v2331
        %2358 = vst [vmem:[#allocation5 + $0x1d0] sm:$0xff] %v2345
        %2359 = vst.msk [vmem:[#allocation5 + $0x1d8] sm:$0xff] %vm2096, %v2335
        %2360 = vst [vmem:[#allocation5 + $0x1e0] sm:$0xff] %v2346
        %2361 = vst.msk [vmem:[#allocation5 + $0x1e8] sm:$0xff] %vm2096, %v2339
        %2362 = vst [vmem:[#allocation5 + $0x1f0] sm:$0xff] %v2347
        %2363 = vst.msk [vmem:[#allocation5 + $0x1f8] sm:$0xff] %vm2096, %v2343
        %2364 = vrot.lane.b32.xlu0 %v2087, 120
        %v2365 = vpop.permute.xlu0 %2364
        %2366 = vrot.lane.b32.xlu0 %v2088, 120
        %v2367 = vpop.permute.xlu0 %2366
        %2368 = vrot.lane.b32.xlu0 %v2089, 120
        %v2369 = vpop.permute.xlu0 %2368
        %2370 = vrot.lane.b32.xlu0 %v2090, 120
        %v2371 = vpop.permute.xlu0 %2370
        %2372 = vrot.lane.b32.xlu0 %v2091, 120
        %v2373 = vpop.permute.xlu0 %2372
        %2374 = vrot.lane.b32.xlu0 %v2092, 120
        %v2375 = vpop.permute.xlu0 %2374
        %2376 = vrot.lane.b32.xlu0 %v2093, 120
        %v2377 = vpop.permute.xlu0 %2376
        %2378 = vrot.lane.b32.xlu0 %v2094, 120
        %v2379 = vpop.permute.xlu0 %2378
        %v2380 = vsel %vm1080, %v2365, %v2367
        %v2381 = vsel %vm1080, %v2369, %v2371
        %v2382 = vsel %vm1080, %v2373, %v2375
        %v2383 = vsel %vm1080, %v2377, %v2379
        %2392 = vst [vmem:[#allocation5 + $0x200] sm:$0xff] %v2380
        %2393 = vst.msk [vmem:[#allocation5 + $0x208] sm:$0xff] %vm2096, %v2367
        %2394 = vst [vmem:[#allocation5 + $0x210] sm:$0xff] %v2381
        %2395 = vst.msk [vmem:[#allocation5 + $0x218] sm:$0xff] %vm2096, %v2371
        %2396 = vst [vmem:[#allocation5 + $0x220] sm:$0xff] %v2382
        %2397 = vst.msk [vmem:[#allocation5 + $0x228] sm:$0xff] %vm2096, %v2375
        %2398 = vst [vmem:[#allocation5 + $0x230] sm:$0xff] %v2383
        %2399 = vst.msk [vmem:[#allocation5 + $0x238] sm:$0xff] %vm2096, %v2379
        %2400 = vrot.lane.b32.xlu0 %v2087, 119
        %v2401 = vpop.permute.xlu0 %2400
        %2402 = vrot.lane.b32.xlu0 %v2088, 119
        %v2403 = vpop.permute.xlu0 %2402
        %2404 = vrot.lane.b32.xlu0 %v2089, 119
        %v2405 = vpop.permute.xlu0 %2404
        %2406 = vrot.lane.b32.xlu0 %v2090, 119
        %v2407 = vpop.permute.xlu0 %2406
        %2408 = vrot.lane.b32.xlu0 %v2091, 119
        %v2409 = vpop.permute.xlu0 %2408
        %2410 = vrot.lane.b32.xlu0 %v2092, 119
        %v2411 = vpop.permute.xlu0 %2410
        %2412 = vrot.lane.b32.xlu0 %v2093, 119
        %v2413 = vpop.permute.xlu0 %2412
        %2414 = vrot.lane.b32.xlu0 %v2094, 119
        %v2415 = vpop.permute.xlu0 %2414
        %v2416 = vsel %vm1153, %v2401, %v2403
        %v2417 = vsel %vm1153, %v2405, %v2407
        %v2418 = vsel %vm1153, %v2409, %v2411
        %v2419 = vsel %vm1153, %v2413, %v2415
        %2428 = vst [vmem:[#allocation5 + $0x240] sm:$0xff] %v2416
        %2429 = vst.msk [vmem:[#allocation5 + $0x248] sm:$0xff] %vm2096, %v2403
        %2430 = vst [vmem:[#allocation5 + $0x250] sm:$0xff] %v2417
        %2431 = vst.msk [vmem:[#allocation5 + $0x258] sm:$0xff] %vm2096, %v2407
        %2432 = vst [vmem:[#allocation5 + $0x260] sm:$0xff] %v2418
        %2433 = vst.msk [vmem:[#allocation5 + $0x268] sm:$0xff] %vm2096, %v2411
        %2434 = vst [vmem:[#allocation5 + $0x270] sm:$0xff] %v2419
        %2435 = vst.msk [vmem:[#allocation5 + $0x278] sm:$0xff] %vm2096, %v2415
        %v2436 = vld [vmem:[%s4] sm:$0xff]
        %v2437 = vld [vmem:[%s4 + $0x8] sm:$0xff]
        %v2438 = vld [vmem:[%s4 + $0x10] sm:$0xf]
        %v2439 = vld [vmem:[%s4 + $0x14] sm:$0xff]
        %v2440 = vld [vmem:[%s4 + $0x1c] sm:$0xff]
        %v2441 = vld [vmem:[%s4 + $0x24] sm:$0xf]
        %v2442 = vld [vmem:[%s4 + $0x28] sm:$0xff]
        %v2443 = vld [vmem:[%s4 + $0x30] sm:$0xff]
        %v2444 = vld [vmem:[%s4 + $0x38] sm:$0xf]
        %v2445 = vld [vmem:[%s4 + $0x3c] sm:$0xff]
        %v2446 = vld [vmem:[%s4 + $0x44] sm:$0xff]
        %v2447 = vld [vmem:[%s4 + $0x4c] sm:$0xf]
        %v2448 = vld [vmem:[#allocation5] sm:$0xff]
        %v2449 = vld [vmem:[#allocation5 + $0x8] sm:$0xff]
        %v2450 = vld [vmem:[#allocation5 + $0x10] sm:$0xff]
        %v2451 = vld [vmem:[#allocation5 + $0x18] sm:$0xff]
        %v2452 = vld [vmem:[#allocation5 + $0x20] sm:$0xff]
        %v2453 = vld [vmem:[#allocation5 + $0x28] sm:$0xff]
        %v2454 = vld [vmem:[#allocation5 + $0x30] sm:$0xff]
        %v2455 = vld [vmem:[#allocation5 + $0x38] sm:$0xff]
        %v2456 = vld [vmem:[#allocation5 + $0x40] sm:$0xff]
        %v2457 = vld [vmem:[#allocation5 + $0x48] sm:$0xff]
        %v2458 = vld [vmem:[#allocation5 + $0x50] sm:$0xff]
        %v2459 = vld [vmem:[#allocation5 + $0x58] sm:$0xff]
        %v2460 = vld [vmem:[#allocation5 + $0x60] sm:$0xff]
        %v2461 = vld [vmem:[#allocation5 + $0x68] sm:$0xff]
        %v2462 = vld [vmem:[#allocation5 + $0x70] sm:$0xff]
        %v2463 = vld [vmem:[#allocation5 + $0x78] sm:$0xff]
        %v2464 = vld [vmem:[#allocation5 + $0x80] sm:$0xff]
        %v2465 = vld [vmem:[#allocation5 + $0x88] sm:$0xff]
        %v2466 = vld [vmem:[#allocation5 + $0x90] sm:$0xff]
        %v2467 = vld [vmem:[#allocation5 + $0x98] sm:$0xff]
        %v2468 = vld [vmem:[#allocation5 + $0xa0] sm:$0xff]
        %v2469 = vld [vmem:[#allocation5 + $0xa8] sm:$0xff]
        %v2470 = vld [vmem:[#allocation5 + $0xb0] sm:$0xff]
        %v2471 = vld [vmem:[#allocation5 + $0xb8] sm:$0xff]
        %v2472 = vld [vmem:[#allocation5 + $0xc0] sm:$0xff]
        %v2473 = vld [vmem:[#allocation5 + $0xc8] sm:$0xff]
        %v2474 = vld [vmem:[#allocation5 + $0xd0] sm:$0xff]
        %v2475 = vld [vmem:[#allocation5 + $0xd8] sm:$0xff]
        %v2476 = vld [vmem:[#allocation5 + $0xe0] sm:$0xff]
        %v2477 = vld [vmem:[#allocation5 + $0xe8] sm:$0xff]
        %v2478 = vld [vmem:[#allocation5 + $0xf0] sm:$0xff]
        %v2479 = vld [vmem:[#allocation5 + $0xf8] sm:$0xff]
        %v2480 = vld [vmem:[#allocation5 + $0x100] sm:$0xff]
        %v2481 = vld [vmem:[#allocation5 + $0x108] sm:$0xff]
        %v2482 = vld [vmem:[#allocation5 + $0x110] sm:$0xff]
        %v2483 = vld [vmem:[#allocation5 + $0x118] sm:$0xff]
        %v2484 = vld [vmem:[#allocation5 + $0x120] sm:$0xff]
        %v2485 = vld [vmem:[#allocation5 + $0x128] sm:$0xff]
        %v2486 = vld [vmem:[#allocation5 + $0x130] sm:$0xff]
        %v2487 = vld [vmem:[#allocation5 + $0x138] sm:$0xff]
        %v2488 = vld [vmem:[#allocation5 + $0x140] sm:$0xff]
        %v2489 = vld [vmem:[#allocation5 + $0x148] sm:$0xff]
        %v2490 = vld [vmem:[#allocation5 + $0x150] sm:$0xff]
        %v2491 = vld [vmem:[#allocation5 + $0x158] sm:$0xff]
        %v2492 = vld [vmem:[#allocation5 + $0x160] sm:$0xff]
        %v2493 = vld [vmem:[#allocation5 + $0x168] sm:$0xff]
        %v2494 = vld [vmem:[#allocation5 + $0x170] sm:$0xff]
        %v2495 = vld [vmem:[#allocation5 + $0x178] sm:$0xff]
        %v2496 = vld [vmem:[#allocation5 + $0x180] sm:$0xff]
        %v2497 = vld [vmem:[#allocation5 + $0x188] sm:$0xff]
        %v2498 = vld [vmem:[#allocation5 + $0x190] sm:$0xff]
        %v2499 = vld [vmem:[#allocation5 + $0x198] sm:$0xff]
        %v2500 = vld [vmem:[#allocation5 + $0x1a0] sm:$0xff]
        %v2501 = vld [vmem:[#allocation5 + $0x1a8] sm:$0xff]
        %v2502 = vld [vmem:[#allocation5 + $0x1b0] sm:$0xff]
        %v2503 = vld [vmem:[#allocation5 + $0x1b8] sm:$0xff]
        %v2504 = vld [vmem:[#allocation5 + $0x1c0] sm:$0xff]
        %v2505 = vld [vmem:[#allocation5 + $0x1c8] sm:$0xff]
        %v2506 = vld [vmem:[#allocation5 + $0x1d0] sm:$0xff]
        %v2507 = vld [vmem:[#allocation5 + $0x1d8] sm:$0xff]
        %v2508 = vld [vmem:[#allocation5 + $0x1e0] sm:$0xff]
        %v2509 = vld [vmem:[#allocation5 + $0x1e8] sm:$0xff]
        %v2510 = vld [vmem:[#allocation5 + $0x1f0] sm:$0xff]
        %v2511 = vld [vmem:[#allocation5 + $0x1f8] sm:$0xff]
        %v2512 = vld [vmem:[#allocation5 + $0x200] sm:$0xff]
        %v2513 = vld [vmem:[#allocation5 + $0x208] sm:$0xff]
        %v2514 = vld [vmem:[#allocation5 + $0x210] sm:$0xff]
        %v2515 = vld [vmem:[#allocation5 + $0x218] sm:$0xff]
        %v2516 = vld [vmem:[#allocation5 + $0x220] sm:$0xff]
        %v2517 = vld [vmem:[#allocation5 + $0x228] sm:$0xff]
        %v2518 = vld [vmem:[#allocation5 + $0x230] sm:$0xff]
        %v2519 = vld [vmem:[#allocation5 + $0x238] sm:$0xff]
        %v2520 = vld [vmem:[#allocation5 + $0x240] sm:$0xff]
        %v2521 = vld [vmem:[#allocation5 + $0x248] sm:$0xff]
        %v2522 = vld [vmem:[#allocation5 + $0x250] sm:$0xff]
        %v2523 = vld [vmem:[#allocation5 + $0x258] sm:$0xff]
        %v2524 = vld [vmem:[#allocation5 + $0x260] sm:$0xff]
        %v2525 = vld [vmem:[#allocation5 + $0x268] sm:$0xff]
        %v2526 = vld [vmem:[#allocation5 + $0x270] sm:$0xff]
        %v2527 = vld [vmem:[#allocation5 + $0x278] sm:$0xff]
        %v2528 = vld [vmem:[%s5] sm:$0xff]
        %v2529 = vld [vmem:[%s5 + $0x8] sm:$0xff]
        %v2530 = vld [vmem:[%s5 + $0x10] sm:$0xff]
        %v2531 = vld [vmem:[%s5 + $0x18] sm:$0xff]
        %2533 = vset.pattern.permute.xlu0 0
        %2534 = vperm.xlu0 %2533, %v2528
        %v2535 = vpop.permute.xlu0 %2534
        %2538 = vset.pattern.permute.xlu0 0
        %2539 = vperm.xlu0 %2538, %v2529
        %v2540 = vpop.permute.xlu0 %2539
        %2543 = vset.pattern.permute.xlu0 0
        %2544 = vperm.xlu0 %2543, %v2530
        %v2545 = vpop.permute.xlu0 %2544
        %2548 = vset.pattern.permute.xlu0 0
        %2549 = vperm.xlu0 %2548, %v2531
        %v2550 = vpop.permute.xlu0 %2549
        %v2564 = vunpack.c.l.b16 %v2436
        %v2565 = vunpack.c.h.b16 %v2436
        %v2566 = vunpack.c.l.b16 %v2437
        %v2567 = vunpack.c.h.b16 %v2437
        %v2568 = vunpack.c.l.b16 %v2438
        %v2569 = vunpack.c.l.b16 %v2439
        %v2570 = vunpack.c.h.b16 %v2439
        %v2571 = vunpack.c.l.b16 %v2440
        %v2572 = vunpack.c.h.b16 %v2440
        %v2573 = vunpack.c.l.b16 %v2441
        %v2574 = vunpack.c.l.b16 %v2442
        %v2575 = vunpack.c.h.b16 %v2442
        %v2576 = vunpack.c.l.b16 %v2443
        %v2577 = vunpack.c.h.b16 %v2443
        %v2578 = vunpack.c.l.b16 %v2444
        %v2579 = vunpack.c.l.b16 %v2445
        %v2580 = vunpack.c.h.b16 %v2445
        %v2581 = vunpack.c.l.b16 %v2446
        %v2582 = vunpack.c.h.b16 %v2446
        %v2583 = vunpack.c.l.b16 %v2447
        %v2584 = vpack.c.b16 %v2569, %v2564
        %v2585 = vpack.c.b16 %v2570, %v2565
        %v2586 = vpack.c.b16 %v2571, %v2566
        %v2587 = vpack.c.b16 %v2572, %v2567
        %v2588 = vpack.c.b16 %v2573, %v2568
        %v2589 = vpack.c.b16 %v2579, %v2574
        %v2590 = vpack.c.b16 %v2580, %v2575
        %v2591 = vpack.c.b16 %v2581, %v2576
        %v2592 = vpack.c.b16 %v2582, %v2577
        %v2593 = vpack.c.b16 %v2583, %v2578
        %2604 = vmatprep.subr.bf16.mxu0 %v2449
        %2605 = vmatpush1.bf16.msra.mxu0 %v2448
        %2606 = vmatprep.subr.bf16.mxu0 %v2451
        %2607 = vmatpush1.bf16.msra.mxu0 %v2450
        %2608 = vmatprep.subr.bf16.mxu0 %v2453
        %2609 = vmatpush1.bf16.msra.mxu0 %v2452
        %2610 = vmatprep.subr.bf16.mxu0 %v2455
        %2611 = vmatpush1.bf16.msra.mxu0 %v2454
        %2612 = vmatprep.subr.bf16.mxu0 %v2457
        %2613 = vmatpush1.bf16.msra.mxu0 %v2456
        %2614 = vmatprep.subr.bf16.mxu0 %v2459
        %2615 = vmatpush1.bf16.msra.mxu0 %v2458
        %2616 = vmatprep.subr.bf16.mxu0 %v2461
        %2617 = vmatpush1.bf16.msra.mxu0 %v2460
        %2618 = vmatprep.subr.bf16.mxu0 %v2463
        %2619 = vmatpush1.bf16.msra.mxu0 %v2462
        %2620 = vmatprep.subr.bf16.mxu0 %v2465
        %2621 = vmatpush1.bf16.msra.mxu0 %v2464
        %2622 = vmatprep.subr.bf16.mxu0 %v2467
        %2623 = vmatpush1.bf16.msra.mxu0 %v2466
        %2624 = vmatprep.subr.bf16.mxu0 %v2469
        %2625 = vmatpush1.bf16.msra.mxu0 %v2468
        %2626 = vmatprep.subr.bf16.mxu0 %v2471
        %2627 = vmatpush1.bf16.msra.mxu0 %v2470
        %2628 = vmatprep.subr.bf16.mxu0 %v2473
        %2629 = vmatpush1.bf16.msra.mxu0 %v2472
        %2630 = vmatprep.subr.bf16.mxu0 %v2475
        %2631 = vmatpush1.bf16.msra.mxu0 %v2474
        %2632 = vmatprep.subr.bf16.mxu0 %v2477
        %2633 = vmatpush1.bf16.msra.mxu0 %v2476
        %2634 = vmatprep.subr.bf16.mxu0 %v2479
        %2635 = vmatpush1.bf16.msra.mxu0 %v2478
        %2636 = vmatprep.mubr.bf16.mxu0 %v2585
        %2637 = vmatmul.mubr.bf16.gmra.mrb[0].mxu0 %v2584
        %v2638 = vpop.f32.mrb[0].mxu0
        %v2639 = vadd.f32 %v2535, %v2638
        %v2640 = vpop.f32.mrb[0].mxu0
        %v2641 = vadd.f32 %v2535, %v2640
        %v2642 = vpop.f32.mrb[0].mxu0
        %v2643 = vadd.f32 %v2540, %v2642
        %v2644 = vpop.f32.mrb[0].mxu0
        %v2645 = vadd.f32 %v2540, %v2644
        %2646 = vmatprep.mubr.bf16.mxu0 %v2590
        %2647 = vmatmul.mubr.bf16.gmra.mrb[0].mxu0 %v2589
        %v2648 = vpop.f32.mrb[0].mxu0
        %v2649 = vadd.f32 %v2545, %v2648
        %v2650 = vpop.f32.mrb[0].mxu0
        %v2651 = vadd.f32 %v2545, %v2650
        %v2652 = vpop.f32.mrb[0].mxu0
        %v2653 = vadd.f32 %v2550, %v2652
        %v2654 = vpop.f32.mrb[0].mxu0
        %v2655 = vadd.f32 %v2550, %v2654
        %2656 = vdwg.mxu0
        %2657 = vmatprep.subr.bf16.mxu0 %v2481
        %2658 = vmatpush1.bf16.msra.mxu0 %v2480
        %2659 = vmatprep.subr.bf16.mxu0 %v2483
        %2660 = vmatpush1.bf16.msra.mxu0 %v2482
        %2661 = vmatprep.subr.bf16.mxu0 %v2485
        %2662 = vmatpush1.bf16.msra.mxu0 %v2484
        %2663 = vmatprep.subr.bf16.mxu0 %v2487
        %2664 = vmatpush1.bf16.msra.mxu0 %v2486
        %2665 = vmatprep.subr.bf16.mxu0 %v2489
        %2666 = vmatpush1.bf16.msra.mxu0 %v2488
        %2667 = vmatprep.subr.bf16.mxu0 %v2491
        %2668 = vmatpush1.bf16.msra.mxu0 %v2490
        %2669 = vmatprep.subr.bf16.mxu0 %v2493
        %2670 = vmatpush1.bf16.msra.mxu0 %v2492
        %2671 = vmatprep.subr.bf16.mxu0 %v2495
        %2672 = vmatpush1.bf16.msra.mxu0 %v2494
        %2673 = vmatprep.subr.bf16.mxu0 %v2497
        %2674 = vmatpush1.bf16.msra.mxu0 %v2496
        %2675 = vmatprep.subr.bf16.mxu0 %v2499
        %2676 = vmatpush1.bf16.msra.mxu0 %v2498
        %2677 = vmatprep.subr.bf16.mxu0 %v2501
        %2678 = vmatpush1.bf16.msra.mxu0 %v2500
        %2679 = vmatprep.subr.bf16.mxu0 %v2503
        %2680 = vmatpush1.bf16.msra.mxu0 %v2502
        %2681 = vmatprep.subr.bf16.mxu0 %v2505
        %2682 = vmatpush1.bf16.msra.mxu0 %v2504
        %2683 = vmatprep.subr.bf16.mxu0 %v2507
        %2684 = vmatpush1.bf16.msra.mxu0 %v2506
        %2685 = vmatprep.subr.bf16.mxu0 %v2509
        %2686 = vmatpush1.bf16.msra.mxu0 %v2508
        %2687 = vmatprep.subr.bf16.mxu0 %v2511
        %2688 = vmatpush1.bf16.msra.mxu0 %v2510
        %2689 = vmatprep.mubr.bf16.mxu0 %v2587
        %2690 = vmatmul.mubr.bf16.gmra.mrb[0].mxu0 %v2586
        %v2691 = vpop.f32.mrb[0].mxu0
        %v2692 = vadd.f32 %v2639, %v2691
        %v2693 = vpop.f32.mrb[0].mxu0
        %v2694 = vadd.f32 %v2641, %v2693
        %v2695 = vpop.f32.mrb[0].mxu0
        %v2696 = vadd.f32 %v2643, %v2695
        %v2697 = vpop.f32.mrb[0].mxu0
        %v2698 = vadd.f32 %v2645, %v2697
        %2699 = vmatprep.mubr.bf16.mxu0 %v2592
        %2700 = vmatmul.mubr.bf16.gmra.mrb[0].mxu0 %v2591
        %v2701 = vpop.f32.mrb[0].mxu0
        %v2702 = vadd.f32 %v2649, %v2701
        %v2703 = vpop.f32.mrb[0].mxu0
        %v2704 = vadd.f32 %v2651, %v2703
        %v2705 = vpop.f32.mrb[0].mxu0
        %v2706 = vadd.f32 %v2653, %v2705
        %v2707 = vpop.f32.mrb[0].mxu0
        %v2708 = vadd.f32 %v2655, %v2707
        %2709 = vdwg.mxu0
        %2710 = vmatprep.subr.bf16.mxu0 %v2513
        %2711 = vmatpush1.bf16.msra.mxu0 %v2512
        %2712 = vmatprep.subr.bf16.mxu0 %v2515
        %2713 = vmatpush1.bf16.msra.mxu0 %v2514
        %2714 = vmatprep.subr.bf16.mxu0 %v2517
        %2715 = vmatpush1.bf16.msra.mxu0 %v2516
        %2716 = vmatprep.subr.bf16.mxu0 %v2519
        %2717 = vmatpush1.bf16.msra.mxu0 %v2518
        %2718 = vmatprep.subr.bf16.mxu0 %v2521
        %2719 = vmatpush1.bf16.msra.mxu0 %v2520
        %2720 = vmatprep.subr.bf16.mxu0 %v2523
        %2721 = vmatpush1.bf16.msra.mxu0 %v2522
        %2722 = vmatprep.subr.bf16.mxu0 %v2525
        %2723 = vmatpush1.bf16.msra.mxu0 %v2524
        %2724 = vmatprep.subr.bf16.mxu0 %v2527
        %2725 = vmatpush1.bf16.msra.mxu0 %v2526
        %2726 = vmatprep.subr.bf16.mxu0 0
        %2727 = vmatpush1.bf16.msra.mxu0 0
        %2728 = vmatprep.subr.bf16.mxu0 0
        %2729 = vmatpush1.bf16.msra.mxu0 0
        %2730 = vmatprep.subr.bf16.mxu0 0
        %2731 = vmatpush1.bf16.msra.mxu0 0
        %2732 = vmatprep.subr.bf16.mxu0 0
        %2733 = vmatpush1.bf16.msra.mxu0 0
        %2734 = vmatprep.subr.bf16.mxu0 0
        %2735 = vmatpush1.bf16.msra.mxu0 0
        %2736 = vmatprep.subr.bf16.mxu0 0
        %2737 = vmatpush1.bf16.msra.mxu0 0
        %2738 = vmatprep.subr.bf16.mxu0 0
        %2739 = vmatpush1.bf16.msra.mxu0 0
        %2740 = vmatprep.subr.bf16.mxu0 0
        %2741 = vmatpush1.bf16.msra.mxu0 0
        %2742 = vmatprep.mubr.bf16.mxu0 0
        %2743 = vmatmul.mubr.bf16.gmra.mrb[0].mxu0 %v2588
        %v2744 = vpop.f32.mrb[0].mxu0
        %v2745 = vadd.f32 %v2692, %v2744
        %v2746 = vpop.f32.mrb[0].mxu0
        %v2747 = vadd.f32 %v2694, %v2746
        %v2748 = vpop.f32.mrb[0].mxu0
        %v2749 = vadd.f32 %v2696, %v2748
        %v2750 = vpop.f32.mrb[0].mxu0
        %v2751 = vadd.f32 %v2698, %v2750
        %2752 = vmatprep.mubr.bf16.mxu0 0
        %2753 = vmatmul.mubr.bf16.gmra.mrb[0].mxu0 %v2593
        %v2754 = vpop.f32.mrb[0].mxu0
        %v2755 = vadd.f32 %v2702, %v2754
        %v2756 = vpop.f32.mrb[0].mxu0
        %v2757 = vadd.f32 %v2704, %v2756
        %v2758 = vpop.f32.mrb[0].mxu0
        %v2759 = vadd.f32 %v2706, %v2758
        %v2760 = vpop.f32.mrb[0].mxu0
        %v2761 = vadd.f32 %v2708, %v2760
        %2762 = vdwg.mxu0
        %v2763 = vmax.f32 %v2745, 0.0
        %v2764 = vmax.f32 %v2747, 0.0
        %v2765 = vmax.f32 %v2749, 0.0
        %v2766 = vmax.f32 %v2751, 0.0
        %v2767 = vmax.f32 %v2755, 0.0
        %v2768 = vmax.f32 %v2757, 0.0
        %v2769 = vmax.f32 %v2759, 0.0
        %v2770 = vmax.f32 %v2761, 0.0
        %2771 = vst [vmem:[%s259] sm:$0xff] %v2763
        %2772 = vst.msk [vmem:[%s259 + $0x8] sm:$0xff] %vm2096, %v2764
        %2773 = vst [vmem:[%s259 + $0x10] sm:$0xff] %v2765
        %2774 = vst.msk [vmem:[%s259 + $0x18] sm:$0xff] %vm2096, %v2766
        %2775 = vst [vmem:[%s259 + $0x20] sm:$0xff] %v2767
        %2776 = vst.msk [vmem:[%s259 + $0x28] sm:$0xff] %vm2096, %v2768
        %2777 = vst [vmem:[%s259 + $0x30] sm:$0xff] %v2769
        %2778 = vst.msk [vmem:[%s259 + $0x38] sm:$0xff] %vm2096, %v2770
        %s2779 = sand.u32 %s164, 1
        %s2780 = scalar_lea.sflag [#allocation7], %s2779
        %s2781 = sand.u32 %s164, 1
        %s2782 = smul.addr %s2781, 64
        %s2783 = scalar_lea.vmem [#allocation6], %s2782
        // Predicated region
        $region45: #{decoder_layer_forward.1} parent=43 // pred_check
          %p2784 = pneg %p174
        $region46: #{decoder_layer_forward.1} parent=43 // pred_check_branch
          %2786 = sbr.rel (%p2784) target = $region48
        $region47: #{decoder_layer_forward.1} parent=43 // pred_region
          %s2788 = ssub.s32 1024, 1024
          %2789 = vsyncadd %s2780, %s2788
          %s2790 = smul.addr %s20, 8
          %s2791 = smul.addr %s2790, 128
          %s2792 = scalar_lea.hbm %s6, %s2791
          %s2793 = sshll.u32 %s2783, 4
          %s2794 = int_to_ptr.vmem [resolvable:$true] %s2793
          %2799 = dma.vmem_to_hbm [thread:$0]  %s2794, 1024, %s2792, %s2780, 256, 256, 16
        $region48: #{decoder_layer_forward.1} parent=43 // pred_fallthru
          _
      $region44: #{decoder_layer_forward.1} parent=5 // pred_fallthru
        _
      %p2800 = scmp.le.s32.totalorder 2, %s15
      // Predicated region
      $region49: #{decoder_layer_forward.1} parent=5 // pred_check
        %p2801 = pneg %p2800
      $region50: #{decoder_layer_forward.1} parent=5 // pred_check_branch
        %2803 = sbr.rel (%p2801) target = $region52
      $region51: #{decoder_layer_forward.1} parent=5 // pred_region
        %s2804 = ssub.s32 %s15, 2
        // Predicated region
        $region53: #{decoder_layer_forward.1} parent=51 // pred_check
          %p2805 = pneg %p180
        $region54: #{decoder_layer_forward.1} parent=51 // pred_check_branch
          %2807 = sbr.rel (%p2805) target = $region56
        $region55: #{decoder_layer_forward.1} parent=51 // pred_region
          %s2808 = sand.u32 %s165, 1
          %s2809 = scalar_lea.sflag [#allocation7], %s2808
          %s2810 = sand.u32 %s165, 1
          %s2811 = smul.addr %s2810, 64
          %s2812 = scalar_lea.vmem [#allocation6], %s2811
          %2813 = dma.done %s2809, 1024
        $region56: #{decoder_layer_forward.1} parent=51 // pred_fallthru
          _
      $region52: #{decoder_layer_forward.1} parent=5 // pred_fallthru
        _
    $region6: #{decoder_layer_forward.1} parent=1 // loop_footer
      %s19 = sadd.s32 1, %s15
    $region7: #{decoder_layer_forward.1} parent=1 // loop_footer_branch
      %14 = sbr.rel target = $region3
    $region8: #{decoder_layer_forward.1} parent=1 // loop_exit
      _
    %2814 = vsyncpa [#allocation7], 1
    %s2815 = scalar_lea.sflag [#allocation7], 1
    %2816 = vsyncpa %s2815, 1

</llo_original>
